<compile_context>
chip_gen: v7x
topology: tpu7x:2x2x1
jax: 0.10.0
libtpu: 0.0.40
codegen_flags: <defaults>
</compile_context>

<pallas_src>
import jax
import jax.numpy as jnp
from jax import lax
from jax.experimental import pallas as pl
from jax.experimental.pallas import tpu as pltpu

NEG_INF = -1e9

# ----------------------------- Pallas kernels -----------------------------


def _sfu_gate(x, f, wr_ref, br_ref, wg_ref, bg_ref):
    """SFU: o = g*tanh(W_r[x;f;x*f;x-f]+b_r) + (1-g)*x, g = sigmoid(W_g[...]+b_g).

    bf16 on the MXU boundary (weights arrive pre-cast, stacked as (4, D, D)), f32
    accumulation and f32 element-wise math. The 4D-wide concat is never built.
    """
    x16 = x.astype(jnp.bfloat16)
    f16 = f.astype(jnp.bfloat16)
    xf16 = (x * f).astype(jnp.bfloat16)
    xmf16 = (x - f).astype(jnp.bfloat16)

    def proj(w_ref):
        return (jnp.dot(x16, w_ref[0], preferred_element_type=jnp.float32)
                + jnp.dot(f16, w_ref[1], preferred_element_type=jnp.float32)
                + jnp.dot(xf16, w_ref[2], preferred_element_type=jnp.float32)
                + jnp.dot(xmf16, w_ref[3], preferred_element_type=jnp.float32))

    r = jnp.tanh(proj(wr_ref) + br_ref[...])
    g = jax.nn.sigmoid(proj(wg_ref) + bg_ref[...])
    return g * r + (1.0 - g) * x


def _cross_align_fuse_kernel(x_ref, q_ref, qb_ref, wr_ref, br_ref, wg_ref, bg_ref, o_ref):
    """Interactive alignment (C attends Q) fused with the SFU fusion cell."""
    x = x_ref[0]                                                   # (Lc, D) f32
    q16 = q_ref[0]                                                 # (Lq, D) bf16 (pre-cast)
    x16 = x.astype(jnp.bfloat16)
    s = lax.dot_general(x16, q16, (((1,), (1,)), ((), ())),
                        preferred_element_type=jnp.float32) + qb_ref[0]   # (Lc, Lq)
    s = s - jnp.max(s, axis=-1, keepdims=True)
    e = jnp.exp(s)
    p = e * pl.reciprocal(jnp.sum(e, axis=-1, keepdims=True), approx=True)
    attn = jnp.dot(p.astype(jnp.bfloat16), q16,
                   preferred_element_type=jnp.float32)                    # (Lc, D) == q_t
    o_ref[0] = _sfu_gate(x, attn, wr_ref, br_ref, wg_ref, bg_ref).astype(o_ref.dtype)


def _self_align_fuse_kernel(x_ref, cb_ref, wr_ref, br_ref, wg_ref, bg_ref, o_ref):
    """Self alignment (diagonal masked) fused with the SFU fusion cell."""
    x = x_ref[0]                                                   # (L, D) f32
    L = x.shape[0]
    x16 = x.astype(jnp.bfloat16)
    s = lax.dot_general(x16, x16, (((1,), (1,)), ((), ())),
                        preferred_element_type=jnp.float32)               # (L, L)
    ri = lax.broadcasted_iota(jnp.int32, (L, L), 0)
    ci = lax.broadcasted_iota(jnp.int32, (L, L), 1)
    pad = jnp.broadcast_to(cb_ref[0], (L, L)) < -1.0               # padded key positions
    s = jnp.where((ri == ci) | pad, NEG_INF, s)                    # where-mask (no -inf stacking)
    s = s - jnp.max(s, axis=-1, keepdims=True)
    e = jnp.exp(s)
    p = e * pl.reciprocal(jnp.sum(e, axis=-1, keepdims=True), approx=True)
    attn = jnp.dot(p.astype(jnp.bfloat16), x16,
                   preferred_element_type=jnp.float32)                    # (L, D) == c_t
    o_ref[0] = _sfu_gate(x, attn, wr_ref, br_ref, wg_ref, bg_ref).astype(o_ref.dtype)


def _unit_cost(B, Lc, Lk, D):
    return pl.CostEstimate(
        flops=B * (4 * Lc * Lk * D + 16 * Lc * D * D),
        transcendentals=B * Lc * (Lk + 2 * D),
        bytes_accessed=4 * (2 * B * Lc * D + B * Lk + 2 * D)
        + 2 * (B * Lk * D + 2 * (4 * D * D)),
    )


def cross_align_fuse(x, q16, q_bias, wr4, br, wg4, bg):
    B, Lc, D = x.shape
    Lq = q16.shape[1]
    return pl.pallas_call(
        _cross_align_fuse_kernel,
        out_shape=jax.ShapeDtypeStruct((B, Lc, D), x.dtype),
        grid=(B,),
        in_specs=[pl.BlockSpec((1, Lc, D), lambda b: (b, 0, 0)),
                  pl.BlockSpec((1, Lq, D), lambda b: (b, 0, 0)),
                  pl.BlockSpec((1, 1, Lq), lambda b: (b, 0, 0)),
                  pl.BlockSpec((4, D, D), lambda b: (0, 0, 0)),
                  pl.BlockSpec((1, D), lambda b: (0, 0)),
                  pl.BlockSpec((4, D, D), lambda b: (0, 0, 0)),
                  pl.BlockSpec((1, D), lambda b: (0, 0))],
        out_specs=pl.BlockSpec((1, Lc, D), lambda b: (b, 0, 0)),
        compiler_params=pltpu.CompilerParams(dimension_semantics=("parallel",)),
        cost_estimate=_unit_cost(B, Lc, Lq, D),
    )(x, q16, q_bias, wr4, br, wg4, bg)


def self_align_fuse(x, c_bias, wr4, br, wg4, bg):
    B, L, D = x.shape
    return pl.pallas_call(
        _self_align_fuse_kernel,
        out_shape=jax.ShapeDtypeStruct((B, L, D), x.dtype),
        grid=(B,),
        in_specs=[pl.BlockSpec((1, L, D), lambda b: (b, 0, 0)),
                  pl.BlockSpec((1, 1, L), lambda b: (b, 0, 0)),
                  pl.BlockSpec((4, D, D), lambda b: (0, 0, 0)),
                  pl.BlockSpec((1, D), lambda b: (0, 0)),
                  pl.BlockSpec((4, D, D), lambda b: (0, 0, 0)),
                  pl.BlockSpec((1, D), lambda b: (0, 0))],
        out_specs=pl.BlockSpec((1, L, D), lambda b: (b, 0, 0)),
        compiler_params=pltpu.CompilerParams(dimension_semantics=("parallel",)),
        cost_estimate=_unit_cost(B, L, L, D),
    )(x, c_bias, wr4, br, wg4, bg)


def _pointer_kernel(c_ref, q_ref, cb_ref, qb_ref, wq_ref, w1_ref, wf_ref, bf_ref, w2_ref,
                    o_ref):
    """Whole-batch output pointer: question summary, bilinear start/end, memory update.

    Weights arrive unbroadcast (wq: (1,D), w1/w2: (D,D), wf: (2,D,D), all bf16); the
    memory vectors are squeezed to (B, D) so the weight contractions are plain 2-D
    matmuls (no per-batch weight copies in HBM or VMEM).
    """
    c = c_ref[...]                                                 # (B, Lc, D) f32
    q16 = q_ref[...]                                               # (B, Lq, D) bf16
    cb = cb_ref[...]                                               # (B, 1, Lc) additive bias
    qb = qb_ref[...]                                               # (B, 1, Lq)
    c16 = c.astype(jnp.bfloat16)
    B, Lc, D = c.shape

    def msoftmax(logits):                                          # (B, 1, L)
        logits = logits - jnp.max(logits, axis=-1, keepdims=True)
        e = jnp.exp(logits)
        return e * pl.reciprocal(jnp.sum(e, axis=-1, keepdims=True), approx=True)

    # question summary z = softmax(w_q . Q) @ Q (batched)
    wq_b = jnp.broadcast_to(wq_ref[...][None], (B, 1, D))          # (B, 1, D) bf16, tiny
    sq = jnp.einsum('bkd,bld->bkl', wq_b, q16,
                    preferred_element_type=jnp.float32) + qb               # (B, 1, Lq)
    alpha = msoftmax(sq)
    z = jnp.einsum('bkl,bld->bkd', alpha.astype(jnp.bfloat16), q16,
                   preferred_element_type=jnp.float32)                     # (B, 1, D)
    z2d = jnp.squeeze(z, axis=1)                                   # (B, D) f32

    # start pointer (bilinear z W1 c^T)
    zw1 = jnp.dot(z2d.astype(jnp.bfloat16), w1_ref[...],
                  preferred_element_type=jnp.float32)                      # (B, D)
    l1 = jnp.einsum('bkd,bld->bkl', zw1[:, None, :].astype(jnp.bfloat16), c16,
                    preferred_element_type=jnp.float32) + cb               # (B, 1, Lc)
    p1 = msoftmax(l1)

    # evidence read + memory update z2 = tanh(W_f [z; u] + b_f) (W_f consumed per block)
    u = jnp.einsum('bkl,bld->bkd', p1.astype(jnp.bfloat16), c16,
                   preferred_element_type=jnp.float32)                     # (B, 1, D)
    u2d = jnp.squeeze(u, axis=1)
    z2 = jnp.tanh(
        jnp.dot(z2d.astype(jnp.bfloat16), wf_ref[0],
                preferred_element_type=jnp.float32)
        + jnp.dot(u2d.astype(jnp.bfloat16), wf_ref[1],
                  preferred_element_type=jnp.float32)
        + bf_ref[...])                                                     # (B, D)

    # end pointer (bilinear with updated memory)
    zw2 = jnp.dot(z2.astype(jnp.bfloat16), w2_ref[...],
                  preferred_element_type=jnp.float32)                      # (B, D)
    l2 = jnp.einsum('bkd,bld->bkl', zw2[:, None, :].astype(jnp.bfloat16), c16,
                    preferred_element_type=jnp.float32) + cb
    p2 = msoftmax(l2)

    # single stacked output (B, 2, Lc)
    o_ref[:, 0:1, :] = p1.astype(o_ref.dtype)
    o_ref[:, 1:2, :] = p2.astype(o_ref.dtype)


def output_pointer(c, q16, c_bias, q_bias, ptr):
    B, Lc, D = c.shape
    wq16 = ptr["wq"].astype(jnp.bfloat16)                 # (1, D)
    w116 = ptr["w1"].astype(jnp.bfloat16)                 # (D, D)
    wf2 = ptr["wf"].reshape(2, D, D).astype(jnp.bfloat16)  # (2, D, D): [W_z; W_u]
    w216 = ptr["w2"].astype(jnp.bfloat16)                 # (D, D)
    probs = pl.pallas_call(
        _pointer_kernel,
        out_shape=jax.ShapeDtypeStruct((B, 2, Lc), jnp.float32),
    )(c, q16, c_bias, q_bias, wq16, w116, wf2, ptr["bf"], w216)
    return probs[:, 0, :], probs[:, 1, :]


# -------------------------- LSTM glue (plain JAX) --------------------------
# TODO(synk): the packed-sequence bidirectional LSTM recurrence has no clean Pallas
# tiling at these sizes; it is emulated with masked lax.scan (padded steps carry state,
# padded outputs are zero, matching pad_packed_sequence). Input projections are hoisted
# out of the scan and fused across directions.


def _lstm_scan_pre(xw, lengths, w_hh, reverse):
    """Scan over timesteps given precomputed input projections xw = x @ W_ih^T + b."""
    B, L, H4 = xw.shape
    H = H4 // 4
    h0 = jnp.zeros((B, H), xw.dtype)
    c0 = jnp.zeros((B, H), xw.dtype)
    ts = jnp.arange(L)
    if reverse:
        ts = ts[::-1]

    def step(carry, t):
        h, c = carry
        gates = xw[:, t, :] + h @ w_hh.T
        i, f, g, o = jnp.split(gates, 4, axis=-1)
        i = jax.nn.sigmoid(i)
        f = jax.nn.sigmoid(f)
        g = jnp.tanh(g)
        o = jax.nn.sigmoid(o)
        c_new = f * c + i * g
        h_new = o * jnp.tanh(c_new)
        valid = (t < lengths)[:, None].astype(xw.dtype)
        h = valid * h_new + (1.0 - valid) * h
        c = valid * c_new + (1.0 - valid) * c
        return (h, c), h_new * valid

    (h_last, _), outs = lax.scan(step, (h0, c0), ts)
    outs = jnp.transpose(outs, (1, 0, 2))           # (B, L, H) in scan order
    if reverse:
        outs = outs[:, ::-1, :]
    return outs, h_last


def bilstm(x, lengths, p):
    B, L, Din = x.shape
    H4 = p["w_ih_f"].shape[0]
    # One big matmul for both directions' input projections instead of 2*L tiny ones.
    w_cat = jnp.concatenate([p["w_ih_f"], p["w_ih_b"]], axis=0)     # (8H, Din)
    b_cat = jnp.concatenate([p["b_f"], p["b_b"]], axis=0)           # (8H,)
    xw = (x.reshape(B * L, Din) @ w_cat.T + b_cat).reshape(B, L, 2 * H4)
    fw, fh = _lstm_scan_pre(xw[..., :H4], lengths, p["w_hh_f"], reverse=False)
    bw, bh = _lstm_scan_pre(xw[..., H4:], lengths, p["w_hh_b"], reverse=True)
    return jnp.concatenate([fw, bw], axis=-1), jnp.concatenate([fh, bh], axis=-1)


def char_encode(char_ids, char_vec, p):
    B, L, Wc = char_ids.shape
    flat = char_ids.reshape(B * L, Wc)
    emb = jnp.take(char_vec, flat, axis=0)          # (B*L, Wc, char_emb)
    lengths = jnp.sum((flat != 0).astype(jnp.int32), axis=-1)
    _, h = bilstm(emb, lengths, p)                  # last hidden of each direction
    return h.reshape(B, L, -1)


# ------------------------------- parameters -------------------------------


def _lstm_params(key, din, h, scale=0.1):
    ks = jax.random.split(key, 4)
    return dict(
        w_ih_f=scale * jax.random.normal(ks[0], (4 * h, din), jnp.float32),
        w_hh_f=scale * jax.random.normal(ks[1], (4 * h, h), jnp.float32),
        b_f=jnp.zeros((4 * h,), jnp.float32),
        w_ih_b=scale * jax.random.normal(ks[2], (4 * h, din), jnp.float32),
        w_hh_b=scale * jax.random.normal(ks[3], (4 * h, h), jnp.float32),
        b_b=jnp.zeros((4 * h,), jnp.float32),
    )


def init_params(key, vocab, char_vocab, word_dim, char_emb_dim, char_h, h, units):
    keys = jax.random.split(key, 8 + units)
    D = 2 * h
    params = dict(
        word_vec=0.1 * jax.random.normal(keys[0], (vocab, word_dim), jnp.float32),
        char_vec=0.1 * jax.random.normal(keys[1], (char_vocab, char_emb_dim), jnp.float32),
        tf_table=(1.0 / (1.0 + jnp.arange(vocab, dtype=jnp.float32)))[:, None],
        char_rnn=_lstm_params(keys[2], char_emb_dim, char_h),
        encoder=_lstm_params(keys[3], word_dim + 2 * char_h + 1 + 1, h),
    )
    units_p = []
    for u in range(units):
        ku = jax.random.split(keys[4 + u], 3)
        units_p.append(dict(
            wr=0.1 * jax.random.normal(ku[0], (4 * D, D), jnp.float32),
            br=jnp.zeros((1, D), jnp.float32),
            wg=0.1 * jax.random.normal(ku[1], (4 * D, D), jnp.float32),
            bg=jnp.zeros((1, D), jnp.float32),
            rnn=_lstm_params(ku[2], D, h),
        ))
    params["unit"] = units_p
    kp = jax.random.split(keys[4 + units], 4)
    params["ptr"] = dict(
        wq=0.1 * jax.random.normal(kp[0], (1, D), jnp.float32),
        w1=0.1 * jax.random.normal(kp[1], (D, D), jnp.float32),
        wf=0.1 * jax.random.normal(kp[2], (2 * D, D), jnp.float32),
        bf=jnp.zeros((1, D), jnp.float32),
        w2=0.1 * jax.random.normal(kp[3], (D, D), jnp.float32),
    )
    return params


# ------------------------------- forward pass ------------------------------


def mnemonic_reader_forward(params, C_words, Q_words, C_char, Q_char, units):
    C_pad = (C_words == 0)
    Q_pad = (Q_words == 0)

    CW = jnp.take(params["word_vec"], C_words, axis=0)
    QW = jnp.take(params["word_vec"], Q_words, axis=0)
    C_tf = jnp.take(params["tf_table"], C_words, axis=0)
    Q_tf = jnp.take(params["tf_table"], Q_words, axis=0)
    # TODO(synk): nn.Dropout is treated as inference-mode identity.

    C_char_enc = char_encode(C_char, params["char_vec"], params["char_rnn"])
    Q_char_enc = char_encode(Q_char, params["char_vec"], params["char_rnn"])

    C_em_mask = (C_words != 0)
    Q_em_mask = (Q_words != 0)
    # NOTE: jnp.isin tests membership against the *entire* batch's ids — this matches
    # torch.isin's flattened test_elements semantics used by the original module.
    C_em = jnp.isin(C_words, Q_words) & C_em_mask
    C_em = C_em.at[:, 0].set(False)
    Q_em = jnp.isin(Q_words, C_words) & Q_em_mask
    Q_em = Q_em.at[:, 0].set(False)

    C_in = jnp.concatenate(
        [CW, C_tf, C_char_enc, C_em[..., None].astype(jnp.float32)], axis=-1)
    Q_in = jnp.concatenate(
        [QW, Q_tf, Q_char_enc, Q_em[..., None].astype(jnp.float32)], axis=-1)
    C_len = jnp.sum(C_em_mask.astype(jnp.int32), axis=1)
    Q_len = jnp.sum(Q_em_mask.astype(jnp.int32), axis=1)

    C_enc, _ = bilstm(C_in, C_len, params["encoder"])
    Q_enc, _ = bilstm(Q_in, Q_len, params["encoder"])

    c_bias = jnp.where(C_pad, NEG_INF, 0.0).astype(jnp.float32)[:, None, :]   # (B,1,Lc)
    q_bias = jnp.where(Q_pad, NEG_INF, 0.0).astype(jnp.float32)[:, None, :]   # (B,1,Lq)

    D = C_enc.shape[-1]
    # Q is only ever consumed on the MXU (bf16 operands) downstream: cast once.
    Q16 = Q_enc.astype(jnp.bfloat16)

    cur = C_enc
    for u in range(units):
        up = params["unit"][u]
        # Stack the SFU weight into (4, D, D) blocks and cast to bf16 once per call.
        wr4 = up["wr"].reshape(4, D, D).astype(jnp.bfloat16)
        wg4 = up["wg"].reshape(4, D, D).astype(jnp.bfloat16)
        # fused cross-alignment + SFU (q_t never written to HBM)
        c_bar = cross_align_fuse(cur, Q16, q_bias, wr4, up["br"], wg4, up["bg"])
        # fused self-alignment + SFU
        # NOTE: original forward reuses reader_fusion[unit] for the self-fusion too.
        c_hat = self_align_fuse(c_bar, c_bias, wr4, up["br"], wg4, up["bg"])
        cur, _ = bilstm(c_hat, C_len, up["rnn"])

    p1, p2 = output_pointer(cur, Q16, c_bias, q_bias, params["ptr"])
    return p1, p2


mnemonic_reader_forward_jit = jax.jit(mnemonic_reader_forward, static_argnames="units")


# ---------------------------------- main -----------------------------------

if __name__ == "__main__":
    B, Lc, Lq, Wc = 2, 16, 8, 4
    VOCAB, CHAR_VOCAB = 50, 30
    WORD_DIM, CHAR_EMB, CHAR_H, H, UNITS = 32, 64, 8, 16, 2

    key = jax.random.PRNGKey(0)
    kp, kc, kq, kcc, kqc = jax.random.split(key, 5)

    params = init_params(kp, VOCAB, CHAR_VOCAB, WORD_DIM, CHAR_EMB, CHAR_H, H, UNITS)

    # word ids (0 = padding); batch element 1 has shorter sequences
    C_words = jax.random.randint(kc, (B, Lc), 1, VOCAB, dtype=jnp.int32)
    C_words = C_words * (jnp.arange(Lc)[None, :] < jnp.array([Lc, 12])[:, None]).astype(jnp.int32)
    Q_words = jax.random.randint(kq, (B, Lq), 1, VOCAB, dtype=jnp.int32)
    Q_words = Q_words * (jnp.arange(Lq)[None, :] < jnp.array([Lq, 6])[:, None]).astype(jnp.int32)

    C_char = jax.random.randint(kcc, (B, Lc, Wc), 1, CHAR_VOCAB, dtype=jnp.int32)
    Q_char = jax.random.randint(kqc, (B, Lq, Wc), 1, CHAR_VOCAB, dtype=jnp.int32)

    p1, p2 = mnemonic_reader_forward_jit(params, C_words, Q_words, C_char, Q_char, UNITS)
    jax.block_until_ready((p1, p2))

    assert p1.shape == (B, Lc) and p2.shape == (B, Lc)
    assert bool(jnp.all(jnp.isfinite(p1))) and bool(jnp.all(jnp.isfinite(p2)))
    print("KERNEL_OK")
</pallas_src>

<mosaic_0001>
module attributes {stable_mosaic.version = 11 : i64} {
  func.func @_cross_align_fuse_kernel(%arg0: i32, %arg1: memref<1x16x32xf32, #tpu.memory_space<vmem>>, %arg2: memref<1x8x32xbf16, #tpu.memory_space<vmem>>, %arg3: memref<1x1x8xf32, #tpu.memory_space<vmem>>, %arg4: memref<4x32x32xbf16, #tpu.memory_space<vmem>>, %arg5: memref<1x32xf32, #tpu.memory_space<vmem>>, %arg6: memref<4x32x32xbf16, #tpu.memory_space<vmem>>, %arg7: memref<1x32xf32, #tpu.memory_space<vmem>>, %arg8: memref<1x16x32xf32, #tpu.memory_space<vmem>>) attributes {dimension_semantics = [#tpu.dimension_semantics<parallel>], iteration_bounds = array<i64: 2>, scalar_prefetch = 0 : i64, scratch_operands = 0 : i64, tpu.core_type = #tpu.core_type<tc>, window_params = [{transform_indices = @transform_0, window_bounds = array<i64: 1, 16, 32>}, {transform_indices = @transform_1, window_bounds = array<i64: 1, 8, 32>}, {transform_indices = @transform_2, window_bounds = array<i64: 1, 1, 8>}, {pipeline_mode = #tpu.pipeline_mode<synchronous>, transform_indices = @transform_3, window_bounds = array<i64: 4, 32, 32>}, {pipeline_mode = #tpu.pipeline_mode<synchronous>, transform_indices = @transform_4, window_bounds = array<i64: 1, 32>}, {pipeline_mode = #tpu.pipeline_mode<synchronous>, transform_indices = @transform_5, window_bounds = array<i64: 4, 32, 32>}, {pipeline_mode = #tpu.pipeline_mode<synchronous>, transform_indices = @transform_6, window_bounds = array<i64: 1, 32>}, {transform_indices = @transform_7, window_bounds = array<i64: 1, 16, 32>}]} {
    %c0 = arith.constant 0 : index
    %c0_0 = arith.constant 0 : index
    %c0_1 = arith.constant 0 : index
    %0 = vector.load %arg1[%c0, %c0_0, %c0_1] : memref<1x16x32xf32, #tpu.memory_space<vmem>>, vector<1x16x32xf32>
    %1 = vector.shape_cast %0 : vector<1x16x32xf32> to vector<16x32xf32>
    %c0_2 = arith.constant 0 : index
    %c0_3 = arith.constant 0 : index
    %c0_4 = arith.constant 0 : index
    %2 = vector.load %arg2[%c0_2, %c0_3, %c0_4] : memref<1x8x32xbf16, #tpu.memory_space<vmem>>, vector<1x8x32xbf16>
    %3 = vector.shape_cast %2 : vector<1x8x32xbf16> to vector<8x32xbf16>
    %4 = arith.truncf %1 : vector<16x32xf32> to vector<16x32xbf16>
    %cst = arith.constant dense<0.000000e+00> : vector<16x8xf32>
    %5 = tpu.matmul %4, %3, %cst {dimension_numbers = #tpu.dot_dimension_numbers<[1], [1], [0], [0], [0, 0, 1, 0], [], []>} : vector<16x32xbf16>, vector<8x32xbf16>, vector<16x8xf32> -> vector<16x8xf32>
    %c0_5 = arith.constant 0 : index
    %c0_6 = arith.constant 0 : index
    %c0_7 = arith.constant 0 : index
    %6 = vector.load %arg3[%c0_5, %c0_6, %c0_7] : memref<1x1x8xf32, #tpu.memory_space<vmem>>, vector<1x1x8xf32>
    %7 = vector.shape_cast %6 : vector<1x1x8xf32> to vector<1x8xf32>
    %8 = vector.broadcast %7 : vector<1x8xf32> to vector<16x8xf32>
    %9 = arith.addf %5, %8 : vector<16x8xf32>
    %cst_8 = arith.constant dense<0xFF800000> : vector<16xf32>
    %10 = vector.multi_reduction <maximumf>, %9, %cst_8 [1] : vector<16x8xf32> to vector<16xf32>
    %11 = vector.shape_cast %10 : vector<16xf32> to vector<16x1xf32>
    %12 = vector.broadcast %11 : vector<16x1xf32> to vector<16x8xf32>
    %13 = arith.subf %9, %12 : vector<16x8xf32>
    %14 = math.exp %13 : vector<16x8xf32>
    %cst_9 = arith.constant dense<0.000000e+00> : vector<16xf32>
    %15 = vector.multi_reduction <add>, %14, %cst_9 [1] : vector<16x8xf32> to vector<16xf32>
    %16 = vector.shape_cast %15 : vector<16xf32> to vector<16x1xf32>
    %17 = tpu.reciprocal %16 {approx = true} : vector<16x1xf32> -> vector<16x1xf32>
    %18 = vector.broadcast %17 : vector<16x1xf32> to vector<16x8xf32>
    %19 = arith.mulf %14, %18 : vector<16x8xf32>
    %20 = arith.truncf %19 : vector<16x8xf32> to vector<16x8xbf16>
    %cst_10 = arith.constant dense<0.000000e+00> : vector<16x32xf32>
    %21 = tpu.matmul %20, %3, %cst_10 {dimension_numbers = #tpu.dot_dimension_numbers<[1], [0], [0], [1], [0, 0, 1, 1], [], []>} : vector<16x8xbf16>, vector<8x32xbf16>, vector<16x32xf32> -> vector<16x32xf32>
    %22 = arith.truncf %1 : vector<16x32xf32> to vector<16x32xbf16>
    %23 = arith.truncf %21 : vector<16x32xf32> to vector<16x32xbf16>
    %24 = arith.mulf %1, %21 : vector<16x32xf32>
    %25 = arith.truncf %24 : vector<16x32xf32> to vector<16x32xbf16>
    %26 = arith.subf %1, %21 : vector<16x32xf32>
    %27 = arith.truncf %26 : vector<16x32xf32> to vector<16x32xbf16>
    %c0_11 = arith.constant 0 : index
    %c0_12 = arith.constant 0 : index
    %c0_13 = arith.constant 0 : index
    %28 = vector.load %arg4[%c0_11, %c0_12, %c0_13] : memref<4x32x32xbf16, #tpu.memory_space<vmem>>, vector<1x32x32xbf16>
    %29 = vector.shape_cast %28 : vector<1x32x32xbf16> to vector<32x32xbf16>
    %cst_14 = arith.constant dense<0.000000e+00> : vector<16x32xf32>
    %30 = tpu.matmul %22, %29, %cst_14 {dimension_numbers = #tpu.dot_dimension_numbers<[1], [0], [0], [1], [0, 0, 1, 1], [], []>} : vector<16x32xbf16>, vector<32x32xbf16>, vector<16x32xf32> -> vector<16x32xf32>
    %c1 = arith.constant 1 : index
    %c0_15 = arith.constant 0 : index
    %c0_16 = arith.constant 0 : index
    %31 = vector.load %arg4[%c1, %c0_15, %c0_16] : memref<4x32x32xbf16, #tpu.memory_space<vmem>>, vector<1x32x32xbf16>
    %32 = vector.shape_cast %31 : vector<1x32x32xbf16> to vector<32x32xbf16>
    %cst_17 = arith.constant dense<0.000000e+00> : vector<16x32xf32>
    %33 = tpu.matmul %23, %32, %cst_17 {dimension_numbers = #tpu.dot_dimension_numbers<[1], [0], [0], [1], [0, 0, 1, 1], [], []>} : vector<16x32xbf16>, vector<32x32xbf16>, vector<16x32xf32> -> vector<16x32xf32>
    %34 = arith.addf %30, %33 : vector<16x32xf32>
    %c2 = arith.constant 2 : index
    %c0_18 = arith.constant 0 : index
    %c0_19 = arith.constant 0 : index
    %35 = vector.load %arg4[%c2, %c0_18, %c0_19] : memref<4x32x32xbf16, #tpu.memory_space<vmem>>, vector<1x32x32xbf16>
    %36 = vector.shape_cast %35 : vector<1x32x32xbf16> to vector<32x32xbf16>
    %cst_20 = arith.constant dense<0.000000e+00> : vector<16x32xf32>
    %37 = tpu.matmul %25, %36, %cst_20 {dimension_numbers = #tpu.dot_dimension_numbers<[1], [0], [0], [1], [0, 0, 1, 1], [], []>} : vector<16x32xbf16>, vector<32x32xbf16>, vector<16x32xf32> -> vector<16x32xf32>
    %38 = arith.addf %34, %37 : vector<16x32xf32>
    %c3 = arith.constant 3 : index
    %c0_21 = arith.constant 0 : index
    %c0_22 = arith.constant 0 : index
    %39 = vector.load %arg4[%c3, %c0_21, %c0_22] : memref<4x32x32xbf16, #tpu.memory_space<vmem>>, vector<1x32x32xbf16>
    %40 = vector.shape_cast %39 : vector<1x32x32xbf16> to vector<32x32xbf16>
    %cst_23 = arith.constant dense<0.000000e+00> : vector<16x32xf32>
    %41 = tpu.matmul %27, %40, %cst_23 {dimension_numbers = #tpu.dot_dimension_numbers<[1], [0], [0], [1], [0, 0, 1, 1], [], []>} : vector<16x32xbf16>, vector<32x32xbf16>, vector<16x32xf32> -> vector<16x32xf32>
    %42 = arith.addf %38, %41 : vector<16x32xf32>
    %c0_24 = arith.constant 0 : index
    %c0_25 = arith.constant 0 : index
    %43 = vector.load %arg5[%c0_24, %c0_25] : memref<1x32xf32, #tpu.memory_space<vmem>>, vector<1x32xf32>
    %44 = vector.broadcast %43 : vector<1x32xf32> to vector<16x32xf32>
    %45 = arith.addf %42, %44 : vector<16x32xf32>
    %46 = math.tanh %45 : vector<16x32xf32>
    %c0_26 = arith.constant 0 : index
    %c0_27 = arith.constant 0 : index
    %c0_28 = arith.constant 0 : index
    %47 = vector.load %arg6[%c0_26, %c0_27, %c0_28] : memref<4x32x32xbf16, #tpu.memory_space<vmem>>, vector<1x32x32xbf16>
    %48 = vector.shape_cast %47 : vector<1x32x32xbf16> to vector<32x32xbf16>
    %cst_29 = arith.constant dense<0.000000e+00> : vector<16x32xf32>
    %49 = tpu.matmul %22, %48, %cst_29 {dimension_numbers = #tpu.dot_dimension_numbers<[1], [0], [0], [1], [0, 0, 1, 1], [], []>} : vector<16x32xbf16>, vector<32x32xbf16>, vector<16x32xf32> -> vector<16x32xf32>
    %c1_30 = arith.constant 1 : index
    %c0_31 = arith.constant 0 : index
    %c0_32 = arith.constant 0 : index
    %50 = vector.load %arg6[%c1_30, %c0_31, %c0_32] : memref<4x32x32xbf16, #tpu.memory_space<vmem>>, vector<1x32x32xbf16>
    %51 = vector.shape_cast %50 : vector<1x32x32xbf16> to vector<32x32xbf16>
    %cst_33 = arith.constant dense<0.000000e+00> : vector<16x32xf32>
    %52 = tpu.matmul %23, %51, %cst_33 {dimension_numbers = #tpu.dot_dimension_numbers<[1], [0], [0], [1], [0, 0, 1, 1], [], []>} : vector<16x32xbf16>, vector<32x32xbf16>, vector<16x32xf32> -> vector<16x32xf32>
    %53 = arith.addf %49, %52 : vector<16x32xf32>
    %c2_34 = arith.constant 2 : index
    %c0_35 = arith.constant 0 : index
    %c0_36 = arith.constant 0 : index
    %54 = vector.load %arg6[%c2_34, %c0_35, %c0_36] : memref<4x32x32xbf16, #tpu.memory_space<vmem>>, vector<1x32x32xbf16>
    %55 = vector.shape_cast %54 : vector<1x32x32xbf16> to vector<32x32xbf16>
    %cst_37 = arith.constant dense<0.000000e+00> : vector<16x32xf32>
    %56 = tpu.matmul %25, %55, %cst_37 {dimension_numbers = #tpu.dot_dimension_numbers<[1], [0], [0], [1], [0, 0, 1, 1], [], []>} : vector<16x32xbf16>, vector<32x32xbf16>, vector<16x32xf32> -> vector<16x32xf32>
    %57 = arith.addf %53, %56 : vector<16x32xf32>
    %c3_38 = arith.constant 3 : index
    %c0_39 = arith.constant 0 : index
    %c0_40 = arith.constant 0 : index
    %58 = vector.load %arg6[%c3_38, %c0_39, %c0_40] : memref<4x32x32xbf16, #tpu.memory_space<vmem>>, vector<1x32x32xbf16>
    %59 = vector.shape_cast %58 : vector<1x32x32xbf16> to vector<32x32xbf16>
    %cst_41 = arith.constant dense<0.000000e+00> : vector<16x32xf32>
    %60 = tpu.matmul %27, %59, %cst_41 {dimension_numbers = #tpu.dot_dimension_numbers<[1], [0], [0], [1], [0, 0, 1, 1], [], []>} : vector<16x32xbf16>, vector<32x32xbf16>, vector<16x32xf32> -> vector<16x32xf32>
    %61 = arith.addf %57, %60 : vector<16x32xf32>
    %c0_42 = arith.constant 0 : index
    %c0_43 = arith.constant 0 : index
    %62 = vector.load %arg7[%c0_42, %c0_43] : memref<1x32xf32, #tpu.memory_space<vmem>>, vector<1x32xf32>
    %63 = vector.broadcast %62 : vector<1x32xf32> to vector<16x32xf32>
    %64 = arith.addf %61, %63 : vector<16x32xf32>
    %65 = arith.negf %64 : vector<16x32xf32>
    %66 = math.exp %65 : vector<16x32xf32>
    %cst_44 = arith.constant 1.000000e+00 : f32
    %67 = vector.broadcast %cst_44 : f32 to vector<16x32xf32>
    %68 = arith.addf %67, %66 : vector<16x32xf32>
    %69 = arith.divf %67, %68 : vector<16x32xf32>
    %70 = arith.mulf %69, %46 : vector<16x32xf32>
    %cst_45 = arith.constant 1.000000e+00 : f32
    %71 = vector.broadcast %cst_45 : f32 to vector<16x32xf32>
    %72 = arith.subf %71, %69 : vector<16x32xf32>
    %73 = arith.mulf %72, %1 : vector<16x32xf32>
    %74 = arith.addf %70, %73 : vector<16x32xf32>
    %c0_46 = arith.constant 0 : index
    %c0_47 = arith.constant 0 : index
    %c0_48 = arith.constant 0 : index
    %75 = vector.load %arg8[%c0_46, %c0_47, %c0_48] : memref<1x16x32xf32, #tpu.memory_space<vmem>>, vector<1x16x32xf32>
    %76 = vector.shape_cast %75 : vector<1x16x32xf32> to vector<16x32xf32>
    %77 = vector.shape_cast %74 : vector<16x32xf32> to vector<1x16x32xf32>
    tpu.vector_store %arg8[%c0_46, %c0_47, %c0_48], %77 {strides = array<i32>} : memref<1x16x32xf32, #tpu.memory_space<vmem>>, vector<1x16x32xf32>,
    return
  }
  func.func @transform_0(%arg0: i32) -> (i32, i32, i32) {
    %c0_i32 = arith.constant 0 : i32
    %c0_i32_0 = arith.constant 0 : i32
    %c0_i32_1 = arith.constant 0 : i32
    return %arg0, %c0_i32, %c0_i32_0 : i32, i32, i32
  }
  func.func @transform_1(%arg0: i32) -> (i32, i32, i32) {
    %c0_i32 = arith.constant 0 : i32
    %c0_i32_0 = arith.constant 0 : i32
    %c0_i32_1 = arith.constant 0 : i32
    return %arg0, %c0_i32, %c0_i32_0 : i32, i32, i32
  }
  func.func @transform_2(%arg0: i32) -> (i32, i32, i32) {
    %c0_i32 = arith.constant 0 : i32
    %c0_i32_0 = arith.constant 0 : i32
    %c0_i32_1 = arith.constant 0 : i32
    return %arg0, %c0_i32, %c0_i32_0 : i32, i32, i32
  }
  func.func @transform_3(%arg0: i32) -> (i32, i32, i32) {
    %c0_i32 = arith.constant 0 : i32
    %c0_i32_0 = arith.constant 0 : i32
    %c0_i32_1 = arith.constant 0 : i32
    %c0_i32_2 = arith.constant 0 : i32
    return %c0_i32, %c0_i32_0, %c0_i32_1 : i32, i32, i32
  }
  func.func @transform_4(%arg0: i32) -> (i32, i32) {
    %c0_i32 = arith.constant 0 : i32
    %c0_i32_0 = arith.constant 0 : i32
    %c0_i32_1 = arith.constant 0 : i32
    return %c0_i32, %c0_i32_0 : i32, i32
  }
  func.func @transform_5(%arg0: i32) -> (i32, i32, i32) {
    %c0_i32 = arith.constant 0 : i32
    %c0_i32_0 = arith.constant 0 : i32
    %c0_i32_1 = arith.constant 0 : i32
    %c0_i32_2 = arith.constant 0 : i32
    return %c0_i32, %c0_i32_0, %c0_i32_1 : i32, i32, i32
  }
  func.func @transform_6(%arg0: i32) -> (i32, i32) {
    %c0_i32 = arith.constant 0 : i32
    %c0_i32_0 = arith.constant 0 : i32
    %c0_i32_1 = arith.constant 0 : i32
    return %c0_i32, %c0_i32_0 : i32, i32
  }
  func.func @transform_7(%arg0: i32) -> (i32, i32, i32) {
    %c0_i32 = arith.constant 0 : i32
    %c0_i32_0 = arith.constant 0 : i32
    %c0_i32_1 = arith.constant 0 : i32
    return %arg0, %c0_i32, %c0_i32_0 : i32, i32, i32
  }
}

module attributes {stable_mosaic.version = 11 : i64} {
  func.func @_self_align_fuse_kernel(%arg0: i32, %arg1: memref<1x16x32xf32, #tpu.memory_space<vmem>>, %arg2: memref<1x1x16xf32, #tpu.memory_space<vmem>>, %arg3: memref<4x32x32xbf16, #tpu.memory_space<vmem>>, %arg4: memref<1x32xf32, #tpu.memory_space<vmem>>, %arg5: memref<4x32x32xbf16, #tpu.memory_space<vmem>>, %arg6: memref<1x32xf32, #tpu.memory_space<vmem>>, %arg7: memref<1x16x32xf32, #tpu.memory_space<vmem>>) attributes {dimension_semantics = [#tpu.dimension_semantics<parallel>], iteration_bounds = array<i64: 2>, scalar_prefetch = 0 : i64, scratch_operands = 0 : i64, tpu.core_type = #tpu.core_type<tc>, window_params = [{transform_indices = @transform_0, window_bounds = array<i64: 1, 16, 32>}, {transform_indices = @transform_1, window_bounds = array<i64: 1, 1, 16>}, {pipeline_mode = #tpu.pipeline_mode<synchronous>, transform_indices = @transform_2, window_bounds = array<i64: 4, 32, 32>}, {pipeline_mode = #tpu.pipeline_mode<synchronous>, transform_indices = @transform_3, window_bounds = array<i64: 1, 32>}, {pipeline_mode = #tpu.pipeline_mode<synchronous>, transform_indices = @transform_4, window_bounds = array<i64: 4, 32, 32>}, {pipeline_mode = #tpu.pipeline_mode<synchronous>, transform_indices = @transform_5, window_bounds = array<i64: 1, 32>}, {transform_indices = @transform_6, window_bounds = array<i64: 1, 16, 32>}]} {
    %c0 = arith.constant 0 : index
    %c0_0 = arith.constant 0 : index
    %c0_1 = arith.constant 0 : index
    %0 = vector.load %arg1[%c0, %c0_0, %c0_1] : memref<1x16x32xf32, #tpu.memory_space<vmem>>, vector<1x16x32xf32>
    %1 = vector.shape_cast %0 : vector<1x16x32xf32> to vector<16x32xf32>
    %2 = arith.truncf %1 : vector<16x32xf32> to vector<16x32xbf16>
    %cst = arith.constant dense<0.000000e+00> : vector<16x16xf32>
    %3 = tpu.matmul %2, %2, %cst {dimension_numbers = #tpu.dot_dimension_numbers<[1], [1], [0], [0], [0, 0, 1, 0], [], []>} : vector<16x32xbf16>, vector<16x32xbf16>, vector<16x16xf32> -> vector<16x16xf32>
    %4 = tpu.iota {dimensions = array<i32: 0>} : vector<16x16xi32>
    %5 = tpu.iota {dimensions = array<i32: 1>} : vector<16x16xi32>
    %c0_2 = arith.constant 0 : index
    %c0_3 = arith.constant 0 : index
    %c0_4 = arith.constant 0 : index
    %6 = vector.load %arg2[%c0_2, %c0_3, %c0_4] : memref<1x1x16xf32, #tpu.memory_space<vmem>>, vector<1x1x16xf32>
    %7 = vector.shape_cast %6 : vector<1x1x16xf32> to vector<1x16xf32>
    %8 = vector.shape_cast %7 : vector<1x16xf32> to vector<1x16xf32>
    %9 = vector.broadcast %8 : vector<1x16xf32> to vector<16x16xf32>
    %cst_5 = arith.constant -1.000000e+00 : f32
    %10 = vector.broadcast %cst_5 : f32 to vector<16x16xf32>
    %11 = arith.cmpf olt, %9, %10 : vector<16x16xf32>
    %12 = arith.cmpi eq, %4, %5 : vector<16x16xi32>
    %13 = arith.ori %12, %11 : vector<16x16xi1>
    %cst_6 = arith.constant -1.000000e+09 : f32
    %14 = vector.broadcast %cst_6 : f32 to vector<16x16xf32>
    %15 = arith.select %13, %14, %3 : vector<16x16xi1>, vector<16x16xf32>
    %cst_7 = arith.constant dense<0xFF800000> : vector<16xf32>
    %16 = vector.multi_reduction <maximumf>, %15, %cst_7 [1] : vector<16x16xf32> to vector<16xf32>
    %17 = vector.shape_cast %16 : vector<16xf32> to vector<16x1xf32>
    %18 = vector.broadcast %17 : vector<16x1xf32> to vector<16x16xf32>
    %19 = arith.subf %15, %18 : vector<16x16xf32>
    %20 = math.exp %19 : vector<16x16xf32>
    %cst_8 = arith.constant dense<0.000000e+00> : vector<16xf32>
    %21 = vector.multi_reduction <add>, %20, %cst_8 [1] : vector<16x16xf32> to vector<16xf32>
    %22 = vector.shape_cast %21 : vector<16xf32> to vector<16x1xf32>
    %23 = tpu.reciprocal %22 {approx = true} : vector<16x1xf32> -> vector<16x1xf32>
    %24 = vector.broadcast %23 : vector<16x1xf32> to vector<16x16xf32>
    %25 = arith.mulf %20, %24 : vector<16x16xf32>
    %26 = arith.truncf %25 : vector<16x16xf32> to vector<16x16xbf16>
    %cst_9 = arith.constant dense<0.000000e+00> : vector<16x32xf32>
    %27 = tpu.matmul %26, %2, %cst_9 {dimension_numbers = #tpu.dot_dimension_numbers<[1], [0], [0], [1], [0, 0, 1, 1], [], []>} : vector<16x16xbf16>, vector<16x32xbf16>, vector<16x32xf32> -> vector<16x32xf32>
    %28 = arith.truncf %1 : vector<16x32xf32> to vector<16x32xbf16>
    %29 = arith.truncf %27 : vector<16x32xf32> to vector<16x32xbf16>
    %30 = arith.mulf %1, %27 : vector<16x32xf32>
    %31 = arith.truncf %30 : vector<16x32xf32> to vector<16x32xbf16>
    %32 = arith.subf %1, %27 : vector<16x32xf32>
    %33 = arith.truncf %32 : vector<16x32xf32> to vector<16x32xbf16>
    %c0_10 = arith.constant 0 : index
    %c0_11 = arith.constant 0 : index
    %c0_12 = arith.constant 0 : index
    %34 = vector.load %arg3[%c0_10, %c0_11, %c0_12] : memref<4x32x32xbf16, #tpu.memory_space<vmem>>, vector<1x32x32xbf16>
    %35 = vector.shape_cast %34 : vector<1x32x32xbf16> to vector<32x32xbf16>
    %cst_13 = arith.constant dense<0.000000e+00> : vector<16x32xf32>
    %36 = tpu.matmul %28, %35, %cst_13 {dimension_numbers = #tpu.dot_dimension_numbers<[1], [0], [0], [1], [0, 0, 1, 1], [], []>} : vector<16x32xbf16>, vector<32x32xbf16>, vector<16x32xf32> -> vector<16x32xf32>
    %c1 = arith.constant 1 : index
    %c0_14 = arith.constant 0 : index
    %c0_15 = arith.constant 0 : index
    %37 = vector.load %arg3[%c1, %c0_14, %c0_15] : memref<4x32x32xbf16, #tpu.memory_space<vmem>>, vector<1x32x32xbf16>
    %38 = vector.shape_cast %37 : vector<1x32x32xbf16> to vector<32x32xbf16>
    %cst_16 = arith.constant dense<0.000000e+00> : vector<16x32xf32>
    %39 = tpu.matmul %29, %38, %cst_16 {dimension_numbers = #tpu.dot_dimension_numbers<[1], [0], [0], [1], [0, 0, 1, 1], [], []>} : vector<16x32xbf16>, vector<32x32xbf16>, vector<16x32xf32> -> vector<16x32xf32>
    %40 = arith.addf %36, %39 : vector<16x32xf32>
    %c2 = arith.constant 2 : index
    %c0_17 = arith.constant 0 : index
    %c0_18 = arith.constant 0 : index
    %41 = vector.load %arg3[%c2, %c0_17, %c0_18] : memref<4x32x32xbf16, #tpu.memory_space<vmem>>, vector<1x32x32xbf16>
    %42 = vector.shape_cast %41 : vector<1x32x32xbf16> to vector<32x32xbf16>
    %cst_19 = arith.constant dense<0.000000e+00> : vector<16x32xf32>
    %43 = tpu.matmul %31, %42, %cst_19 {dimension_numbers = #tpu.dot_dimension_numbers<[1], [0], [0], [1], [0, 0, 1, 1], [], []>} : vector<16x32xbf16>, vector<32x32xbf16>, vector<16x32xf32> -> vector<16x32xf32>
    %44 = arith.addf %40, %43 : vector<16x32xf32>
    %c3 = arith.constant 3 : index
    %c0_20 = arith.constant 0 : index
    %c0_21 = arith.constant 0 : index
    %45 = vector.load %arg3[%c3, %c0_20, %c0_21] : memref<4x32x32xbf16, #tpu.memory_space<vmem>>, vector<1x32x32xbf16>
    %46 = vector.shape_cast %45 : vector<1x32x32xbf16> to vector<32x32xbf16>
    %cst_22 = arith.constant dense<0.000000e+00> : vector<16x32xf32>
    %47 = tpu.matmul %33, %46, %cst_22 {dimension_numbers = #tpu.dot_dimension_numbers<[1], [0], [0], [1], [0, 0, 1, 1], [], []>} : vector<16x32xbf16>, vector<32x32xbf16>, vector<16x32xf32> -> vector<16x32xf32>
    %48 = arith.addf %44, %47 : vector<16x32xf32>
    %c0_23 = arith.constant 0 : index
    %c0_24 = arith.constant 0 : index
    %49 = vector.load %arg4[%c0_23, %c0_24] : memref<1x32xf32, #tpu.memory_space<vmem>>, vector<1x32xf32>
    %50 = vector.broadcast %49 : vector<1x32xf32> to vector<16x32xf32>
    %51 = arith.addf %48, %50 : vector<16x32xf32>
    %52 = math.tanh %51 : vector<16x32xf32>
    %c0_25 = arith.constant 0 : index
    %c0_26 = arith.constant 0 : index
    %c0_27 = arith.constant 0 : index
    %53 = vector.load %arg5[%c0_25, %c0_26, %c0_27] : memref<4x32x32xbf16, #tpu.memory_space<vmem>>, vector<1x32x32xbf16>
    %54 = vector.shape_cast %53 : vector<1x32x32xbf16> to vector<32x32xbf16>
    %cst_28 = arith.constant dense<0.000000e+00> : vector<16x32xf32>
    %55 = tpu.matmul %28, %54, %cst_28 {dimension_numbers = #tpu.dot_dimension_numbers<[1], [0], [0], [1], [0, 0, 1, 1], [], []>} : vector<16x32xbf16>, vector<32x32xbf16>, vector<16x32xf32> -> vector<16x32xf32>
    %c1_29 = arith.constant 1 : index
    %c0_30 = arith.constant 0 : index
    %c0_31 = arith.constant 0 : index
    %56 = vector.load %arg5[%c1_29, %c0_30, %c0_31] : memref<4x32x32xbf16, #tpu.memory_space<vmem>>, vector<1x32x32xbf16>
    %57 = vector.shape_cast %56 : vector<1x32x32xbf16> to vector<32x32xbf16>
    %cst_32 = arith.constant dense<0.000000e+00> : vector<16x32xf32>
    %58 = tpu.matmul %29, %57, %cst_32 {dimension_numbers = #tpu.dot_dimension_numbers<[1], [0], [0], [1], [0, 0, 1, 1], [], []>} : vector<16x32xbf16>, vector<32x32xbf16>, vector<16x32xf32> -> vector<16x32xf32>
    %59 = arith.addf %55, %58 : vector<16x32xf32>
    %c2_33 = arith.constant 2 : index
    %c0_34 = arith.constant 0 : index
    %c0_35 = arith.constant 0 : index
    %60 = vector.load %arg5[%c2_33, %c0_34, %c0_35] : memref<4x32x32xbf16, #tpu.memory_space<vmem>>, vector<1x32x32xbf16>
    %61 = vector.shape_cast %60 : vector<1x32x32xbf16> to vector<32x32xbf16>
    %cst_36 = arith.constant dense<0.000000e+00> : vector<16x32xf32>
    %62 = tpu.matmul %31, %61, %cst_36 {dimension_numbers = #tpu.dot_dimension_numbers<[1], [0], [0], [1], [0, 0, 1, 1], [], []>} : vector<16x32xbf16>, vector<32x32xbf16>, vector<16x32xf32> -> vector<16x32xf32>
    %63 = arith.addf %59, %62 : vector<16x32xf32>
    %c3_37 = arith.constant 3 : index
    %c0_38 = arith.constant 0 : index
    %c0_39 = arith.constant 0 : index
    %64 = vector.load %arg5[%c3_37, %c0_38, %c0_39] : memref<4x32x32xbf16, #tpu.memory_space<vmem>>, vector<1x32x32xbf16>
    %65 = vector.shape_cast %64 : vector<1x32x32xbf16> to vector<32x32xbf16>
    %cst_40 = arith.constant dense<0.000000e+00> : vector<16x32xf32>
    %66 = tpu.matmul %33, %65, %cst_40 {dimension_numbers = #tpu.dot_dimension_numbers<[1], [0], [0], [1], [0, 0, 1, 1], [], []>} : vector<16x32xbf16>, vector<32x32xbf16>, vector<16x32xf32> -> vector<16x32xf32>
    %67 = arith.addf %63, %66 : vector<16x32xf32>
    %c0_41 = arith.constant 0 : index
    %c0_42 = arith.constant 0 : index
    %68 = vector.load %arg6[%c0_41, %c0_42] : memref<1x32xf32, #tpu.memory_space<vmem>>, vector<1x32xf32>
    %69 = vector.broadcast %68 : vector<1x32xf32> to vector<16x32xf32>
    %70 = arith.addf %67, %69 : vector<16x32xf32>
    %71 = arith.negf %70 : vector<16x32xf32>
    %72 = math.exp %71 : vector<16x32xf32>
    %cst_43 = arith.constant 1.000000e+00 : f32
    %73 = vector.broadcast %cst_43 : f32 to vector<16x32xf32>
    %74 = arith.addf %73, %72 : vector<16x32xf32>
    %75 = arith.divf %73, %74 : vector<16x32xf32>
    %76 = arith.mulf %75, %52 : vector<16x32xf32>
    %cst_44 = arith.constant 1.000000e+00 : f32
    %77 = vector.broadcast %cst_44 : f32 to vector<16x32xf32>
    %78 = arith.subf %77, %75 : vector<16x32xf32>
    %79 = arith.mulf %78, %1 : vector<16x32xf32>
    %80 = arith.addf %76, %79 : vector<16x32xf32>
    %c0_45 = arith.constant 0 : index
    %c0_46 = arith.constant 0 : index
    %c0_47 = arith.constant 0 : index
    %81 = vector.load %arg7[%c0_45, %c0_46, %c0_47] : memref<1x16x32xf32, #tpu.memory_space<vmem>>, vector<1x16x32xf32>
    %82 = vector.shape_cast %81 : vector<1x16x32xf32> to vector<16x32xf32>
    %83 = vector.shape_cast %80 : vector<16x32xf32> to vector<1x16x32xf32>
    tpu.vector_store %arg7[%c0_45, %c0_46, %c0_47], %83 {strides = array<i32>} : memref<1x16x32xf32, #tpu.memory_space<vmem>>, vector<1x16x32xf32>,
    return
  }
  func.func @transform_0(%arg0: i32) -> (i32, i32, i32) {
    %c0_i32 = arith.constant 0 : i32
    %c0_i32_0 = arith.constant 0 : i32
    %c0_i32_1 = arith.constant 0 : i32
    return %arg0, %c0_i32, %c0_i32_0 : i32, i32, i32
  }
  func.func @transform_1(%arg0: i32) -> (i32, i32, i32) {
    %c0_i32 = arith.constant 0 : i32
    %c0_i32_0 = arith.constant 0 : i32
    %c0_i32_1 = arith.constant 0 : i32
    return %arg0, %c0_i32, %c0_i32_0 : i32, i32, i32
  }
  func.func @transform_2(%arg0: i32) -> (i32, i32, i32) {
    %c0_i32 = arith.constant 0 : i32
    %c0_i32_0 = arith.constant 0 : i32
    %c0_i32_1 = arith.constant 0 : i32
    %c0_i32_2 = arith.constant 0 : i32
    return %c0_i32, %c0_i32_0, %c0_i32_1 : i32, i32, i32
  }
  func.func @transform_3(%arg0: i32) -> (i32, i32) {
    %c0_i32 = arith.constant 0 : i32
    %c0_i32_0 = arith.constant 0 : i32
    %c0_i32_1 = arith.constant 0 : i32
    return %c0_i32, %c0_i32_0 : i32, i32
  }
  func.func @transform_4(%arg0: i32) -> (i32, i32, i32) {
    %c0_i32 = arith.constant 0 : i32
    %c0_i32_0 = arith.constant 0 : i32
    %c0_i32_1 = arith.constant 0 : i32
    %c0_i32_2 = arith.constant 0 : i32
    return %c0_i32, %c0_i32_0, %c0_i32_1 : i32, i32, i32
  }
  func.func @transform_5(%arg0: i32) -> (i32, i32) {
    %c0_i32 = arith.constant 0 : i32
    %c0_i32_0 = arith.constant 0 : i32
    %c0_i32_1 = arith.constant 0 : i32
    return %c0_i32, %c0_i32_0 : i32, i32
  }
  func.func @transform_6(%arg0: i32) -> (i32, i32, i32) {
    %c0_i32 = arith.constant 0 : i32
    %c0_i32_0 = arith.constant 0 : i32
    %c0_i32_1 = arith.constant 0 : i32
    return %arg0, %c0_i32, %c0_i32_0 : i32, i32, i32
  }
}

module attributes {stable_mosaic.version = 11 : i64} {
  func.func @_pointer_kernel(%arg0: memref<2x16x32xf32, #tpu.memory_space<vmem>>, %arg1: memref<2x8x32xbf16, #tpu.memory_space<vmem>>, %arg2: memref<2x1x16xf32, #tpu.memory_space<vmem>>, %arg3: memref<2x1x8xf32, #tpu.memory_space<vmem>>, %arg4: memref<1x32xbf16, #tpu.memory_space<vmem>>, %arg5: memref<32x32xbf16, #tpu.memory_space<vmem>>, %arg6: memref<2x32x32xbf16, #tpu.memory_space<vmem>>, %arg7: memref<1x32xf32, #tpu.memory_space<vmem>>, %arg8: memref<32x32xbf16, #tpu.memory_space<vmem>>, %arg9: memref<2x2x16xf32, #tpu.memory_space<vmem>>) attributes {dimension_semantics = [], scalar_prefetch = 0 : i64, scratch_operands = 0 : i64, tpu.core_type = #tpu.core_type<tc>} {
    %c0 = arith.constant 0 : index
    %c0_0 = arith.constant 0 : index
    %c0_1 = arith.constant 0 : index
    %0 = vector.load %arg0[%c0, %c0_0, %c0_1] : memref<2x16x32xf32, #tpu.memory_space<vmem>>, vector<2x16x32xf32>
    %c0_2 = arith.constant 0 : index
    %c0_3 = arith.constant 0 : index
    %c0_4 = arith.constant 0 : index
    %1 = vector.load %arg1[%c0_2, %c0_3, %c0_4] : memref<2x8x32xbf16, #tpu.memory_space<vmem>>, vector<2x8x32xbf16>
    %c0_5 = arith.constant 0 : index
    %c0_6 = arith.constant 0 : index
    %c0_7 = arith.constant 0 : index
    %2 = vector.load %arg2[%c0_5, %c0_6, %c0_7] : memref<2x1x16xf32, #tpu.memory_space<vmem>>, vector<2x1x16xf32>
    %c0_8 = arith.constant 0 : index
    %c0_9 = arith.constant 0 : index
    %c0_10 = arith.constant 0 : index
    %3 = vector.load %arg3[%c0_8, %c0_9, %c0_10] : memref<2x1x8xf32, #tpu.memory_space<vmem>>, vector<2x1x8xf32>
    %4 = arith.truncf %0 : vector<2x16x32xf32> to vector<2x16x32xbf16>
    %c0_11 = arith.constant 0 : index
    %c0_12 = arith.constant 0 : index
    %5 = vector.load %arg4[%c0_11, %c0_12] : memref<1x32xbf16, #tpu.memory_space<vmem>>, vector<1x32xbf16>
    %6 = vector.shape_cast %5 : vector<1x32xbf16> to vector<1x1x32xbf16>
    %7 = vector.shape_cast %6 : vector<1x1x32xbf16> to vector<1x1x32xbf16>
    %8 = vector.broadcast %7 : vector<1x1x32xbf16> to vector<2x1x32xbf16>
    "tpu.trace_start"() <{level = 10 : i32, message = "bkd,bld->bkl"}> : () -> ()
    %cst = arith.constant dense<0.000000e+00> : vector<2x1x8xf32>
    %9 = tpu.matmul %8, %1, %cst {dimension_numbers = #tpu.dot_dimension_numbers<[2], [2], [1], [1], [0, 0, 0, 1, 1, 1], [0], [0]>} : vector<2x1x32xbf16>, vector<2x8x32xbf16>, vector<2x1x8xf32> -> vector<2x1x8xf32>
    "tpu.trace_stop"() : () -> ()
    %10 = arith.addf %9, %3 : vector<2x1x8xf32>
    %cst_13 = arith.constant dense<0xFF800000> : vector<2x1xf32>
    %11 = vector.multi_reduction <maximumf>, %10, %cst_13 [2] : vector<2x1x8xf32> to vector<2x1xf32>
    %12 = vector.shape_cast %11 : vector<2x1xf32> to vector<2x1x1xf32>
    %13 = vector.broadcast %12 : vector<2x1x1xf32> to vector<2x1x8xf32>
    %14 = arith.subf %10, %13 : vector<2x1x8xf32>
    %15 = math.exp %14 : vector<2x1x8xf32>
    %cst_14 = arith.constant dense<0.000000e+00> : vector<2x1xf32>
    %16 = vector.multi_reduction <add>, %15, %cst_14 [2] : vector<2x1x8xf32> to vector<2x1xf32>
    %17 = vector.shape_cast %16 : vector<2x1xf32> to vector<2x1x1xf32>
    %18 = tpu.reciprocal %17 {approx = true} : vector<2x1x1xf32> -> vector<2x1x1xf32>
    %19 = vector.broadcast %18 : vector<2x1x1xf32> to vector<2x1x8xf32>
    %20 = arith.mulf %15, %19 : vector<2x1x8xf32>
    %21 = arith.truncf %20 : vector<2x1x8xf32> to vector<2x1x8xbf16>
    "tpu.trace_start"() <{level = 10 : i32, message = "bkl,bld->bkd"}> : () -> ()
    %cst_15 = arith.constant dense<0.000000e+00> : vector<2x1x32xf32>
    %22 = tpu.matmul %21, %1, %cst_15 {dimension_numbers = #tpu.dot_dimension_numbers<[2], [1], [1], [2], [0, 0, 0, 1, 1, 2], [0], [0]>} : vector<2x1x8xbf16>, vector<2x8x32xbf16>, vector<2x1x32xf32> -> vector<2x1x32xf32>
    "tpu.trace_stop"() : () -> ()
    %23 = vector.shape_cast %22 : vector<2x1x32xf32> to vector<2x32xf32>
    %24 = arith.truncf %23 : vector<2x32xf32> to vector<2x32xbf16>
    %c0_16 = arith.constant 0 : index
    %c0_17 = arith.constant 0 : index
    %25 = vector.load %arg5[%c0_16, %c0_17] : memref<32x32xbf16, #tpu.memory_space<vmem>>, vector<32x32xbf16>
    %cst_18 = arith.constant dense<0.000000e+00> : vector<2x32xf32>
    %26 = tpu.matmul %24, %25, %cst_18 {dimension_numbers = #tpu.dot_dimension_numbers<[1], [0], [0], [1], [0, 0, 1, 1], [], []>} : vector<2x32xbf16>, vector<32x32xbf16>, vector<2x32xf32> -> vector<2x32xf32>
    %27 = vector.shape_cast %26 : vector<2x32xf32> to vector<2x1x32xf32>
    %28 = arith.truncf %27 : vector<2x1x32xf32> to vector<2x1x32xbf16>
    "tpu.trace_start"() <{level = 10 : i32, message = "bkd,bld->bkl"}> : () -> ()
    %cst_19 = arith.constant dense<0.000000e+00> : vector<2x1x16xf32>
    %29 = tpu.matmul %28, %4, %cst_19 {dimension_numbers = #tpu.dot_dimension_numbers<[2], [2], [1], [1], [0, 0, 0, 1, 1, 1], [0], [0]>} : vector<2x1x32xbf16>, vector<2x16x32xbf16>, vector<2x1x16xf32> -> vector<2x1x16xf32>
    "tpu.trace_stop"() : () -> ()
    %30 = arith.addf %29, %2 : vector<2x1x16xf32>
    %cst_20 = arith.constant dense<0xFF800000> : vector<2x1xf32>
    %31 = vector.multi_reduction <maximumf>, %30, %cst_20 [2] : vector<2x1x16xf32> to vector<2x1xf32>
    %32 = vector.shape_cast %31 : vector<2x1xf32> to vector<2x1x1xf32>
    %33 = vector.broadcast %32 : vector<2x1x1xf32> to vector<2x1x16xf32>
    %34 = arith.subf %30, %33 : vector<2x1x16xf32>
    %35 = math.exp %34 : vector<2x1x16xf32>
    %cst_21 = arith.constant dense<0.000000e+00> : vector<2x1xf32>
    %36 = vector.multi_reduction <add>, %35, %cst_21 [2] : vector<2x1x16xf32> to vector<2x1xf32>
    %37 = vector.shape_cast %36 : vector<2x1xf32> to vector<2x1x1xf32>
    %38 = tpu.reciprocal %37 {approx = true} : vector<2x1x1xf32> -> vector<2x1x1xf32>
    %39 = vector.broadcast %38 : vector<2x1x1xf32> to vector<2x1x16xf32>
    %40 = arith.mulf %35, %39 : vector<2x1x16xf32>
    %41 = arith.truncf %40 : vector<2x1x16xf32> to vector<2x1x16xbf16>
    "tpu.trace_start"() <{level = 10 : i32, message = "bkl,bld->bkd"}> : () -> ()
    %cst_22 = arith.constant dense<0.000000e+00> : vector<2x1x32xf32>
    %42 = tpu.matmul %41, %4, %cst_22 {dimension_numbers = #tpu.dot_dimension_numbers<[2], [1], [1], [2], [0, 0, 0, 1, 1, 2], [0], [0]>} : vector<2x1x16xbf16>, vector<2x16x32xbf16>, vector<2x1x32xf32> -> vector<2x1x32xf32>
    "tpu.trace_stop"() : () -> ()
    %43 = vector.shape_cast %42 : vector<2x1x32xf32> to vector<2x32xf32>
    %44 = arith.truncf %23 : vector<2x32xf32> to vector<2x32xbf16>
    %c0_23 = arith.constant 0 : index
    %c0_24 = arith.constant 0 : index
    %c0_25 = arith.constant 0 : index
    %45 = vector.load %arg6[%c0_23, %c0_24, %c0_25] : memref<2x32x32xbf16, #tpu.memory_space<vmem>>, vector<1x32x32xbf16>
    %46 = vector.shape_cast %45 : vector<1x32x32xbf16> to vector<32x32xbf16>
    %cst_26 = arith.constant dense<0.000000e+00> : vector<2x32xf32>
    %47 = tpu.matmul %44, %46, %cst_26 {dimension_numbers = #tpu.dot_dimension_numbers<[1], [0], [0], [1], [0, 0, 1, 1], [], []>} : vector<2x32xbf16>, vector<32x32xbf16>, vector<2x32xf32> -> vector<2x32xf32>
    %48 = arith.truncf %43 : vector<2x32xf32> to vector<2x32xbf16>
    %c1 = arith.constant 1 : index
    %c0_27 = arith.constant 0 : index
    %c0_28 = arith.constant 0 : index
    %49 = vector.load %arg6[%c1, %c0_27, %c0_28] : memref<2x32x32xbf16, #tpu.memory_space<vmem>>, vector<1x32x32xbf16>
    %50 = vector.shape_cast %49 : vector<1x32x32xbf16> to vector<32x32xbf16>
    %cst_29 = arith.constant dense<0.000000e+00> : vector<2x32xf32>
    %51 = tpu.matmul %48, %50, %cst_29 {dimension_numbers = #tpu.dot_dimension_numbers<[1], [0], [0], [1], [0, 0, 1, 1], [], []>} : vector<2x32xbf16>, vector<32x32xbf16>, vector<2x32xf32> -> vector<2x32xf32>
    %52 = arith.addf %47, %51 : vector<2x32xf32>
    %c0_30 = arith.constant 0 : index
    %c0_31 = arith.constant 0 : index
    %53 = vector.load %arg7[%c0_30, %c0_31] : memref<1x32xf32, #tpu.memory_space<vmem>>, vector<1x32xf32>
    %54 = vector.broadcast %53 : vector<1x32xf32> to vector<2x32xf32>
    %55 = arith.addf %52, %54 : vector<2x32xf32>
    %56 = math.tanh %55 : vector<2x32xf32>
    %57 = arith.truncf %56 : vector<2x32xf32> to vector<2x32xbf16>
    %c0_32 = arith.constant 0 : index
    %c0_33 = arith.constant 0 : index
    %58 = vector.load %arg8[%c0_32, %c0_33] : memref<32x32xbf16, #tpu.memory_space<vmem>>, vector<32x32xbf16>
    %cst_34 = arith.constant dense<0.000000e+00> : vector<2x32xf32>
    %59 = tpu.matmul %57, %58, %cst_34 {dimension_numbers = #tpu.dot_dimension_numbers<[1], [0], [0], [1], [0, 0, 1, 1], [], []>} : vector<2x32xbf16>, vector<32x32xbf16>, vector<2x32xf32> -> vector<2x32xf32>
    %60 = vector.shape_cast %59 : vector<2x32xf32> to vector<2x1x32xf32>
    %61 = arith.truncf %60 : vector<2x1x32xf32> to vector<2x1x32xbf16>
    "tpu.trace_start"() <{level = 10 : i32, message = "bkd,bld->bkl"}> : () -> ()
    %cst_35 = arith.constant dense<0.000000e+00> : vector<2x1x16xf32>
    %62 = tpu.matmul %61, %4, %cst_35 {dimension_numbers = #tpu.dot_dimension_numbers<[2], [2], [1], [1], [0, 0, 0, 1, 1, 1], [0], [0]>} : vector<2x1x32xbf16>, vector<2x16x32xbf16>, vector<2x1x16xf32> -> vector<2x1x16xf32>
    "tpu.trace_stop"() : () -> ()
    %63 = arith.addf %62, %2 : vector<2x1x16xf32>
    %cst_36 = arith.constant dense<0xFF800000> : vector<2x1xf32>
    %64 = vector.multi_reduction <maximumf>, %63, %cst_36 [2] : vector<2x1x16xf32> to vector<2x1xf32>
    %65 = vector.shape_cast %64 : vector<2x1xf32> to vector<2x1x1xf32>
    %66 = vector.broadcast %65 : vector<2x1x1xf32> to vector<2x1x16xf32>
    %67 = arith.subf %63, %66 : vector<2x1x16xf32>
    %68 = math.exp %67 : vector<2x1x16xf32>
    %cst_37 = arith.constant dense<0.000000e+00> : vector<2x1xf32>
    %69 = vector.multi_reduction <add>, %68, %cst_37 [2] : vector<2x1x16xf32> to vector<2x1xf32>
    %70 = vector.shape_cast %69 : vector<2x1xf32> to vector<2x1x1xf32>
    %71 = tpu.reciprocal %70 {approx = true} : vector<2x1x1xf32> -> vector<2x1x1xf32>
    %72 = vector.broadcast %71 : vector<2x1x1xf32> to vector<2x1x16xf32>
    %73 = arith.mulf %68, %72 : vector<2x1x16xf32>
    %c0_38 = arith.constant 0 : index
    %c0_39 = arith.constant 0 : index
    %c0_40 = arith.constant 0 : index
    %74 = vector.load %arg9[%c0_38, %c0_39, %c0_40] : memref<2x2x16xf32, #tpu.memory_space<vmem>>, vector<2x1x16xf32>
    tpu.vector_store %arg9[%c0_38, %c0_39, %c0_40], %40 {strides = array<i32>} : memref<2x2x16xf32, #tpu.memory_space<vmem>>, vector<2x1x16xf32>,
    %c0_41 = arith.constant 0 : index
    %c1_42 = arith.constant 1 : index
    %c0_43 = arith.constant 0 : index
    %75 = vector.load %arg9[%c0_41, %c1_42, %c0_43] : memref<2x2x16xf32, #tpu.memory_space<vmem>>, vector<2x1x16xf32>
    tpu.vector_store %arg9[%c0_41, %c1_42, %c0_43], %73 {strides = array<i32>} : memref<2x2x16xf32, #tpu.memory_space<vmem>>, vector<2x1x16xf32>,
    return
  }
}

</mosaic_0001>

<llo_original>
// kernel: custom-call.2
$region0: #{custom-call.2}
  %s0 = inlined_call_operand.vmem [shape: f32[32,8], index: 0, kind: output, shape index: {}]

// kernel: eq.4
$region0: #{eq.4}
  %s0 = inlined_call_operand.vmem [shape: s32[2,8], index: 0, kind: input, shape index: {}]
  %s1 = inlined_call_operand.vmem [shape: s32[16], index: 1, kind: output, shape index: {}]
  $region1: #{eq.4} parent=0
    #allocation0 [shape = 'u8[4096]{0}', space=vmem, size = 0x1000, scoped, tag = 'scoped mem for output reshape']
    #allocation1 [shape = 'u8[4096]{0}', space=vmem, size = 0x1000, scoped, tag = 'scoped mem for input reshape']
    %s3 = sshllo.u32 0, 2
    %v4 = vld [vmem:[%s0] sm:%s3]
    %5 = vst [vmem:[#allocation1] sm:%s3] %v4
    %v6 = vld [vmem:[#allocation1] sm:$0x1]
    %vm7 = vcmask 64512
    %8 = vst.msk [vmem:[#allocation0] sm:$0x1] %vm7, %v6
    %s9 = scalar_lea.vmem [#allocation1], 1
    %v10 = vld [vmem:[%s9] sm:$0x1]
    %11 = vrot.lane.b32.xlu0 %v10, 8
    %v12 = vpop.permute.xlu0 %11
    %vm13 = vcmask 130112
    %14 = vst.msk [vmem:[#allocation0] sm:$0x1] %vm13, %v12
    %s16 = sshllo.u32 0, 1
    %v18 = vld [vmem:[#allocation0] sm:%s16]
    %s19 = sshllo.u32 0, 1
    %20 = vst [vmem:[%s1] sm:%s19] %v18

// kernel: custom-call.10
$region0: #{custom-call.10}
  %s0 = inlined_call_operand.vmem [shape: f32[2,16], index: 0, kind: output, shape index: {}]

// kernel: custom-call.6
$region0: #{custom-call.6}
  %s0 = inlined_call_operand.vmem [shape: f32[16,8], index: 0, kind: output, shape index: {}]

// kernel: mnemonic_reader_forward.5
$region0: #{mnemonic_reader_forward.5}
  #allocation0 [shape = 'u32[]', space=smem, size = 0x4, offset = 0x4, fixed_abs, tag = 'smem constant byte address 0x4 - core index']
  #allocation1 [shape = 'u32[144,128]{1,0:T(1,128)}', space=vmem, size = 0x12000, scoped, tag = 'internal scratch']
  %s0 = inlined_call_operand.vmem [shape: f32[2,16,32], index: 0, kind: input, shape index: {}]
  %s1 = inlined_call_operand.vmem [shape: bf16[2,8,32], index: 1, kind: input, shape index: {}]
  %s2 = inlined_call_operand.vmem [shape: f32[2,1,8], index: 2, kind: input, shape index: {}]
  %s3 = inlined_call_operand.vmem [shape: bf16[4,32,32], index: 3, kind: input, shape index: {}]
  %s4 = inlined_call_operand.vmem [shape: f32[1,32], index: 4, kind: input, shape index: {}]
  %s5 = inlined_call_operand.vmem [shape: bf16[4,32,32], index: 5, kind: input, shape index: {}]
  %s6 = inlined_call_operand.vmem [shape: f32[1,32], index: 6, kind: input, shape index: {}]
  %s7 = inlined_call_operand.vmem [shape: f32[2,16,32], index: 7, kind: output, shape index: {}]
  %s8 = sld [smem:[#allocation0]]
  $region61: #{mnemonic_reader_forward.5} parent=0
    _
  %s10 = ssub.s32 1, %s8
  %s11 = scalar_select 0, %s10, %s8
  loop: start=0, step=1, limit=4
  $region2: #{mnemonic_reader_forward.5} parent=0 // loop_pre_header
    _
  $region3: #{mnemonic_reader_forward.5} parent=0 // loop_header
    %s13 = sphi 0, %s17
    %p14 = scmp.ge.s32.totalorder %s13, 4
    %s23 = sphi 0, %s25
    %s26 = sphi 0, %s23
    %s27 = sphi 0, %s26
    %s43 = sphi 0, %s27
    %s49 = sphi 0, %s51
    %s52 = sphi 0, %s49
    %s53 = sphi 0, %s52
    %s69 = sphi 0, %s53
    %s75 = sphi 0, %s77
    %s78 = sphi 0, %s75
    %s79 = sphi 0, %s78
    %s95 = sphi 0, %s79
    %s99 = sphi 0, %s99
    %s101 = sphi 0, %s99
    %s102 = sphi 0, %s101
    %s116 = sphi 0, %s102
    %s120 = sphi 0, %s120
    %s122 = sphi 0, %s120
    %s123 = sphi 0, %s122
    %s137 = sphi 0, %s123
    %s141 = sphi 0, %s141
    %s143 = sphi 0, %s141
    %s144 = sphi 0, %s143
    %s158 = sphi 0, %s144
    %s162 = sphi 0, %s162
    %s164 = sphi 0, %s162
    %s165 = sphi 0, %s164
    %s179 = sphi 0, %s165
    %s185 = sphi 0, %s187
    %s188 = sphi 0, %s185
    %s189 = sphi 0, %s188
    %s205 = sphi 0, %s189
  $region4: #{mnemonic_reader_forward.5} parent=0 // loop_header_branch
    %16 = sbr.rel (%p14) target = $region8
  $region5: #{mnemonic_reader_forward.5} parent=0 // loop_body
    %s18 = ssub.s32 %s13, 1
    %s19 = ssub.s32 %s13, 2
    %s20 = sadd.s32 %s13, 1
    %s21 = ssub.s32 %s13, %s20
    %p22 = scmp.eq.s32.totalorder %s21, 0
    %s24 = sadd.s32 %s23, 1
    %s25 = scalar_select %p22, %s23, %s24
    %p28 = pneg %p22
    %p29 = scmp.eq.s32.totalorder %s13, 1
    %p30 = por %p28, %p29
    %p31 = scmp.ne.s32.totalorder %s23, %s26
    %p32 = scmp.eq.s32.totalorder %s13, 0
    %p33 = por %p31, %p32
    %p34 = scmp.ne.s32.totalorder %s23, %s26
    %p35 = scmp.eq.s32.totalorder %s18, 1
    %p36 = por %p34, %p35
    %p37 = scmp.ne.s32.totalorder %s26, %s27
    %p38 = scmp.eq.s32.totalorder %s18, 0
    %p39 = por %p37, %p38
    %p40 = scmp.ne.s32.totalorder %s26, %s27
    %p41 = scmp.eq.s32.totalorder %s19, 1
    %p42 = por %p40, %p41
    %p44 = scmp.ne.s32.totalorder %s27, %s43
    %p45 = scmp.eq.s32.totalorder %s19, 0
    %p46 = por %p44, %p45
    %s47 = ssub.s32 %s13, %s20
    %p48 = scmp.eq.s32.totalorder %s47, 0
    %s50 = sadd.s32 %s49, 1
    %s51 = scalar_select %p48, %s49, %s50
    %p54 = pneg %p48
    %p55 = scmp.eq.s32.totalorder %s13, 1
    %p56 = por %p54, %p55
    %p57 = scmp.ne.s32.totalorder %s49, %s52
    %p58 = scmp.eq.s32.totalorder %s13, 0
    %p59 = por %p57, %p58
    %p60 = scmp.ne.s32.totalorder %s49, %s52
    %p61 = scmp.eq.s32.totalorder %s18, 1
    %p62 = por %p60, %p61
    %p63 = scmp.ne.s32.totalorder %s52, %s53
    %p64 = scmp.eq.s32.totalorder %s18, 0
    %p65 = por %p63, %p64
    %p66 = scmp.ne.s32.totalorder %s52, %s53
    %p67 = scmp.eq.s32.totalorder %s19, 1
    %p68 = por %p66, %p67
    %p70 = scmp.ne.s32.totalorder %s53, %s69
    %p71 = scmp.eq.s32.totalorder %s19, 0
    %p72 = por %p70, %p71
    %s73 = ssub.s32 %s13, %s20
    %p74 = scmp.eq.s32.totalorder %s73, 0
    %s76 = sadd.s32 %s75, 1
    %s77 = scalar_select %p74, %s75, %s76
    %p80 = pneg %p74
    %p81 = scmp.eq.s32.totalorder %s13, 1
    %p82 = por %p80, %p81
    %p83 = scmp.ne.s32.totalorder %s75, %s78
    %p84 = scmp.eq.s32.totalorder %s13, 0
    %p85 = por %p83, %p84
    %p86 = scmp.ne.s32.totalorder %s75, %s78
    %p87 = scmp.eq.s32.totalorder %s18, 1
    %p88 = por %p86, %p87
    %p89 = scmp.ne.s32.totalorder %s78, %s79
    %p90 = scmp.eq.s32.totalorder %s18, 0
    %p91 = por %p89, %p90
    %p92 = scmp.ne.s32.totalorder %s78, %s79
    %p93 = scmp.eq.s32.totalorder %s19, 1
    %p94 = por %p92, %p93
    %p96 = scmp.ne.s32.totalorder %s79, %s95
    %p97 = scmp.eq.s32.totalorder %s19, 0
    %p98 = por %p96, %p97
    %s100 = sadd.s32 %s99, 1
    %p103 = scmp.eq.s32.totalorder %s13, 1
    %p104 = scmp.ne.s32.totalorder %s99, %s101
    %p105 = scmp.eq.s32.totalorder %s13, 0
    %p106 = por %p104, %p105
    %p107 = scmp.ne.s32.totalorder %s99, %s101
    %p108 = scmp.eq.s32.totalorder %s18, 1
    %p109 = por %p107, %p108
    %p110 = scmp.ne.s32.totalorder %s101, %s102
    %p111 = scmp.eq.s32.totalorder %s18, 0
    %p112 = por %p110, %p111
    %p113 = scmp.ne.s32.totalorder %s101, %s102
    %p114 = scmp.eq.s32.totalorder %s19, 1
    %p115 = por %p113, %p114
    %p117 = scmp.ne.s32.totalorder %s102, %s116
    %p118 = scmp.eq.s32.totalorder %s19, 0
    %p119 = por %p117, %p118
    %s121 = sadd.s32 %s120, 1
    %p124 = scmp.eq.s32.totalorder %s13, 1
    %p125 = scmp.ne.s32.totalorder %s120, %s122
    %p126 = scmp.eq.s32.totalorder %s13, 0
    %p127 = por %p125, %p126
    %p128 = scmp.ne.s32.totalorder %s120, %s122
    %p129 = scmp.eq.s32.totalorder %s18, 1
    %p130 = por %p128, %p129
    %p131 = scmp.ne.s32.totalorder %s122, %s123
    %p132 = scmp.eq.s32.totalorder %s18, 0
    %p133 = por %p131, %p132
    %p134 = scmp.ne.s32.totalorder %s122, %s123
    %p135 = scmp.eq.s32.totalorder %s19, 1
    %p136 = por %p134, %p135
    %p138 = scmp.ne.s32.totalorder %s123, %s137
    %p139 = scmp.eq.s32.totalorder %s19, 0
    %p140 = por %p138, %p139
    %s142 = sadd.s32 %s141, 1
    %p145 = scmp.eq.s32.totalorder %s13, 1
    %p146 = scmp.ne.s32.totalorder %s141, %s143
    %p147 = scmp.eq.s32.totalorder %s13, 0
    %p148 = por %p146, %p147
    %p149 = scmp.ne.s32.totalorder %s141, %s143
    %p150 = scmp.eq.s32.totalorder %s18, 1
    %p151 = por %p149, %p150
    %p152 = scmp.ne.s32.totalorder %s143, %s144
    %p153 = scmp.eq.s32.totalorder %s18, 0
    %p154 = por %p152, %p153
    %p155 = scmp.ne.s32.totalorder %s143, %s144
    %p156 = scmp.eq.s32.totalorder %s19, 1
    %p157 = por %p155, %p156
    %p159 = scmp.ne.s32.totalorder %s144, %s158
    %p160 = scmp.eq.s32.totalorder %s19, 0
    %p161 = por %p159, %p160
    %s163 = sadd.s32 %s162, 1
    %p166 = scmp.eq.s32.totalorder %s13, 1
    %p167 = scmp.ne.s32.totalorder %s162, %s164
    %p168 = scmp.eq.s32.totalorder %s13, 0
    %p169 = por %p167, %p168
    %p170 = scmp.ne.s32.totalorder %s162, %s164
    %p171 = scmp.eq.s32.totalorder %s18, 1
    %p172 = por %p170, %p171
    %p173 = scmp.ne.s32.totalorder %s164, %s165
    %p174 = scmp.eq.s32.totalorder %s18, 0
    %p175 = por %p173, %p174
    %p176 = scmp.ne.s32.totalorder %s164, %s165
    %p177 = scmp.eq.s32.totalorder %s19, 1
    %p178 = por %p176, %p177
    %p180 = scmp.ne.s32.totalorder %s165, %s179
    %p181 = scmp.eq.s32.totalorder %s19, 0
    %p182 = por %p180, %p181
    %s183 = ssub.s32 %s13, %s20
    %p184 = scmp.eq.s32.totalorder %s183, 0
    %s186 = sadd.s32 %s185, 1
    %s187 = scalar_select %p184, %s185, %s186
    %p190 = pneg %p184
    %p191 = scmp.eq.s32.totalorder %s13, 1
    %p192 = por %p190, %p191
    %p193 = scmp.ne.s32.totalorder %s185, %s188
    %p194 = scmp.eq.s32.totalorder %s13, 0
    %p195 = por %p193, %p194
    %p196 = scmp.ne.s32.totalorder %s185, %s188
    %p197 = scmp.eq.s32.totalorder %s18, 1
    %p198 = por %p196, %p197
    %p199 = scmp.ne.s32.totalorder %s188, %s189
    %p200 = scmp.eq.s32.totalorder %s18, 0
    %p201 = por %p199, %p200
    %p202 = scmp.ne.s32.totalorder %s188, %s189
    %p203 = scmp.eq.s32.totalorder %s19, 1
    %p204 = por %p202, %p203
    %p206 = scmp.ne.s32.totalorder %s189, %s205
    %p207 = scmp.eq.s32.totalorder %s19, 0
    %p208 = por %p206, %p207
    %p209 = scmp.le.s32.totalorder 1, %s13
    %p210 = scmp.lt.s32.totalorder %s13, 3
    %p211 = pnand %p209, %p210
    %p212 = pneg %p211
    // Predicated region
    $region9: #{mnemonic_reader_forward.5} parent=5 // pred_check
      _
    $region10: #{mnemonic_reader_forward.5} parent=5 // pred_check_branch
      %214 = sbr.rel (%p211) target = $region12
    $region11: #{mnemonic_reader_forward.5} parent=5 // pred_region
      %s215 = ssub.s32 %s13, 1
      // Predicated region
      $region13: #{mnemonic_reader_forward.5} parent=11 // pred_check
        %p216 = pneg %p112
      $region14: #{mnemonic_reader_forward.5} parent=11 // pred_check_branch
        %218 = sbr.rel (%p216) target = $region16
      $region15: #{mnemonic_reader_forward.5} parent=11 // pred_region
        _
      $region16: #{mnemonic_reader_forward.5} parent=11 // pred_fallthru
        _
      // Predicated region
      $region17: #{mnemonic_reader_forward.5} parent=11 // pred_check
        %p219 = pneg %p133
      $region18: #{mnemonic_reader_forward.5} parent=11 // pred_check_branch
        %221 = sbr.rel (%p219) target = $region20
      $region19: #{mnemonic_reader_forward.5} parent=11 // pred_region
        _
      $region20: #{mnemonic_reader_forward.5} parent=11 // pred_fallthru
        _
      // Predicated region
      $region21: #{mnemonic_reader_forward.5} parent=11 // pred_check
        %p222 = pneg %p154
      $region22: #{mnemonic_reader_forward.5} parent=11 // pred_check_branch
        %224 = sbr.rel (%p222) target = $region24
      $region23: #{mnemonic_reader_forward.5} parent=11 // pred_region
        _
      $region24: #{mnemonic_reader_forward.5} parent=11 // pred_fallthru
        _
      // Predicated region
      $region25: #{mnemonic_reader_forward.5} parent=11 // pred_check
        %p225 = pneg %p175
      $region26: #{mnemonic_reader_forward.5} parent=11 // pred_check_branch
        %227 = sbr.rel (%p225) target = $region28
      $region27: #{mnemonic_reader_forward.5} parent=11 // pred_region
        _
      $region28: #{mnemonic_reader_forward.5} parent=11 // pred_fallthru
        _
    $region12: #{mnemonic_reader_forward.5} parent=5 // pred_fallthru
      _
    %p228 = scmp.lt.s32.totalorder %s13, 2
    // Predicated region
    $region29: #{mnemonic_reader_forward.5} parent=5 // pred_check
      %p229 = pneg %p228
    $region30: #{mnemonic_reader_forward.5} parent=5 // pred_check_branch
      %231 = sbr.rel (%p229) target = $region32
    $region31: #{mnemonic_reader_forward.5} parent=5 // pred_region
      // Predicated region
      $region33: #{mnemonic_reader_forward.5} parent=31 // pred_check
        %p232 = pneg %p33
      $region34: #{mnemonic_reader_forward.5} parent=31 // pred_check_branch
        %234 = sbr.rel (%p232) target = $region36
      $region35: #{mnemonic_reader_forward.5} parent=31 // pred_region
        %p235 = scmp.lt.s32.totalorder %s13, 1
        %s236 = scalar_select %p235, %s13, 1
        %s237 = smul.addr %s236, 2
        %s238 = smul.addr %s237, 8
        %s239 = scalar_lea.vmem %s0, %s238
      $region36: #{mnemonic_reader_forward.5} parent=31 // pred_fallthru
        _
      // Predicated region
      $region37: #{mnemonic_reader_forward.5} parent=31 // pred_check
        %p240 = pneg %p59
      $region38: #{mnemonic_reader_forward.5} parent=31 // pred_check_branch
        %242 = sbr.rel (%p240) target = $region40
      $region39: #{mnemonic_reader_forward.5} parent=31 // pred_region
        %p243 = scmp.lt.s32.totalorder %s13, 1
        %s244 = scalar_select %p243, %s13, 1
        %s245 = smul.addr %s244, 4
        %s246 = scalar_lea.vmem %s1, %s245
      $region40: #{mnemonic_reader_forward.5} parent=31 // pred_fallthru
        _
      // Predicated region
      $region41: #{mnemonic_reader_forward.5} parent=31 // pred_check
        %p247 = pneg %p85
      $region42: #{mnemonic_reader_forward.5} parent=31 // pred_check_branch
        %249 = sbr.rel (%p247) target = $region44
      $region43: #{mnemonic_reader_forward.5} parent=31 // pred_region
        %p250 = scmp.lt.s32.totalorder %s13, 1
        %s251 = scalar_select %p250, %s13, 1
        %s252 = scalar_lea.vmem %s2, %s251
      $region44: #{mnemonic_reader_forward.5} parent=31 // pred_fallthru
        _
    $region32: #{mnemonic_reader_forward.5} parent=5 // pred_fallthru
      _
    %p253 = scmp.le.s32.totalorder 1, %s13
    %p254 = scmp.lt.s32.totalorder %s13, 3
    %p255 = pnand %p253, %p254
    %p256 = pneg %p255
    // Predicated region
    $region45: #{mnemonic_reader_forward.5} parent=5 // pred_check
      _
    $region46: #{mnemonic_reader_forward.5} parent=5 // pred_check_branch
      %258 = sbr.rel (%p255) target = $region48
    $region47: #{mnemonic_reader_forward.5} parent=5 // pred_region
      %s259 = ssub.s32 %s13, 1
      %p260 = scmp.lt.s32.totalorder %s18, 1
      %s261 = scalar_select %p260, %s18, 1
      %s262 = smul.addr %s261, 2
      %s263 = smul.addr %s262, 8
      %s264 = scalar_lea.vmem %s0, %s263
      %p265 = pneg %p39
      %p266 = pneg %p36
      %p267 = scmp.lt.s32.totalorder %s18, 1
      %s268 = scalar_select %p267, %s18, 1
      %s269 = smul.addr %s268, 4
      %s270 = scalar_lea.vmem %s1, %s269
      %p271 = pneg %p65
      %p272 = pneg %p62
      %p273 = scmp.lt.s32.totalorder %s18, 1
      %s274 = scalar_select %p273, %s18, 1
      %s275 = scalar_lea.vmem %s2, %s274
      %p276 = pneg %p91
      %p277 = pneg %p88
      %p278 = pneg %p112
      %p279 = pneg %p109
      %p280 = pneg %p133
      %p281 = pneg %p130
      %p282 = pneg %p154
      %p283 = pneg %p151
      %p284 = pneg %p175
      %p285 = pneg %p172
      %p286 = pneg %p201
      %p287 = pneg %p198
      %p288 = scmp.lt.s32.totalorder %s18, 1
      %s289 = scalar_select %p288, %s18, 1
      %s290 = smul.addr %s289, 2
      %s291 = smul.addr %s290, 8
      %s292 = scalar_lea.vmem %s7, %s291
      %p293 = scmp.lt.s32.totalorder %s18, 1
      %s294 = scalar_select %p293, %s18, 1
      %s295 = smul.addr %s294, 2
      %s296 = smul.addr %s295, 8
      %s297 = scalar_lea.vmem %s0, %s296
      %p298 = scmp.lt.s32.totalorder %s18, 1
      %s299 = scalar_select %p298, %s18, 1
      %s300 = smul.addr %s299, 4
      %s301 = scalar_lea.vmem %s1, %s300
      %p302 = scmp.lt.s32.totalorder %s18, 1
      %s303 = scalar_select %p302, %s18, 1
      %s304 = scalar_lea.vmem %s2, %s303
      %p305 = scmp.lt.s32.totalorder %s18, 1
      %s306 = scalar_select %p305, %s18, 1
      %s307 = smul.addr %s306, 2
      %s308 = smul.addr %s307, 8
      %s309 = scalar_lea.vmem %s7, %s308
      %v311 = vld [vmem:[%s297] sm:$0xff]
      %v312 = vld [vmem:[%s297 + $0x8] sm:$0xff]
      %v313 = vld [vmem:[%s301] sm:$0xf]
      %v314 = vpack.c.bf16 %v312, %v311
      %v315 = vld [vmem:[%s304] sm:$0x1]
      %v317 = vlaneseq
      %v318 = vshrl.u32 %v317, 7
      %v319 = vsub.s32 0, %v318
      %v320 = vrot.slane %v315, %v319
      %vm322 = vcmask 261120
      %v324 = vsel %vm322, %v314, 0
      %v327 = vsel %vm322, %v313, 0
      %329 = vmatprep.subr.bf16.mxu0 0
      %330 = vmatpush1.bf16.xpose.msra.mxu0 %v327
      %331 = vmatprep.subr.bf16.mxu0 0
      %332 = vmatpush1.bf16.xpose.msra.mxu0 0
      %333 = vmatprep.subr.bf16.mxu0 0
      %334 = vmatpush1.bf16.xpose.msra.mxu0 0
      %335 = vmatprep.subr.bf16.mxu0 0
      %336 = vmatpush1.bf16.xpose.msra.mxu0 0
      %337 = vmatprep.subr.bf16.mxu0 0
      %338 = vmatpush1.bf16.xpose.msra.mxu0 0
      %339 = vmatprep.subr.bf16.mxu0 0
      %340 = vmatpush1.bf16.xpose.msra.mxu0 0
      %341 = vmatprep.subr.bf16.mxu0 0
      %342 = vmatpush1.bf16.xpose.msra.mxu0 0
      %343 = vmatprep.subr.bf16.mxu0 0
      %344 = vmatpush1.bf16.xpose.msra.mxu0 0
      %345 = vmatprep.subr.bf16.mxu0 0
      %346 = vmatpush1.bf16.xpose.msra.mxu0 0
      %347 = vmatprep.subr.bf16.mxu0 0
      %348 = vmatpush1.bf16.xpose.msra.mxu0 0
      %349 = vmatprep.subr.bf16.mxu0 0
      %350 = vmatpush1.bf16.xpose.msra.mxu0 0
      %351 = vmatprep.subr.bf16.mxu0 0
      %352 = vmatpush1.bf16.xpose.msra.mxu0 0
      %353 = vmatprep.subr.bf16.mxu0 0
      %354 = vmatpush1.bf16.xpose.msra.mxu0 0
      %355 = vmatprep.subr.bf16.mxu0 0
      %356 = vmatpush1.bf16.xpose.msra.mxu0 0
      %357 = vmatprep.subr.bf16.mxu0 0
      %358 = vmatpush1.bf16.xpose.msra.mxu0 0
      %359 = vmatprep.subr.bf16.mxu0 0
      %360 = vmatpush1.bf16.xpose.msra.mxu0 0
      %361 = vmatprep.mubr.bf16.mxu0 0
      %362 = vmatmul.mubr.bf16.gmra.mrb[0].mxu0 %v324
      %v363 = vpop.f32.mrb[0].mxu0
      %v364 = vadd.f32 %v320, %v363
      %v365 = vpop.f32.mrb[0].mxu0
      %v366 = vpop.f32.mrb[0].mxu0
      %v367 = vadd.f32 %v320, %v366
      %v368 = vpop.f32.mrb[0].mxu0
      %369 = vdwg.mxu0
      %vm370 = vcmask 64512
      %v371 = vsel %vm370, %v364, -inf
      %372 = vmax.xlane.f32.xlu0 %v371
      %v373 = vpop.xlane.xlu0 %372
      %v374 = vsel %vm370, %v367, -inf
      %375 = vmax.xlane.f32.xlu0 %v374
      %v376 = vpop.xlane.xlu0 %375
      %v377 = vsub.f32 %v364, %v373
      %v378 = vsub.f32 %v367, %v376
      %v379 = vmul.f32 %v377, 1.442695
      %v380 = vpow.pop %v379
      %v381 = vmul.f32 %v378, 1.442695
      %v382 = vpow.pop %v381
      %v383 = vsel %vm370, %v380, 0.0
      %384 = vadd.xlane.f32.xlu0 %v383
      %v385 = vpop.xlane.xlu0 %384
      %v386 = vsel %vm370, %v382, 0.0
      %387 = vadd.xlane.f32.xlu0 %v386
      %v388 = vpop.xlane.xlu0 %387
      %v389 = vrcp.pop %v385
      %v390 = vrcp.pop %v388
      %v391 = vmul.f32 %v380, %v389
      %v392 = vmul.f32 %v382, %v390
      %v393 = vpack.c.bf16 %v392, %v391
      %v395 = vsel %vm370, %v393, 0
      %vm397 = vcmask 1043456
      %v398 = vsel %vm397, %v313, 0
      %400 = vmatprep.subr.bf16.mxu0 0
      %401 = vmatpush1.bf16.msra.mxu0 %v398
      %402 = vmatprep.subr.bf16.mxu0 0
      %403 = vmatpush1.bf16.msra.mxu0 0
      %404 = vmatprep.subr.bf16.mxu0 0
      %405 = vmatpush1.bf16.msra.mxu0 0
      %406 = vmatprep.subr.bf16.mxu0 0
      %407 = vmatpush1.bf16.msra.mxu0 0
      %408 = vmatprep.subr.bf16.mxu0 0
      %409 = vmatpush1.bf16.msra.mxu0 0
      %410 = vmatprep.subr.bf16.mxu0 0
      %411 = vmatpush1.bf16.msra.mxu0 0
      %412 = vmatprep.subr.bf16.mxu0 0
      %413 = vmatpush1.bf16.msra.mxu0 0
      %414 = vmatprep.subr.bf16.mxu0 0
      %415 = vmatpush1.bf16.msra.mxu0 0
      %416 = vmatprep.subr.bf16.mxu0 0
      %417 = vmatpush1.bf16.msra.mxu0 0
      %418 = vmatprep.subr.bf16.mxu0 0
      %419 = vmatpush1.bf16.msra.mxu0 0
      %420 = vmatprep.subr.bf16.mxu0 0
      %421 = vmatpush1.bf16.msra.mxu0 0
      %422 = vmatprep.subr.bf16.mxu0 0
      %423 = vmatpush1.bf16.msra.mxu0 0
      %424 = vmatprep.subr.bf16.mxu0 0
      %425 = vmatpush1.bf16.msra.mxu0 0
      %426 = vmatprep.subr.bf16.mxu0 0
      %427 = vmatpush1.bf16.msra.mxu0 0
      %428 = vmatprep.subr.bf16.mxu0 0
      %429 = vmatpush1.bf16.msra.mxu0 0
      %430 = vmatprep.subr.bf16.mxu0 0
      %431 = vmatpush1.bf16.msra.mxu0 0
      %432 = vmatprep.mubr.bf16.mxu0 0
      %433 = vmatmul.mubr.bf16.gmra.mrb[0].mxu0 %v395
      %v434 = vpop.f32.mrb[0].mxu0
      %v435 = vadd.f32 0.0, %v434
      %v436 = vpop.f32.mrb[0].mxu0
      %v437 = vpop.f32.mrb[0].mxu0
      %v438 = vadd.f32 0.0, %v437
      %v439 = vpop.f32.mrb[0].mxu0
      %440 = vdwg.mxu0
      %v441 = vpack.c.bf16 %v438, %v435
      %v442 = vmul.f32 %v311, %v435
      %v443 = vmul.f32 %v312, %v438
      %v444 = vpack.c.bf16 %v443, %v442
      %v445 = vsub.f32 %v311, %v435
      %v446 = vsub.f32 %v312, %v438
      %v447 = vpack.c.bf16 %v446, %v445
      %v448 = vld [vmem:[%s3] sm:$0xf]
      %v449 = vld [vmem:[%s3 + $0x4] sm:$0xf]
      %v450 = vld [vmem:[%s3 + $0x8] sm:$0xf]
      %v451 = vld [vmem:[%s3 + $0xc] sm:$0xf]
      %s452 = scalar_lea.vmem %s3, 16
      %v453 = vld [vmem:[%s452] sm:$0xf]
      %v454 = vld [vmem:[%s452 + $0x4] sm:$0xf]
      %v455 = vld [vmem:[%s452 + $0x8] sm:$0xf]
      %v456 = vld [vmem:[%s452 + $0xc] sm:$0xf]
      %v461 = vunpack.c.l.b16 %v453
      %v462 = vunpack.c.l.b16 %v454
      %v463 = vunpack.c.l.b16 %v455
      %v464 = vunpack.c.l.b16 %v456
      %v465 = vpack.c.b16 %v462, %v461
      %v466 = vpack.c.b16 %v464, %v463
      %v470 = vsel %vm322, %v441, 0
      %472 = vmatprep.subr.bf16.mxu0 0
      %473 = vmatpush1.bf16.msra.mxu0 %v465
      %474 = vmatprep.subr.bf16.mxu0 0
      %475 = vmatpush1.bf16.msra.mxu0 %v466
      %476 = vmatprep.subr.bf16.mxu0 0
      %477 = vmatpush1.bf16.msra.mxu0 0
      %478 = vmatprep.subr.bf16.mxu0 0
      %479 = vmatpush1.bf16.msra.mxu0 0
      %480 = vmatprep.subr.bf16.mxu0 0
      %481 = vmatpush1.bf16.msra.mxu0 0
      %482 = vmatprep.subr.bf16.mxu0 0
      %483 = vmatpush1.bf16.msra.mxu0 0
      %484 = vmatprep.subr.bf16.mxu0 0
      %485 = vmatpush1.bf16.msra.mxu0 0
      %486 = vmatprep.subr.bf16.mxu0 0
      %487 = vmatpush1.bf16.msra.mxu0 0
      %488 = vmatprep.subr.bf16.mxu0 0
      %489 = vmatpush1.bf16.msra.mxu0 0
      %490 = vmatprep.subr.bf16.mxu0 0
      %491 = vmatpush1.bf16.msra.mxu0 0
      %492 = vmatprep.subr.bf16.mxu0 0
      %493 = vmatpush1.bf16.msra.mxu0 0
      %494 = vmatprep.subr.bf16.mxu0 0
      %495 = vmatpush1.bf16.msra.mxu0 0
      %496 = vmatprep.subr.bf16.mxu0 0
      %497 = vmatpush1.bf16.msra.mxu0 0
      %498 = vmatprep.subr.bf16.mxu0 0
      %499 = vmatpush1.bf16.msra.mxu0 0
      %500 = vmatprep.subr.bf16.mxu0 0
      %501 = vmatpush1.bf16.msra.mxu0 0
      %502 = vmatprep.subr.bf16.mxu0 0
      %503 = vmatpush1.bf16.msra.mxu0 0
      %504 = vmatprep.mubr.bf16.mxu0 0
      %505 = vmatmul.mubr.bf16.gmra.mrb[0].mxu0 %v470
      %v506 = vpop.f32.mrb[0].mxu0
      %v507 = vadd.f32 0.0, %v506
      %v508 = vpop.f32.mrb[0].mxu0
      %v509 = vpop.f32.mrb[0].mxu0
      %v510 = vadd.f32 0.0, %v509
      %v511 = vpop.f32.mrb[0].mxu0
      %512 = vdwg.mxu0
      %v517 = vunpack.c.l.b16 %v448
      %v518 = vunpack.c.l.b16 %v449
      %v519 = vunpack.c.l.b16 %v450
      %v520 = vunpack.c.l.b16 %v451
      %v521 = vpack.c.b16 %v518, %v517
      %v522 = vpack.c.b16 %v520, %v519
      %525 = vmatprep.subr.bf16.mxu0 0
      %526 = vmatpush1.bf16.msra.mxu0 %v521
      %527 = vmatprep.subr.bf16.mxu0 0
      %528 = vmatpush1.bf16.msra.mxu0 %v522
      %529 = vmatprep.subr.bf16.mxu0 0
      %530 = vmatpush1.bf16.msra.mxu0 0
      %531 = vmatprep.subr.bf16.mxu0 0
      %532 = vmatpush1.bf16.msra.mxu0 0
      %533 = vmatprep.subr.bf16.mxu0 0
      %534 = vmatpush1.bf16.msra.mxu0 0
      %535 = vmatprep.subr.bf16.mxu0 0
      %536 = vmatpush1.bf16.msra.mxu0 0
      %537 = vmatprep.subr.bf16.mxu0 0
      %538 = vmatpush1.bf16.msra.mxu0 0
      %539 = vmatprep.subr.bf16.mxu0 0
      %540 = vmatpush1.bf16.msra.mxu0 0
      %541 = vmatprep.subr.bf16.mxu0 0
      %542 = vmatpush1.bf16.msra.mxu0 0
      %543 = vmatprep.subr.bf16.mxu0 0
      %544 = vmatpush1.bf16.msra.mxu0 0
      %545 = vmatprep.subr.bf16.mxu0 0
      %546 = vmatpush1.bf16.msra.mxu0 0
      %547 = vmatprep.subr.bf16.mxu0 0
      %548 = vmatpush1.bf16.msra.mxu0 0
      %549 = vmatprep.subr.bf16.mxu0 0
      %550 = vmatpush1.bf16.msra.mxu0 0
      %551 = vmatprep.subr.bf16.mxu0 0
      %552 = vmatpush1.bf16.msra.mxu0 0
      %553 = vmatprep.subr.bf16.mxu0 0
      %554 = vmatpush1.bf16.msra.mxu0 0
      %555 = vmatprep.subr.bf16.mxu0 0
      %556 = vmatpush1.bf16.msra.mxu0 0
      %557 = vmatprep.mubr.bf16.mxu0 0
      %558 = vmatmul.mubr.bf16.gmra.mrb[0].mxu0 %v324
      %v559 = vpop.f32.mrb[0].mxu0
      %v560 = vadd.f32 %v507, %v559
      %v561 = vpop.f32.mrb[0].mxu0
      %v562 = vpop.f32.mrb[0].mxu0
      %v563 = vadd.f32 %v510, %v562
      %v564 = vpop.f32.mrb[0].mxu0
      %565 = vdwg.mxu0
      %s566 = scalar_lea.vmem %s3, 32
      %v567 = vld [vmem:[%s566] sm:$0xf]
      %v568 = vld [vmem:[%s566 + $0x4] sm:$0xf]
      %v569 = vld [vmem:[%s566 + $0x8] sm:$0xf]
      %v570 = vld [vmem:[%s566 + $0xc] sm:$0xf]
      %v575 = vunpack.c.l.b16 %v567
      %v576 = vunpack.c.l.b16 %v568
      %v577 = vunpack.c.l.b16 %v569
      %v578 = vunpack.c.l.b16 %v570
      %v579 = vpack.c.b16 %v576, %v575
      %v580 = vpack.c.b16 %v578, %v577
      %v584 = vsel %vm322, %v444, 0
      %586 = vmatprep.subr.bf16.mxu0 0
      %587 = vmatpush1.bf16.msra.mxu0 %v579
      %588 = vmatprep.subr.bf16.mxu0 0
      %589 = vmatpush1.bf16.msra.mxu0 %v580
      %590 = vmatprep.subr.bf16.mxu0 0
      %591 = vmatpush1.bf16.msra.mxu0 0
      %592 = vmatprep.subr.bf16.mxu0 0
      %593 = vmatpush1.bf16.msra.mxu0 0
      %594 = vmatprep.subr.bf16.mxu0 0
      %595 = vmatpush1.bf16.msra.mxu0 0
      %596 = vmatprep.subr.bf16.mxu0 0
      %597 = vmatpush1.bf16.msra.mxu0 0
      %598 = vmatprep.subr.bf16.mxu0 0
      %599 = vmatpush1.bf16.msra.mxu0 0
      %600 = vmatprep.subr.bf16.mxu0 0
      %601 = vmatpush1.bf16.msra.mxu0 0
      %602 = vmatprep.subr.bf16.mxu0 0
      %603 = vmatpush1.bf16.msra.mxu0 0
      %604 = vmatprep.subr.bf16.mxu0 0
      %605 = vmatpush1.bf16.msra.mxu0 0
      %606 = vmatprep.subr.bf16.mxu0 0
      %607 = vmatpush1.bf16.msra.mxu0 0
      %608 = vmatprep.subr.bf16.mxu0 0
      %609 = vmatpush1.bf16.msra.mxu0 0
      %610 = vmatprep.subr.bf16.mxu0 0
      %611 = vmatpush1.bf16.msra.mxu0 0
      %612 = vmatprep.subr.bf16.mxu0 0
      %613 = vmatpush1.bf16.msra.mxu0 0
      %614 = vmatprep.subr.bf16.mxu0 0
      %615 = vmatpush1.bf16.msra.mxu0 0
      %616 = vmatprep.subr.bf16.mxu0 0
      %617 = vmatpush1.bf16.msra.mxu0 0
      %618 = vmatprep.mubr.bf16.mxu0 0
      %619 = vmatmul.mubr.bf16.gmra.mrb[0].mxu0 %v584
      %v620 = vpop.f32.mrb[0].mxu0
      %v621 = vadd.f32 0.0, %v620
      %v622 = vpop.f32.mrb[0].mxu0
      %v623 = vpop.f32.mrb[0].mxu0
      %v624 = vadd.f32 0.0, %v623
      %v625 = vpop.f32.mrb[0].mxu0
      %626 = vdwg.mxu0
      %v627 = vadd.f32 %v560, %v621
      %v628 = vadd.f32 %v563, %v624
      %s629 = scalar_lea.vmem %s3, 48
      %v630 = vld [vmem:[%s629] sm:$0xf]
      %v631 = vld [vmem:[%s629 + $0x4] sm:$0xf]
      %v632 = vld [vmem:[%s629 + $0x8] sm:$0xf]
      %v633 = vld [vmem:[%s629 + $0xc] sm:$0xf]
      %v638 = vunpack.c.l.b16 %v630
      %v639 = vunpack.c.l.b16 %v631
      %v640 = vunpack.c.l.b16 %v632
      %v641 = vunpack.c.l.b16 %v633
      %v642 = vpack.c.b16 %v639, %v638
      %v643 = vpack.c.b16 %v641, %v640
      %v647 = vsel %vm322, %v447, 0
      %649 = vmatprep.subr.bf16.mxu0 0
      %650 = vmatpush1.bf16.msra.mxu0 %v642
      %651 = vmatprep.subr.bf16.mxu0 0
      %652 = vmatpush1.bf16.msra.mxu0 %v643
      %653 = vmatprep.subr.bf16.mxu0 0
      %654 = vmatpush1.bf16.msra.mxu0 0
      %655 = vmatprep.subr.bf16.mxu0 0
      %656 = vmatpush1.bf16.msra.mxu0 0
      %657 = vmatprep.subr.bf16.mxu0 0
      %658 = vmatpush1.bf16.msra.mxu0 0
      %659 = vmatprep.subr.bf16.mxu0 0
      %660 = vmatpush1.bf16.msra.mxu0 0
      %661 = vmatprep.subr.bf16.mxu0 0
      %662 = vmatpush1.bf16.msra.mxu0 0
      %663 = vmatprep.subr.bf16.mxu0 0
      %664 = vmatpush1.bf16.msra.mxu0 0
      %665 = vmatprep.subr.bf16.mxu0 0
      %666 = vmatpush1.bf16.msra.mxu0 0
      %667 = vmatprep.subr.bf16.mxu0 0
      %668 = vmatpush1.bf16.msra.mxu0 0
      %669 = vmatprep.subr.bf16.mxu0 0
      %670 = vmatpush1.bf16.msra.mxu0 0
      %671 = vmatprep.subr.bf16.mxu0 0
      %672 = vmatpush1.bf16.msra.mxu0 0
      %673 = vmatprep.subr.bf16.mxu0 0
      %674 = vmatpush1.bf16.msra.mxu0 0
      %675 = vmatprep.subr.bf16.mxu0 0
      %676 = vmatpush1.bf16.msra.mxu0 0
      %677 = vmatprep.subr.bf16.mxu0 0
      %678 = vmatpush1.bf16.msra.mxu0 0
      %679 = vmatprep.subr.bf16.mxu0 0
      %680 = vmatpush1.bf16.msra.mxu0 0
      %681 = vmatprep.mubr.bf16.mxu0 0
      %682 = vmatmul.mubr.bf16.gmra.mrb[0].mxu0 %v647
      %v683 = vpop.f32.mrb[0].mxu0
      %v684 = vadd.f32 0.0, %v683
      %v685 = vpop.f32.mrb[0].mxu0
      %v686 = vpop.f32.mrb[0].mxu0
      %v687 = vadd.f32 0.0, %v686
      %v688 = vpop.f32.mrb[0].mxu0
      %689 = vdwg.mxu0
      %v690 = vadd.f32 %v627, %v684
      %v691 = vadd.f32 %v628, %v687
      %v692 = vld [vmem:[%s4] sm:$0x1]
      %v694 = vlaneseq
      %v695 = vshrl.u32 %v694, 7
      %v696 = vsub.s32 0, %v695
      %v697 = vrot.slane %v692, %v696
      %v699 = vadd.f32 %v690, %v697
      %v700 = vadd.f32 %v691, %v697
      %v701 = vtanh.pop %v699
      %v702 = vtanh.pop %v700
      %v703 = vld [vmem:[%s5] sm:$0xf]
      %v704 = vld [vmem:[%s5 + $0x4] sm:$0xf]
      %v705 = vld [vmem:[%s5 + $0x8] sm:$0xf]
      %v706 = vld [vmem:[%s5 + $0xc] sm:$0xf]
      %s707 = scalar_lea.vmem %s5, 16
      %v708 = vld [vmem:[%s707] sm:$0xf]
      %v709 = vld [vmem:[%s707 + $0x4] sm:$0xf]
      %v710 = vld [vmem:[%s707 + $0x8] sm:$0xf]
      %v711 = vld [vmem:[%s707 + $0xc] sm:$0xf]
      %v716 = vunpack.c.l.b16 %v708
      %v717 = vunpack.c.l.b16 %v709
      %v718 = vunpack.c.l.b16 %v710
      %v719 = vunpack.c.l.b16 %v711
      %v720 = vpack.c.b16 %v717, %v716
      %v721 = vpack.c.b16 %v719, %v718
      %724 = vmatprep.subr.bf16.mxu0 0
      %725 = vmatpush1.bf16.msra.mxu0 %v720
      %726 = vmatprep.subr.bf16.mxu0 0
      %727 = vmatpush1.bf16.msra.mxu0 %v721
      %728 = vmatprep.subr.bf16.mxu0 0
      %729 = vmatpush1.bf16.msra.mxu0 0
      %730 = vmatprep.subr.bf16.mxu0 0
      %731 = vmatpush1.bf16.msra.mxu0 0
      %732 = vmatprep.subr.bf16.mxu0 0
      %733 = vmatpush1.bf16.msra.mxu0 0
      %734 = vmatprep.subr.bf16.mxu0 0
      %735 = vmatpush1.bf16.msra.mxu0 0
      %736 = vmatprep.subr.bf16.mxu0 0
      %737 = vmatpush1.bf16.msra.mxu0 0
      %738 = vmatprep.subr.bf16.mxu0 0
      %739 = vmatpush1.bf16.msra.mxu0 0
      %740 = vmatprep.subr.bf16.mxu0 0
      %741 = vmatpush1.bf16.msra.mxu0 0
      %742 = vmatprep.subr.bf16.mxu0 0
      %743 = vmatpush1.bf16.msra.mxu0 0
      %744 = vmatprep.subr.bf16.mxu0 0
      %745 = vmatpush1.bf16.msra.mxu0 0
      %746 = vmatprep.subr.bf16.mxu0 0
      %747 = vmatpush1.bf16.msra.mxu0 0
      %748 = vmatprep.subr.bf16.mxu0 0
      %749 = vmatpush1.bf16.msra.mxu0 0
      %750 = vmatprep.subr.bf16.mxu0 0
      %751 = vmatpush1.bf16.msra.mxu0 0
      %752 = vmatprep.subr.bf16.mxu0 0
      %753 = vmatpush1.bf16.msra.mxu0 0
      %754 = vmatprep.subr.bf16.mxu0 0
      %755 = vmatpush1.bf16.msra.mxu0 0
      %756 = vmatprep.mubr.bf16.mxu0 0
      %757 = vmatmul.mubr.bf16.gmra.mrb[0].mxu0 %v470
      %v758 = vpop.f32.mrb[0].mxu0
      %v759 = vadd.f32 0.0, %v758
      %v760 = vpop.f32.mrb[0].mxu0
      %v761 = vpop.f32.mrb[0].mxu0
      %v762 = vadd.f32 0.0, %v761
      %v763 = vpop.f32.mrb[0].mxu0
      %764 = vdwg.mxu0
      %v769 = vunpack.c.l.b16 %v703
      %v770 = vunpack.c.l.b16 %v704
      %v771 = vunpack.c.l.b16 %v705
      %v772 = vunpack.c.l.b16 %v706
      %v773 = vpack.c.b16 %v770, %v769
      %v774 = vpack.c.b16 %v772, %v771
      %777 = vmatprep.subr.bf16.mxu0 0
      %778 = vmatpush1.bf16.msra.mxu0 %v773
      %779 = vmatprep.subr.bf16.mxu0 0
      %780 = vmatpush1.bf16.msra.mxu0 %v774
      %781 = vmatprep.subr.bf16.mxu0 0
      %782 = vmatpush1.bf16.msra.mxu0 0
      %783 = vmatprep.subr.bf16.mxu0 0
      %784 = vmatpush1.bf16.msra.mxu0 0
      %785 = vmatprep.subr.bf16.mxu0 0
      %786 = vmatpush1.bf16.msra.mxu0 0
      %787 = vmatprep.subr.bf16.mxu0 0
      %788 = vmatpush1.bf16.msra.mxu0 0
      %789 = vmatprep.subr.bf16.mxu0 0
      %790 = vmatpush1.bf16.msra.mxu0 0
      %791 = vmatprep.subr.bf16.mxu0 0
      %792 = vmatpush1.bf16.msra.mxu0 0
      %793 = vmatprep.subr.bf16.mxu0 0
      %794 = vmatpush1.bf16.msra.mxu0 0
      %795 = vmatprep.subr.bf16.mxu0 0
      %796 = vmatpush1.bf16.msra.mxu0 0
      %797 = vmatprep.subr.bf16.mxu0 0
      %798 = vmatpush1.bf16.msra.mxu0 0
      %799 = vmatprep.subr.bf16.mxu0 0
      %800 = vmatpush1.bf16.msra.mxu0 0
      %801 = vmatprep.subr.bf16.mxu0 0
      %802 = vmatpush1.bf16.msra.mxu0 0
      %803 = vmatprep.subr.bf16.mxu0 0
      %804 = vmatpush1.bf16.msra.mxu0 0
      %805 = vmatprep.subr.bf16.mxu0 0
      %806 = vmatpush1.bf16.msra.mxu0 0
      %807 = vmatprep.subr.bf16.mxu0 0
      %808 = vmatpush1.bf16.msra.mxu0 0
      %809 = vmatprep.mubr.bf16.mxu0 0
      %810 = vmatmul.mubr.bf16.gmra.mrb[0].mxu0 %v324
      %v811 = vpop.f32.mrb[0].mxu0
      %v812 = vadd.f32 %v759, %v811
      %v813 = vpop.f32.mrb[0].mxu0
      %v814 = vpop.f32.mrb[0].mxu0
      %v815 = vadd.f32 %v762, %v814
      %v816 = vpop.f32.mrb[0].mxu0
      %817 = vdwg.mxu0
      %s818 = scalar_lea.vmem %s5, 32
      %v819 = vld [vmem:[%s818] sm:$0xf]
      %v820 = vld [vmem:[%s818 + $0x4] sm:$0xf]
      %v821 = vld [vmem:[%s818 + $0x8] sm:$0xf]
      %v822 = vld [vmem:[%s818 + $0xc] sm:$0xf]
      %v827 = vunpack.c.l.b16 %v819
      %v828 = vunpack.c.l.b16 %v820
      %v829 = vunpack.c.l.b16 %v821
      %v830 = vunpack.c.l.b16 %v822
      %v831 = vpack.c.b16 %v828, %v827
      %v832 = vpack.c.b16 %v830, %v829
      %835 = vmatprep.subr.bf16.mxu0 0
      %836 = vmatpush1.bf16.msra.mxu0 %v831
      %837 = vmatprep.subr.bf16.mxu0 0
      %838 = vmatpush1.bf16.msra.mxu0 %v832
      %839 = vmatprep.subr.bf16.mxu0 0
      %840 = vmatpush1.bf16.msra.mxu0 0
      %841 = vmatprep.subr.bf16.mxu0 0
      %842 = vmatpush1.bf16.msra.mxu0 0
      %843 = vmatprep.subr.bf16.mxu0 0
      %844 = vmatpush1.bf16.msra.mxu0 0
      %845 = vmatprep.subr.bf16.mxu0 0
      %846 = vmatpush1.bf16.msra.mxu0 0
      %847 = vmatprep.subr.bf16.mxu0 0
      %848 = vmatpush1.bf16.msra.mxu0 0
      %849 = vmatprep.subr.bf16.mxu0 0
      %850 = vmatpush1.bf16.msra.mxu0 0
      %851 = vmatprep.subr.bf16.mxu0 0
      %852 = vmatpush1.bf16.msra.mxu0 0
      %853 = vmatprep.subr.bf16.mxu0 0
      %854 = vmatpush1.bf16.msra.mxu0 0
      %855 = vmatprep.subr.bf16.mxu0 0
      %856 = vmatpush1.bf16.msra.mxu0 0
      %857 = vmatprep.subr.bf16.mxu0 0
      %858 = vmatpush1.bf16.msra.mxu0 0
      %859 = vmatprep.subr.bf16.mxu0 0
      %860 = vmatpush1.bf16.msra.mxu0 0
      %861 = vmatprep.subr.bf16.mxu0 0
      %862 = vmatpush1.bf16.msra.mxu0 0
      %863 = vmatprep.subr.bf16.mxu0 0
      %864 = vmatpush1.bf16.msra.mxu0 0
      %865 = vmatprep.subr.bf16.mxu0 0
      %866 = vmatpush1.bf16.msra.mxu0 0
      %867 = vmatprep.mubr.bf16.mxu0 0
      %868 = vmatmul.mubr.bf16.gmra.mrb[0].mxu0 %v584
      %v869 = vpop.f32.mrb[0].mxu0
      %v870 = vadd.f32 0.0, %v869
      %v871 = vpop.f32.mrb[0].mxu0
      %v872 = vpop.f32.mrb[0].mxu0
      %v873 = vadd.f32 0.0, %v872
      %v874 = vpop.f32.mrb[0].mxu0
      %875 = vdwg.mxu0
      %v876 = vadd.f32 %v812, %v870
      %v877 = vadd.f32 %v815, %v873
      %s878 = scalar_lea.vmem %s5, 48
      %v879 = vld [vmem:[%s878] sm:$0xf]
      %v880 = vld [vmem:[%s878 + $0x4] sm:$0xf]
      %v881 = vld [vmem:[%s878 + $0x8] sm:$0xf]
      %v882 = vld [vmem:[%s878 + $0xc] sm:$0xf]
      %v887 = vunpack.c.l.b16 %v879
      %v888 = vunpack.c.l.b16 %v880
      %v889 = vunpack.c.l.b16 %v881
      %v890 = vunpack.c.l.b16 %v882
      %v891 = vpack.c.b16 %v888, %v887
      %v892 = vpack.c.b16 %v890, %v889
      %895 = vmatprep.subr.bf16.mxu0 0
      %896 = vmatpush1.bf16.msra.mxu0 %v891
      %897 = vmatprep.subr.bf16.mxu0 0
      %898 = vmatpush1.bf16.msra.mxu0 %v892
      %899 = vmatprep.subr.bf16.mxu0 0
      %900 = vmatpush1.bf16.msra.mxu0 0
      %901 = vmatprep.subr.bf16.mxu0 0
      %902 = vmatpush1.bf16.msra.mxu0 0
      %903 = vmatprep.subr.bf16.mxu0 0
      %904 = vmatpush1.bf16.msra.mxu0 0
      %905 = vmatprep.subr.bf16.mxu0 0
      %906 = vmatpush1.bf16.msra.mxu0 0
      %907 = vmatprep.subr.bf16.mxu0 0
      %908 = vmatpush1.bf16.msra.mxu0 0
      %909 = vmatprep.subr.bf16.mxu0 0
      %910 = vmatpush1.bf16.msra.mxu0 0
      %911 = vmatprep.subr.bf16.mxu0 0
      %912 = vmatpush1.bf16.msra.mxu0 0
      %913 = vmatprep.subr.bf16.mxu0 0
      %914 = vmatpush1.bf16.msra.mxu0 0
      %915 = vmatprep.subr.bf16.mxu0 0
      %916 = vmatpush1.bf16.msra.mxu0 0
      %917 = vmatprep.subr.bf16.mxu0 0
      %918 = vmatpush1.bf16.msra.mxu0 0
      %919 = vmatprep.subr.bf16.mxu0 0
      %920 = vmatpush1.bf16.msra.mxu0 0
      %921 = vmatprep.subr.bf16.mxu0 0
      %922 = vmatpush1.bf16.msra.mxu0 0
      %923 = vmatprep.subr.bf16.mxu0 0
      %924 = vmatpush1.bf16.msra.mxu0 0
      %925 = vmatprep.subr.bf16.mxu0 0
      %926 = vmatpush1.bf16.msra.mxu0 0
      %927 = vmatprep.mubr.bf16.mxu0 0
      %928 = vmatmul.mubr.bf16.gmra.mrb[0].mxu0 %v647
      %v929 = vpop.f32.mrb[0].mxu0
      %v930 = vadd.f32 0.0, %v929
      %v931 = vpop.f32.mrb[0].mxu0
      %v932 = vpop.f32.mrb[0].mxu0
      %v933 = vadd.f32 0.0, %v932
      %v934 = vpop.f32.mrb[0].mxu0
      %935 = vdwg.mxu0
      %v936 = vadd.f32 %v876, %v930
      %v937 = vadd.f32 %v877, %v933
      %v938 = vld [vmem:[%s6] sm:$0x1]
      %v940 = vlaneseq
      %v941 = vshrl.u32 %v940, 7
      %v942 = vsub.s32 0, %v941
      %v943 = vrot.slane %v938, %v942
      %v945 = vadd.f32 %v936, %v943
      %v946 = vadd.f32 %v937, %v943
      %v947 = vxor.u32 %v945, 2147483648
      %v948 = vxor.u32 %v946, 2147483648
      %v949 = vmul.f32 %v947, 1.442695
      %v950 = vpow.pop %v949
      %v951 = vmul.f32 %v948, 1.442695
      %v952 = vpow.pop %v951
      %v953 = vadd.f32 %v950, 1.0
      %v954 = vadd.f32 %v952, 1.0
      %v955 = vrcp.pop %v953
      %v956 = vmul.f32 1.0, %v955
      %v957 = vrcp.pop %v954
      %v958 = vmul.f32 1.0, %v957
      %v959 = vmul.f32 %v956, %v701
      %v960 = vmul.f32 %v958, %v702
      %v961 = vsub.f32 1.0, %v956
      %v962 = vsub.f32 1.0, %v958
      %v963 = vmul.f32 %v961, %v311
      %v964 = vmul.f32 %v962, %v312
      %v965 = vadd.f32 %v959, %v963
      %v966 = vadd.f32 %v960, %v964
      %967 = vst.msk [vmem:[%s309] sm:$0xff] %vm322, %v965
      %968 = vst.msk [vmem:[%s309 + $0x8] sm:$0xff] %vm322, %v966
      %p969 = scmp.lt.s32.totalorder %s18, 1
      %s970 = scalar_select %p969, %s18, 1
      %s971 = smul.addr %s970, 2
      %s972 = smul.addr %s971, 8
      %s973 = scalar_lea.vmem %s7, %s972
      // Predicated region
      $region49: #{mnemonic_reader_forward.5} parent=47 // pred_check
        %p974 = pneg %p198
      $region50: #{mnemonic_reader_forward.5} parent=47 // pred_check_branch
        %976 = sbr.rel (%p974) target = $region52
      $region51: #{mnemonic_reader_forward.5} parent=47 // pred_region
        _
      $region52: #{mnemonic_reader_forward.5} parent=47 // pred_fallthru
        _
    $region48: #{mnemonic_reader_forward.5} parent=5 // pred_fallthru
      _
    %p977 = scmp.le.s32.totalorder 2, %s13
    // Predicated region
    $region53: #{mnemonic_reader_forward.5} parent=5 // pred_check
      %p978 = pneg %p977
    $region54: #{mnemonic_reader_forward.5} parent=5 // pred_check_branch
      %980 = sbr.rel (%p978) target = $region56
    $region55: #{mnemonic_reader_forward.5} parent=5 // pred_region
      %s981 = ssub.s32 %s13, 2
      // Predicated region
      $region57: #{mnemonic_reader_forward.5} parent=55 // pred_check
        %p982 = pneg %p204
      $region58: #{mnemonic_reader_forward.5} parent=55 // pred_check_branch
        %984 = sbr.rel (%p982) target = $region60
      $region59: #{mnemonic_reader_forward.5} parent=55 // pred_region
        %p985 = scmp.lt.s32.totalorder %s19, 1
        %s986 = scalar_select %p985, %s19, 1
        %s987 = smul.addr %s986, 2
        %s988 = smul.addr %s987, 8
        %s989 = scalar_lea.vmem %s7, %s988
      $region60: #{mnemonic_reader_forward.5} parent=55 // pred_fallthru
        _
    $region56: #{mnemonic_reader_forward.5} parent=5 // pred_fallthru
      _
  $region6: #{mnemonic_reader_forward.5} parent=0 // loop_footer
    %s17 = sadd.s32 1, %s13
  $region7: #{mnemonic_reader_forward.5} parent=0 // loop_footer_branch
    %12 = sbr.rel target = $region3
  $region8: #{mnemonic_reader_forward.5} parent=0 // loop_exit
    _

// kernel: mnemonic_reader_forward.6
$region0: #{mnemonic_reader_forward.6}
  #allocation0 [shape = 'u32[]', space=smem, size = 0x4, offset = 0x4, fixed_abs, tag = 'smem constant byte address 0x4 - core index']
  #allocation1 [shape = 'u32[144,128]{1,0:T(1,128)}', space=vmem, size = 0x12000, scoped, tag = 'internal scratch']
  %s0 = inlined_call_operand.vmem [shape: f32[2,16,32], index: 0, kind: input, shape index: {}]
  %s1 = inlined_call_operand.vmem [shape: f32[2,1,16], index: 1, kind: input, shape index: {}]
  %s2 = inlined_call_operand.vmem [shape: bf16[4,32,32], index: 2, kind: input, shape index: {}]
  %s3 = inlined_call_operand.vmem [shape: f32[1,32], index: 3, kind: input, shape index: {}]
  %s4 = inlined_call_operand.vmem [shape: bf16[4,32,32], index: 4, kind: input, shape index: {}]
  %s5 = inlined_call_operand.vmem [shape: f32[1,32], index: 5, kind: input, shape index: {}]
  %s6 = inlined_call_operand.vmem [shape: f32[2,16,32], index: 6, kind: output, shape index: {}]
  %s7 = sld [smem:[#allocation0]]
  $region57: #{mnemonic_reader_forward.6} parent=0
    _
  %s9 = ssub.s32 1, %s7
  %s10 = scalar_select 0, %s9, %s7
  loop: start=0, step=1, limit=4
  $region2: #{mnemonic_reader_forward.6} parent=0 // loop_pre_header
    _
  $region3: #{mnemonic_reader_forward.6} parent=0 // loop_header
    %s12 = sphi 0, %s16
    %p13 = scmp.ge.s32.totalorder %s12, 4
    %s22 = sphi 0, %s24
    %s25 = sphi 0, %s22
    %s26 = sphi 0, %s25
    %s42 = sphi 0, %s26
    %s48 = sphi 0, %s50
    %s51 = sphi 0, %s48
    %s52 = sphi 0, %s51
    %s68 = sphi 0, %s52
    %s72 = sphi 0, %s72
    %s74 = sphi 0, %s72
    %s75 = sphi 0, %s74
    %s89 = sphi 0, %s75
    %s93 = sphi 0, %s93
    %s95 = sphi 0, %s93
    %s96 = sphi 0, %s95
    %s110 = sphi 0, %s96
    %s114 = sphi 0, %s114
    %s116 = sphi 0, %s114
    %s117 = sphi 0, %s116
    %s131 = sphi 0, %s117
    %s135 = sphi 0, %s135
    %s137 = sphi 0, %s135
    %s138 = sphi 0, %s137
    %s152 = sphi 0, %s138
    %s158 = sphi 0, %s160
    %s161 = sphi 0, %s158
    %s162 = sphi 0, %s161
    %s178 = sphi 0, %s162
  $region4: #{mnemonic_reader_forward.6} parent=0 // loop_header_branch
    %15 = sbr.rel (%p13) target = $region8
  $region5: #{mnemonic_reader_forward.6} parent=0 // loop_body
    %s17 = ssub.s32 %s12, 1
    %s18 = ssub.s32 %s12, 2
    %s19 = sadd.s32 %s12, 1
    %s20 = ssub.s32 %s12, %s19
    %p21 = scmp.eq.s32.totalorder %s20, 0
    %s23 = sadd.s32 %s22, 1
    %s24 = scalar_select %p21, %s22, %s23
    %p27 = pneg %p21
    %p28 = scmp.eq.s32.totalorder %s12, 1
    %p29 = por %p27, %p28
    %p30 = scmp.ne.s32.totalorder %s22, %s25
    %p31 = scmp.eq.s32.totalorder %s12, 0
    %p32 = por %p30, %p31
    %p33 = scmp.ne.s32.totalorder %s22, %s25
    %p34 = scmp.eq.s32.totalorder %s17, 1
    %p35 = por %p33, %p34
    %p36 = scmp.ne.s32.totalorder %s25, %s26
    %p37 = scmp.eq.s32.totalorder %s17, 0
    %p38 = por %p36, %p37
    %p39 = scmp.ne.s32.totalorder %s25, %s26
    %p40 = scmp.eq.s32.totalorder %s18, 1
    %p41 = por %p39, %p40
    %p43 = scmp.ne.s32.totalorder %s26, %s42
    %p44 = scmp.eq.s32.totalorder %s18, 0
    %p45 = por %p43, %p44
    %s46 = ssub.s32 %s12, %s19
    %p47 = scmp.eq.s32.totalorder %s46, 0
    %s49 = sadd.s32 %s48, 1
    %s50 = scalar_select %p47, %s48, %s49
    %p53 = pneg %p47
    %p54 = scmp.eq.s32.totalorder %s12, 1
    %p55 = por %p53, %p54
    %p56 = scmp.ne.s32.totalorder %s48, %s51
    %p57 = scmp.eq.s32.totalorder %s12, 0
    %p58 = por %p56, %p57
    %p59 = scmp.ne.s32.totalorder %s48, %s51
    %p60 = scmp.eq.s32.totalorder %s17, 1
    %p61 = por %p59, %p60
    %p62 = scmp.ne.s32.totalorder %s51, %s52
    %p63 = scmp.eq.s32.totalorder %s17, 0
    %p64 = por %p62, %p63
    %p65 = scmp.ne.s32.totalorder %s51, %s52
    %p66 = scmp.eq.s32.totalorder %s18, 1
    %p67 = por %p65, %p66
    %p69 = scmp.ne.s32.totalorder %s52, %s68
    %p70 = scmp.eq.s32.totalorder %s18, 0
    %p71 = por %p69, %p70
    %s73 = sadd.s32 %s72, 1
    %p76 = scmp.eq.s32.totalorder %s12, 1
    %p77 = scmp.ne.s32.totalorder %s72, %s74
    %p78 = scmp.eq.s32.totalorder %s12, 0
    %p79 = por %p77, %p78
    %p80 = scmp.ne.s32.totalorder %s72, %s74
    %p81 = scmp.eq.s32.totalorder %s17, 1
    %p82 = por %p80, %p81
    %p83 = scmp.ne.s32.totalorder %s74, %s75
    %p84 = scmp.eq.s32.totalorder %s17, 0
    %p85 = por %p83, %p84
    %p86 = scmp.ne.s32.totalorder %s74, %s75
    %p87 = scmp.eq.s32.totalorder %s18, 1
    %p88 = por %p86, %p87
    %p90 = scmp.ne.s32.totalorder %s75, %s89
    %p91 = scmp.eq.s32.totalorder %s18, 0
    %p92 = por %p90, %p91
    %s94 = sadd.s32 %s93, 1
    %p97 = scmp.eq.s32.totalorder %s12, 1
    %p98 = scmp.ne.s32.totalorder %s93, %s95
    %p99 = scmp.eq.s32.totalorder %s12, 0
    %p100 = por %p98, %p99
    %p101 = scmp.ne.s32.totalorder %s93, %s95
    %p102 = scmp.eq.s32.totalorder %s17, 1
    %p103 = por %p101, %p102
    %p104 = scmp.ne.s32.totalorder %s95, %s96
    %p105 = scmp.eq.s32.totalorder %s17, 0
    %p106 = por %p104, %p105
    %p107 = scmp.ne.s32.totalorder %s95, %s96
    %p108 = scmp.eq.s32.totalorder %s18, 1
    %p109 = por %p107, %p108
    %p111 = scmp.ne.s32.totalorder %s96, %s110
    %p112 = scmp.eq.s32.totalorder %s18, 0
    %p113 = por %p111, %p112
    %s115 = sadd.s32 %s114, 1
    %p118 = scmp.eq.s32.totalorder %s12, 1
    %p119 = scmp.ne.s32.totalorder %s114, %s116
    %p120 = scmp.eq.s32.totalorder %s12, 0
    %p121 = por %p119, %p120
    %p122 = scmp.ne.s32.totalorder %s114, %s116
    %p123 = scmp.eq.s32.totalorder %s17, 1
    %p124 = por %p122, %p123
    %p125 = scmp.ne.s32.totalorder %s116, %s117
    %p126 = scmp.eq.s32.totalorder %s17, 0
    %p127 = por %p125, %p126
    %p128 = scmp.ne.s32.totalorder %s116, %s117
    %p129 = scmp.eq.s32.totalorder %s18, 1
    %p130 = por %p128, %p129
    %p132 = scmp.ne.s32.totalorder %s117, %s131
    %p133 = scmp.eq.s32.totalorder %s18, 0
    %p134 = por %p132, %p133
    %s136 = sadd.s32 %s135, 1
    %p139 = scmp.eq.s32.totalorder %s12, 1
    %p140 = scmp.ne.s32.totalorder %s135, %s137
    %p141 = scmp.eq.s32.totalorder %s12, 0
    %p142 = por %p140, %p141
    %p143 = scmp.ne.s32.totalorder %s135, %s137
    %p144 = scmp.eq.s32.totalorder %s17, 1
    %p145 = por %p143, %p144
    %p146 = scmp.ne.s32.totalorder %s137, %s138
    %p147 = scmp.eq.s32.totalorder %s17, 0
    %p148 = por %p146, %p147
    %p149 = scmp.ne.s32.totalorder %s137, %s138
    %p150 = scmp.eq.s32.totalorder %s18, 1
    %p151 = por %p149, %p150
    %p153 = scmp.ne.s32.totalorder %s138, %s152
    %p154 = scmp.eq.s32.totalorder %s18, 0
    %p155 = por %p153, %p154
    %s156 = ssub.s32 %s12, %s19
    %p157 = scmp.eq.s32.totalorder %s156, 0
    %s159 = sadd.s32 %s158, 1
    %s160 = scalar_select %p157, %s158, %s159
    %p163 = pneg %p157
    %p164 = scmp.eq.s32.totalorder %s12, 1
    %p165 = por %p163, %p164
    %p166 = scmp.ne.s32.totalorder %s158, %s161
    %p167 = scmp.eq.s32.totalorder %s12, 0
    %p168 = por %p166, %p167
    %p169 = scmp.ne.s32.totalorder %s158, %s161
    %p170 = scmp.eq.s32.totalorder %s17, 1
    %p171 = por %p169, %p170
    %p172 = scmp.ne.s32.totalorder %s161, %s162
    %p173 = scmp.eq.s32.totalorder %s17, 0
    %p174 = por %p172, %p173
    %p175 = scmp.ne.s32.totalorder %s161, %s162
    %p176 = scmp.eq.s32.totalorder %s18, 1
    %p177 = por %p175, %p176
    %p179 = scmp.ne.s32.totalorder %s162, %s178
    %p180 = scmp.eq.s32.totalorder %s18, 0
    %p181 = por %p179, %p180
    %p182 = scmp.le.s32.totalorder 1, %s12
    %p183 = scmp.lt.s32.totalorder %s12, 3
    %p184 = pnand %p182, %p183
    %p185 = pneg %p184
    // Predicated region
    $region9: #{mnemonic_reader_forward.6} parent=5 // pred_check
      _
    $region10: #{mnemonic_reader_forward.6} parent=5 // pred_check_branch
      %187 = sbr.rel (%p184) target = $region12
    $region11: #{mnemonic_reader_forward.6} parent=5 // pred_region
      %s188 = ssub.s32 %s12, 1
      // Predicated region
      $region13: #{mnemonic_reader_forward.6} parent=11 // pred_check
        %p189 = pneg %p85
      $region14: #{mnemonic_reader_forward.6} parent=11 // pred_check_branch
        %191 = sbr.rel (%p189) target = $region16
      $region15: #{mnemonic_reader_forward.6} parent=11 // pred_region
        _
      $region16: #{mnemonic_reader_forward.6} parent=11 // pred_fallthru
        _
      // Predicated region
      $region17: #{mnemonic_reader_forward.6} parent=11 // pred_check
        %p192 = pneg %p106
      $region18: #{mnemonic_reader_forward.6} parent=11 // pred_check_branch
        %194 = sbr.rel (%p192) target = $region20
      $region19: #{mnemonic_reader_forward.6} parent=11 // pred_region
        _
      $region20: #{mnemonic_reader_forward.6} parent=11 // pred_fallthru
        _
      // Predicated region
      $region21: #{mnemonic_reader_forward.6} parent=11 // pred_check
        %p195 = pneg %p127
      $region22: #{mnemonic_reader_forward.6} parent=11 // pred_check_branch
        %197 = sbr.rel (%p195) target = $region24
      $region23: #{mnemonic_reader_forward.6} parent=11 // pred_region
        _
      $region24: #{mnemonic_reader_forward.6} parent=11 // pred_fallthru
        _
      // Predicated region
      $region25: #{mnemonic_reader_forward.6} parent=11 // pred_check
        %p198 = pneg %p148
      $region26: #{mnemonic_reader_forward.6} parent=11 // pred_check_branch
        %200 = sbr.rel (%p198) target = $region28
      $region27: #{mnemonic_reader_forward.6} parent=11 // pred_region
        _
      $region28: #{mnemonic_reader_forward.6} parent=11 // pred_fallthru
        _
    $region12: #{mnemonic_reader_forward.6} parent=5 // pred_fallthru
      _
    %p201 = scmp.lt.s32.totalorder %s12, 2
    // Predicated region
    $region29: #{mnemonic_reader_forward.6} parent=5 // pred_check
      %p202 = pneg %p201
    $region30: #{mnemonic_reader_forward.6} parent=5 // pred_check_branch
      %204 = sbr.rel (%p202) target = $region32
    $region31: #{mnemonic_reader_forward.6} parent=5 // pred_region
      // Predicated region
      $region33: #{mnemonic_reader_forward.6} parent=31 // pred_check
        %p205 = pneg %p32
      $region34: #{mnemonic_reader_forward.6} parent=31 // pred_check_branch
        %207 = sbr.rel (%p205) target = $region36
      $region35: #{mnemonic_reader_forward.6} parent=31 // pred_region
        %p208 = scmp.lt.s32.totalorder %s12, 1
        %s209 = scalar_select %p208, %s12, 1
        %s210 = smul.addr %s209, 2
        %s211 = smul.addr %s210, 8
        %s212 = scalar_lea.vmem %s0, %s211
      $region36: #{mnemonic_reader_forward.6} parent=31 // pred_fallthru
        _
      // Predicated region
      $region37: #{mnemonic_reader_forward.6} parent=31 // pred_check
        %p213 = pneg %p58
      $region38: #{mnemonic_reader_forward.6} parent=31 // pred_check_branch
        %215 = sbr.rel (%p213) target = $region40
      $region39: #{mnemonic_reader_forward.6} parent=31 // pred_region
        %p216 = scmp.lt.s32.totalorder %s12, 1
        %s217 = scalar_select %p216, %s12, 1
        %s218 = scalar_lea.vmem %s1, %s217
      $region40: #{mnemonic_reader_forward.6} parent=31 // pred_fallthru
        _
    $region32: #{mnemonic_reader_forward.6} parent=5 // pred_fallthru
      _
    %p219 = scmp.le.s32.totalorder 1, %s12
    %p220 = scmp.lt.s32.totalorder %s12, 3
    %p221 = pnand %p219, %p220
    %p222 = pneg %p221
    // Predicated region
    $region41: #{mnemonic_reader_forward.6} parent=5 // pred_check
      _
    $region42: #{mnemonic_reader_forward.6} parent=5 // pred_check_branch
      %224 = sbr.rel (%p221) target = $region44
    $region43: #{mnemonic_reader_forward.6} parent=5 // pred_region
      %s225 = ssub.s32 %s12, 1
      %p226 = scmp.lt.s32.totalorder %s17, 1
      %s227 = scalar_select %p226, %s17, 1
      %s228 = smul.addr %s227, 2
      %s229 = smul.addr %s228, 8
      %s230 = scalar_lea.vmem %s0, %s229
      %p231 = pneg %p38
      %p232 = pneg %p35
      %p233 = scmp.lt.s32.totalorder %s17, 1
      %s234 = scalar_select %p233, %s17, 1
      %s235 = scalar_lea.vmem %s1, %s234
      %p236 = pneg %p64
      %p237 = pneg %p61
      %p238 = pneg %p85
      %p239 = pneg %p82
      %p240 = pneg %p106
      %p241 = pneg %p103
      %p242 = pneg %p127
      %p243 = pneg %p124
      %p244 = pneg %p148
      %p245 = pneg %p145
      %p246 = pneg %p174
      %p247 = pneg %p171
      %p248 = scmp.lt.s32.totalorder %s17, 1
      %s249 = scalar_select %p248, %s17, 1
      %s250 = smul.addr %s249, 2
      %s251 = smul.addr %s250, 8
      %s252 = scalar_lea.vmem %s6, %s251
      %p253 = scmp.lt.s32.totalorder %s17, 1
      %s254 = scalar_select %p253, %s17, 1
      %s255 = smul.addr %s254, 2
      %s256 = smul.addr %s255, 8
      %s257 = scalar_lea.vmem %s0, %s256
      %p258 = scmp.lt.s32.totalorder %s17, 1
      %s259 = scalar_select %p258, %s17, 1
      %s260 = scalar_lea.vmem %s1, %s259
      %p261 = scmp.lt.s32.totalorder %s17, 1
      %s262 = scalar_select %p261, %s17, 1
      %s263 = smul.addr %s262, 2
      %s264 = smul.addr %s263, 8
      %s265 = scalar_lea.vmem %s6, %s264
      %v267 = vld [vmem:[%s257] sm:$0xff]
      %v268 = vld [vmem:[%s257 + $0x8] sm:$0xff]
      %v269 = vpack.c.bf16 %v268, %v267
      %vm270 = vcmask 261120
      %v272 = vsel %vm270, %v269, 0
      %274 = vmatprep.subr.bf16.mxu0 0
      %275 = vmatpush1.bf16.xpose.msra.mxu0 %v272
      %276 = vmatprep.subr.bf16.mxu0 0
      %277 = vmatpush1.bf16.xpose.msra.mxu0 0
      %278 = vmatprep.subr.bf16.mxu0 0
      %279 = vmatpush1.bf16.xpose.msra.mxu0 0
      %280 = vmatprep.subr.bf16.mxu0 0
      %281 = vmatpush1.bf16.xpose.msra.mxu0 0
      %282 = vmatprep.subr.bf16.mxu0 0
      %283 = vmatpush1.bf16.xpose.msra.mxu0 0
      %284 = vmatprep.subr.bf16.mxu0 0
      %285 = vmatpush1.bf16.xpose.msra.mxu0 0
      %286 = vmatprep.subr.bf16.mxu0 0
      %287 = vmatpush1.bf16.xpose.msra.mxu0 0
      %288 = vmatprep.subr.bf16.mxu0 0
      %289 = vmatpush1.bf16.xpose.msra.mxu0 0
      %290 = vmatprep.subr.bf16.mxu0 0
      %291 = vmatpush1.bf16.xpose.msra.mxu0 0
      %292 = vmatprep.subr.bf16.mxu0 0
      %293 = vmatpush1.bf16.xpose.msra.mxu0 0
      %294 = vmatprep.subr.bf16.mxu0 0
      %295 = vmatpush1.bf16.xpose.msra.mxu0 0
      %296 = vmatprep.subr.bf16.mxu0 0
      %297 = vmatpush1.bf16.xpose.msra.mxu0 0
      %298 = vmatprep.subr.bf16.mxu0 0
      %299 = vmatpush1.bf16.xpose.msra.mxu0 0
      %300 = vmatprep.subr.bf16.mxu0 0
      %301 = vmatpush1.bf16.xpose.msra.mxu0 0
      %302 = vmatprep.subr.bf16.mxu0 0
      %303 = vmatpush1.bf16.xpose.msra.mxu0 0
      %304 = vmatprep.subr.bf16.mxu0 0
      %305 = vmatpush1.bf16.xpose.msra.mxu0 0
      %306 = vmatprep.mubr.bf16.mxu0 0
      %307 = vmatmul.mubr.bf16.gmra.mrb[0].mxu0 %v272
      %v308 = vpop.f32.mrb[0].mxu0
      %v309 = vadd.f32 0.0, %v308
      %v310 = vpop.f32.mrb[0].mxu0
      %v311 = vpop.f32.mrb[0].mxu0
      %v312 = vadd.f32 0.0, %v311
      %v313 = vpop.f32.mrb[0].mxu0
      %314 = vdwg.mxu0
      %v315 = vlaneseq
      %v316 = vshrl.u32 %v315, 7
      %v317 = vadd.s32 %v316, 8
      %v318 = vlaneseq
      %v319 = vand.u32 %v318, 127
      %v320 = vld [vmem:[%s260] sm:$0x1]
      %v322 = vlaneseq
      %v323 = vshrl.u32 %v322, 7
      %v324 = vsub.s32 0, %v323
      %v325 = vrot.slane %v320, %v324
      %vm327 = vcmp.lt.f32.partialorder %v325, -1.0
      %vm328 = vcmp.eq.s32.totalorder %v316, %v319
      %vm329 = vcmp.eq.s32.totalorder %v317, %v319
      %vm330 = vmor %vm328, %vm327
      %vm331 = vmor %vm329, %vm327
      %v332 = vsel %vm330, -1e+09, %v309
      %v333 = vsel %vm331, -1e+09, %v312
      %vm334 = vcmask 130048
      %v335 = vsel %vm334, %v332, -inf
      %336 = vmax.xlane.f32.xlu0 %v335
      %v337 = vpop.xlane.xlu0 %336
      %v338 = vsel %vm334, %v333, -inf
      %339 = vmax.xlane.f32.xlu0 %v338
      %v340 = vpop.xlane.xlu0 %339
      %v341 = vsub.f32 %v332, %v337
      %v342 = vsub.f32 %v333, %v340
      %v343 = vmul.f32 %v341, 1.442695
      %v344 = vpow.pop %v343
      %v345 = vmul.f32 %v342, 1.442695
      %v346 = vpow.pop %v345
      %v347 = vsel %vm334, %v344, 0.0
      %348 = vadd.xlane.f32.xlu0 %v347
      %v349 = vpop.xlane.xlu0 %348
      %v350 = vsel %vm334, %v346, 0.0
      %351 = vadd.xlane.f32.xlu0 %v350
      %v352 = vpop.xlane.xlu0 %351
      %v353 = vrcp.pop %v349
      %v354 = vrcp.pop %v352
      %v355 = vmul.f32 %v344, %v353
      %v356 = vmul.f32 %v346, %v354
      %v357 = vpack.c.bf16 %v356, %v355
      %v359 = vsel %vm334, %v357, 0
      %361 = vmatprep.subr.bf16.mxu0 0
      %362 = vmatpush1.bf16.msra.mxu0 %v269
      %363 = vmatprep.subr.bf16.mxu0 0
      %364 = vmatpush1.bf16.msra.mxu0 0
      %365 = vmatprep.subr.bf16.mxu0 0
      %366 = vmatpush1.bf16.msra.mxu0 0
      %367 = vmatprep.subr.bf16.mxu0 0
      %368 = vmatpush1.bf16.msra.mxu0 0
      %369 = vmatprep.subr.bf16.mxu0 0
      %370 = vmatpush1.bf16.msra.mxu0 0
      %371 = vmatprep.subr.bf16.mxu0 0
      %372 = vmatpush1.bf16.msra.mxu0 0
      %373 = vmatprep.subr.bf16.mxu0 0
      %374 = vmatpush1.bf16.msra.mxu0 0
      %375 = vmatprep.subr.bf16.mxu0 0
      %376 = vmatpush1.bf16.msra.mxu0 0
      %377 = vmatprep.subr.bf16.mxu0 0
      %378 = vmatpush1.bf16.msra.mxu0 0
      %379 = vmatprep.subr.bf16.mxu0 0
      %380 = vmatpush1.bf16.msra.mxu0 0
      %381 = vmatprep.subr.bf16.mxu0 0
      %382 = vmatpush1.bf16.msra.mxu0 0
      %383 = vmatprep.subr.bf16.mxu0 0
      %384 = vmatpush1.bf16.msra.mxu0 0
      %385 = vmatprep.subr.bf16.mxu0 0
      %386 = vmatpush1.bf16.msra.mxu0 0
      %387 = vmatprep.subr.bf16.mxu0 0
      %388 = vmatpush1.bf16.msra.mxu0 0
      %389 = vmatprep.subr.bf16.mxu0 0
      %390 = vmatpush1.bf16.msra.mxu0 0
      %391 = vmatprep.subr.bf16.mxu0 0
      %392 = vmatpush1.bf16.msra.mxu0 0
      %393 = vmatprep.mubr.bf16.mxu0 0
      %394 = vmatmul.mubr.bf16.gmra.mrb[0].mxu0 %v359
      %v395 = vpop.f32.mrb[0].mxu0
      %v396 = vadd.f32 0.0, %v395
      %v397 = vpop.f32.mrb[0].mxu0
      %v398 = vpop.f32.mrb[0].mxu0
      %v399 = vadd.f32 0.0, %v398
      %v400 = vpop.f32.mrb[0].mxu0
      %401 = vdwg.mxu0
      %v402 = vpack.c.bf16 %v399, %v396
      %v403 = vmul.f32 %v267, %v396
      %v404 = vmul.f32 %v268, %v399
      %v405 = vpack.c.bf16 %v404, %v403
      %v406 = vsub.f32 %v267, %v396
      %v407 = vsub.f32 %v268, %v399
      %v408 = vpack.c.bf16 %v407, %v406
      %v409 = vld [vmem:[%s2] sm:$0xf]
      %v410 = vld [vmem:[%s2 + $0x4] sm:$0xf]
      %v411 = vld [vmem:[%s2 + $0x8] sm:$0xf]
      %v412 = vld [vmem:[%s2 + $0xc] sm:$0xf]
      %s413 = scalar_lea.vmem %s2, 16
      %v414 = vld [vmem:[%s413] sm:$0xf]
      %v415 = vld [vmem:[%s413 + $0x4] sm:$0xf]
      %v416 = vld [vmem:[%s413 + $0x8] sm:$0xf]
      %v417 = vld [vmem:[%s413 + $0xc] sm:$0xf]
      %v422 = vunpack.c.l.b16 %v414
      %v423 = vunpack.c.l.b16 %v415
      %v424 = vunpack.c.l.b16 %v416
      %v425 = vunpack.c.l.b16 %v417
      %v426 = vpack.c.b16 %v423, %v422
      %v427 = vpack.c.b16 %v425, %v424
      %v431 = vsel %vm270, %v402, 0
      %433 = vmatprep.subr.bf16.mxu0 0
      %434 = vmatpush1.bf16.msra.mxu0 %v426
      %435 = vmatprep.subr.bf16.mxu0 0
      %436 = vmatpush1.bf16.msra.mxu0 %v427
      %437 = vmatprep.subr.bf16.mxu0 0
      %438 = vmatpush1.bf16.msra.mxu0 0
      %439 = vmatprep.subr.bf16.mxu0 0
      %440 = vmatpush1.bf16.msra.mxu0 0
      %441 = vmatprep.subr.bf16.mxu0 0
      %442 = vmatpush1.bf16.msra.mxu0 0
      %443 = vmatprep.subr.bf16.mxu0 0
      %444 = vmatpush1.bf16.msra.mxu0 0
      %445 = vmatprep.subr.bf16.mxu0 0
      %446 = vmatpush1.bf16.msra.mxu0 0
      %447 = vmatprep.subr.bf16.mxu0 0
      %448 = vmatpush1.bf16.msra.mxu0 0
      %449 = vmatprep.subr.bf16.mxu0 0
      %450 = vmatpush1.bf16.msra.mxu0 0
      %451 = vmatprep.subr.bf16.mxu0 0
      %452 = vmatpush1.bf16.msra.mxu0 0
      %453 = vmatprep.subr.bf16.mxu0 0
      %454 = vmatpush1.bf16.msra.mxu0 0
      %455 = vmatprep.subr.bf16.mxu0 0
      %456 = vmatpush1.bf16.msra.mxu0 0
      %457 = vmatprep.subr.bf16.mxu0 0
      %458 = vmatpush1.bf16.msra.mxu0 0
      %459 = vmatprep.subr.bf16.mxu0 0
      %460 = vmatpush1.bf16.msra.mxu0 0
      %461 = vmatprep.subr.bf16.mxu0 0
      %462 = vmatpush1.bf16.msra.mxu0 0
      %463 = vmatprep.subr.bf16.mxu0 0
      %464 = vmatpush1.bf16.msra.mxu0 0
      %465 = vmatprep.mubr.bf16.mxu0 0
      %466 = vmatmul.mubr.bf16.gmra.mrb[0].mxu0 %v431
      %v467 = vpop.f32.mrb[0].mxu0
      %v468 = vadd.f32 0.0, %v467
      %v469 = vpop.f32.mrb[0].mxu0
      %v470 = vpop.f32.mrb[0].mxu0
      %v471 = vadd.f32 0.0, %v470
      %v472 = vpop.f32.mrb[0].mxu0
      %473 = vdwg.mxu0
      %v478 = vunpack.c.l.b16 %v409
      %v479 = vunpack.c.l.b16 %v410
      %v480 = vunpack.c.l.b16 %v411
      %v481 = vunpack.c.l.b16 %v412
      %v482 = vpack.c.b16 %v479, %v478
      %v483 = vpack.c.b16 %v481, %v480
      %486 = vmatprep.subr.bf16.mxu0 0
      %487 = vmatpush1.bf16.msra.mxu0 %v482
      %488 = vmatprep.subr.bf16.mxu0 0
      %489 = vmatpush1.bf16.msra.mxu0 %v483
      %490 = vmatprep.subr.bf16.mxu0 0
      %491 = vmatpush1.bf16.msra.mxu0 0
      %492 = vmatprep.subr.bf16.mxu0 0
      %493 = vmatpush1.bf16.msra.mxu0 0
      %494 = vmatprep.subr.bf16.mxu0 0
      %495 = vmatpush1.bf16.msra.mxu0 0
      %496 = vmatprep.subr.bf16.mxu0 0
      %497 = vmatpush1.bf16.msra.mxu0 0
      %498 = vmatprep.subr.bf16.mxu0 0
      %499 = vmatpush1.bf16.msra.mxu0 0
      %500 = vmatprep.subr.bf16.mxu0 0
      %501 = vmatpush1.bf16.msra.mxu0 0
      %502 = vmatprep.subr.bf16.mxu0 0
      %503 = vmatpush1.bf16.msra.mxu0 0
      %504 = vmatprep.subr.bf16.mxu0 0
      %505 = vmatpush1.bf16.msra.mxu0 0
      %506 = vmatprep.subr.bf16.mxu0 0
      %507 = vmatpush1.bf16.msra.mxu0 0
      %508 = vmatprep.subr.bf16.mxu0 0
      %509 = vmatpush1.bf16.msra.mxu0 0
      %510 = vmatprep.subr.bf16.mxu0 0
      %511 = vmatpush1.bf16.msra.mxu0 0
      %512 = vmatprep.subr.bf16.mxu0 0
      %513 = vmatpush1.bf16.msra.mxu0 0
      %514 = vmatprep.subr.bf16.mxu0 0
      %515 = vmatpush1.bf16.msra.mxu0 0
      %516 = vmatprep.subr.bf16.mxu0 0
      %517 = vmatpush1.bf16.msra.mxu0 0
      %518 = vmatprep.mubr.bf16.mxu0 0
      %519 = vmatmul.mubr.bf16.gmra.mrb[0].mxu0 %v272
      %v520 = vpop.f32.mrb[0].mxu0
      %v521 = vadd.f32 %v468, %v520
      %v522 = vpop.f32.mrb[0].mxu0
      %v523 = vpop.f32.mrb[0].mxu0
      %v524 = vadd.f32 %v471, %v523
      %v525 = vpop.f32.mrb[0].mxu0
      %526 = vdwg.mxu0
      %s527 = scalar_lea.vmem %s2, 32
      %v528 = vld [vmem:[%s527] sm:$0xf]
      %v529 = vld [vmem:[%s527 + $0x4] sm:$0xf]
      %v530 = vld [vmem:[%s527 + $0x8] sm:$0xf]
      %v531 = vld [vmem:[%s527 + $0xc] sm:$0xf]
      %v536 = vunpack.c.l.b16 %v528
      %v537 = vunpack.c.l.b16 %v529
      %v538 = vunpack.c.l.b16 %v530
      %v539 = vunpack.c.l.b16 %v531
      %v540 = vpack.c.b16 %v537, %v536
      %v541 = vpack.c.b16 %v539, %v538
      %v545 = vsel %vm270, %v405, 0
      %547 = vmatprep.subr.bf16.mxu0 0
      %548 = vmatpush1.bf16.msra.mxu0 %v540
      %549 = vmatprep.subr.bf16.mxu0 0
      %550 = vmatpush1.bf16.msra.mxu0 %v541
      %551 = vmatprep.subr.bf16.mxu0 0
      %552 = vmatpush1.bf16.msra.mxu0 0
      %553 = vmatprep.subr.bf16.mxu0 0
      %554 = vmatpush1.bf16.msra.mxu0 0
      %555 = vmatprep.subr.bf16.mxu0 0
      %556 = vmatpush1.bf16.msra.mxu0 0
      %557 = vmatprep.subr.bf16.mxu0 0
      %558 = vmatpush1.bf16.msra.mxu0 0
      %559 = vmatprep.subr.bf16.mxu0 0
      %560 = vmatpush1.bf16.msra.mxu0 0
      %561 = vmatprep.subr.bf16.mxu0 0
      %562 = vmatpush1.bf16.msra.mxu0 0
      %563 = vmatprep.subr.bf16.mxu0 0
      %564 = vmatpush1.bf16.msra.mxu0 0
      %565 = vmatprep.subr.bf16.mxu0 0
      %566 = vmatpush1.bf16.msra.mxu0 0
      %567 = vmatprep.subr.bf16.mxu0 0
      %568 = vmatpush1.bf16.msra.mxu0 0
      %569 = vmatprep.subr.bf16.mxu0 0
      %570 = vmatpush1.bf16.msra.mxu0 0
      %571 = vmatprep.subr.bf16.mxu0 0
      %572 = vmatpush1.bf16.msra.mxu0 0
      %573 = vmatprep.subr.bf16.mxu0 0
      %574 = vmatpush1.bf16.msra.mxu0 0
      %575 = vmatprep.subr.bf16.mxu0 0
      %576 = vmatpush1.bf16.msra.mxu0 0
      %577 = vmatprep.subr.bf16.mxu0 0
      %578 = vmatpush1.bf16.msra.mxu0 0
      %579 = vmatprep.mubr.bf16.mxu0 0
      %580 = vmatmul.mubr.bf16.gmra.mrb[0].mxu0 %v545
      %v581 = vpop.f32.mrb[0].mxu0
      %v582 = vadd.f32 0.0, %v581
      %v583 = vpop.f32.mrb[0].mxu0
      %v584 = vpop.f32.mrb[0].mxu0
      %v585 = vadd.f32 0.0, %v584
      %v586 = vpop.f32.mrb[0].mxu0
      %587 = vdwg.mxu0
      %v588 = vadd.f32 %v521, %v582
      %v589 = vadd.f32 %v524, %v585
      %s590 = scalar_lea.vmem %s2, 48
      %v591 = vld [vmem:[%s590] sm:$0xf]
      %v592 = vld [vmem:[%s590 + $0x4] sm:$0xf]
      %v593 = vld [vmem:[%s590 + $0x8] sm:$0xf]
      %v594 = vld [vmem:[%s590 + $0xc] sm:$0xf]
      %v599 = vunpack.c.l.b16 %v591
      %v600 = vunpack.c.l.b16 %v592
      %v601 = vunpack.c.l.b16 %v593
      %v602 = vunpack.c.l.b16 %v594
      %v603 = vpack.c.b16 %v600, %v599
      %v604 = vpack.c.b16 %v602, %v601
      %v608 = vsel %vm270, %v408, 0
      %610 = vmatprep.subr.bf16.mxu0 0
      %611 = vmatpush1.bf16.msra.mxu0 %v603
      %612 = vmatprep.subr.bf16.mxu0 0
      %613 = vmatpush1.bf16.msra.mxu0 %v604
      %614 = vmatprep.subr.bf16.mxu0 0
      %615 = vmatpush1.bf16.msra.mxu0 0
      %616 = vmatprep.subr.bf16.mxu0 0
      %617 = vmatpush1.bf16.msra.mxu0 0
      %618 = vmatprep.subr.bf16.mxu0 0
      %619 = vmatpush1.bf16.msra.mxu0 0
      %620 = vmatprep.subr.bf16.mxu0 0
      %621 = vmatpush1.bf16.msra.mxu0 0
      %622 = vmatprep.subr.bf16.mxu0 0
      %623 = vmatpush1.bf16.msra.mxu0 0
      %624 = vmatprep.subr.bf16.mxu0 0
      %625 = vmatpush1.bf16.msra.mxu0 0
      %626 = vmatprep.subr.bf16.mxu0 0
      %627 = vmatpush1.bf16.msra.mxu0 0
      %628 = vmatprep.subr.bf16.mxu0 0
      %629 = vmatpush1.bf16.msra.mxu0 0
      %630 = vmatprep.subr.bf16.mxu0 0
      %631 = vmatpush1.bf16.msra.mxu0 0
      %632 = vmatprep.subr.bf16.mxu0 0
      %633 = vmatpush1.bf16.msra.mxu0 0
      %634 = vmatprep.subr.bf16.mxu0 0
      %635 = vmatpush1.bf16.msra.mxu0 0
      %636 = vmatprep.subr.bf16.mxu0 0
      %637 = vmatpush1.bf16.msra.mxu0 0
      %638 = vmatprep.subr.bf16.mxu0 0
      %639 = vmatpush1.bf16.msra.mxu0 0
      %640 = vmatprep.subr.bf16.mxu0 0
      %641 = vmatpush1.bf16.msra.mxu0 0
      %642 = vmatprep.mubr.bf16.mxu0 0
      %643 = vmatmul.mubr.bf16.gmra.mrb[0].mxu0 %v608
      %v644 = vpop.f32.mrb[0].mxu0
      %v645 = vadd.f32 0.0, %v644
      %v646 = vpop.f32.mrb[0].mxu0
      %v647 = vpop.f32.mrb[0].mxu0
      %v648 = vadd.f32 0.0, %v647
      %v649 = vpop.f32.mrb[0].mxu0
      %650 = vdwg.mxu0
      %v651 = vadd.f32 %v588, %v645
      %v652 = vadd.f32 %v589, %v648
      %v653 = vld [vmem:[%s3] sm:$0x1]
      %v655 = vlaneseq
      %v656 = vshrl.u32 %v655, 7
      %v657 = vsub.s32 0, %v656
      %v658 = vrot.slane %v653, %v657
      %v660 = vadd.f32 %v651, %v658
      %v661 = vadd.f32 %v652, %v658
      %v662 = vtanh.pop %v660
      %v663 = vtanh.pop %v661
      %v664 = vld [vmem:[%s4] sm:$0xf]
      %v665 = vld [vmem:[%s4 + $0x4] sm:$0xf]
      %v666 = vld [vmem:[%s4 + $0x8] sm:$0xf]
      %v667 = vld [vmem:[%s4 + $0xc] sm:$0xf]
      %s668 = scalar_lea.vmem %s4, 16
      %v669 = vld [vmem:[%s668] sm:$0xf]
      %v670 = vld [vmem:[%s668 + $0x4] sm:$0xf]
      %v671 = vld [vmem:[%s668 + $0x8] sm:$0xf]
      %v672 = vld [vmem:[%s668 + $0xc] sm:$0xf]
      %v677 = vunpack.c.l.b16 %v669
      %v678 = vunpack.c.l.b16 %v670
      %v679 = vunpack.c.l.b16 %v671
      %v680 = vunpack.c.l.b16 %v672
      %v681 = vpack.c.b16 %v678, %v677
      %v682 = vpack.c.b16 %v680, %v679
      %685 = vmatprep.subr.bf16.mxu0 0
      %686 = vmatpush1.bf16.msra.mxu0 %v681
      %687 = vmatprep.subr.bf16.mxu0 0
      %688 = vmatpush1.bf16.msra.mxu0 %v682
      %689 = vmatprep.subr.bf16.mxu0 0
      %690 = vmatpush1.bf16.msra.mxu0 0
      %691 = vmatprep.subr.bf16.mxu0 0
      %692 = vmatpush1.bf16.msra.mxu0 0
      %693 = vmatprep.subr.bf16.mxu0 0
      %694 = vmatpush1.bf16.msra.mxu0 0
      %695 = vmatprep.subr.bf16.mxu0 0
      %696 = vmatpush1.bf16.msra.mxu0 0
      %697 = vmatprep.subr.bf16.mxu0 0
      %698 = vmatpush1.bf16.msra.mxu0 0
      %699 = vmatprep.subr.bf16.mxu0 0
      %700 = vmatpush1.bf16.msra.mxu0 0
      %701 = vmatprep.subr.bf16.mxu0 0
      %702 = vmatpush1.bf16.msra.mxu0 0
      %703 = vmatprep.subr.bf16.mxu0 0
      %704 = vmatpush1.bf16.msra.mxu0 0
      %705 = vmatprep.subr.bf16.mxu0 0
      %706 = vmatpush1.bf16.msra.mxu0 0
      %707 = vmatprep.subr.bf16.mxu0 0
      %708 = vmatpush1.bf16.msra.mxu0 0
      %709 = vmatprep.subr.bf16.mxu0 0
      %710 = vmatpush1.bf16.msra.mxu0 0
      %711 = vmatprep.subr.bf16.mxu0 0
      %712 = vmatpush1.bf16.msra.mxu0 0
      %713 = vmatprep.subr.bf16.mxu0 0
      %714 = vmatpush1.bf16.msra.mxu0 0
      %715 = vmatprep.subr.bf16.mxu0 0
      %716 = vmatpush1.bf16.msra.mxu0 0
      %717 = vmatprep.mubr.bf16.mxu0 0
      %718 = vmatmul.mubr.bf16.gmra.mrb[0].mxu0 %v431
      %v719 = vpop.f32.mrb[0].mxu0
      %v720 = vadd.f32 0.0, %v719
      %v721 = vpop.f32.mrb[0].mxu0
      %v722 = vpop.f32.mrb[0].mxu0
      %v723 = vadd.f32 0.0, %v722
      %v724 = vpop.f32.mrb[0].mxu0
      %725 = vdwg.mxu0
      %v730 = vunpack.c.l.b16 %v664
      %v731 = vunpack.c.l.b16 %v665
      %v732 = vunpack.c.l.b16 %v666
      %v733 = vunpack.c.l.b16 %v667
      %v734 = vpack.c.b16 %v731, %v730
      %v735 = vpack.c.b16 %v733, %v732
      %738 = vmatprep.subr.bf16.mxu0 0
      %739 = vmatpush1.bf16.msra.mxu0 %v734
      %740 = vmatprep.subr.bf16.mxu0 0
      %741 = vmatpush1.bf16.msra.mxu0 %v735
      %742 = vmatprep.subr.bf16.mxu0 0
      %743 = vmatpush1.bf16.msra.mxu0 0
      %744 = vmatprep.subr.bf16.mxu0 0
      %745 = vmatpush1.bf16.msra.mxu0 0
      %746 = vmatprep.subr.bf16.mxu0 0
      %747 = vmatpush1.bf16.msra.mxu0 0
      %748 = vmatprep.subr.bf16.mxu0 0
      %749 = vmatpush1.bf16.msra.mxu0 0
      %750 = vmatprep.subr.bf16.mxu0 0
      %751 = vmatpush1.bf16.msra.mxu0 0
      %752 = vmatprep.subr.bf16.mxu0 0
      %753 = vmatpush1.bf16.msra.mxu0 0
      %754 = vmatprep.subr.bf16.mxu0 0
      %755 = vmatpush1.bf16.msra.mxu0 0
      %756 = vmatprep.subr.bf16.mxu0 0
      %757 = vmatpush1.bf16.msra.mxu0 0
      %758 = vmatprep.subr.bf16.mxu0 0
      %759 = vmatpush1.bf16.msra.mxu0 0
      %760 = vmatprep.subr.bf16.mxu0 0
      %761 = vmatpush1.bf16.msra.mxu0 0
      %762 = vmatprep.subr.bf16.mxu0 0
      %763 = vmatpush1.bf16.msra.mxu0 0
      %764 = vmatprep.subr.bf16.mxu0 0
      %765 = vmatpush1.bf16.msra.mxu0 0
      %766 = vmatprep.subr.bf16.mxu0 0
      %767 = vmatpush1.bf16.msra.mxu0 0
      %768 = vmatprep.subr.bf16.mxu0 0
      %769 = vmatpush1.bf16.msra.mxu0 0
      %770 = vmatprep.mubr.bf16.mxu0 0
      %771 = vmatmul.mubr.bf16.gmra.mrb[0].mxu0 %v272
      %v772 = vpop.f32.mrb[0].mxu0
      %v773 = vadd.f32 %v720, %v772
      %v774 = vpop.f32.mrb[0].mxu0
      %v775 = vpop.f32.mrb[0].mxu0
      %v776 = vadd.f32 %v723, %v775
      %v777 = vpop.f32.mrb[0].mxu0
      %778 = vdwg.mxu0
      %s779 = scalar_lea.vmem %s4, 32
      %v780 = vld [vmem:[%s779] sm:$0xf]
      %v781 = vld [vmem:[%s779 + $0x4] sm:$0xf]
      %v782 = vld [vmem:[%s779 + $0x8] sm:$0xf]
      %v783 = vld [vmem:[%s779 + $0xc] sm:$0xf]
      %v788 = vunpack.c.l.b16 %v780
      %v789 = vunpack.c.l.b16 %v781
      %v790 = vunpack.c.l.b16 %v782
      %v791 = vunpack.c.l.b16 %v783
      %v792 = vpack.c.b16 %v789, %v788
      %v793 = vpack.c.b16 %v791, %v790
      %796 = vmatprep.subr.bf16.mxu0 0
      %797 = vmatpush1.bf16.msra.mxu0 %v792
      %798 = vmatprep.subr.bf16.mxu0 0
      %799 = vmatpush1.bf16.msra.mxu0 %v793
      %800 = vmatprep.subr.bf16.mxu0 0
      %801 = vmatpush1.bf16.msra.mxu0 0
      %802 = vmatprep.subr.bf16.mxu0 0
      %803 = vmatpush1.bf16.msra.mxu0 0
      %804 = vmatprep.subr.bf16.mxu0 0
      %805 = vmatpush1.bf16.msra.mxu0 0
      %806 = vmatprep.subr.bf16.mxu0 0
      %807 = vmatpush1.bf16.msra.mxu0 0
      %808 = vmatprep.subr.bf16.mxu0 0
      %809 = vmatpush1.bf16.msra.mxu0 0
      %810 = vmatprep.subr.bf16.mxu0 0
      %811 = vmatpush1.bf16.msra.mxu0 0
      %812 = vmatprep.subr.bf16.mxu0 0
      %813 = vmatpush1.bf16.msra.mxu0 0
      %814 = vmatprep.subr.bf16.mxu0 0
      %815 = vmatpush1.bf16.msra.mxu0 0
      %816 = vmatprep.subr.bf16.mxu0 0
      %817 = vmatpush1.bf16.msra.mxu0 0
      %818 = vmatprep.subr.bf16.mxu0 0
      %819 = vmatpush1.bf16.msra.mxu0 0
      %820 = vmatprep.subr.bf16.mxu0 0
      %821 = vmatpush1.bf16.msra.mxu0 0
      %822 = vmatprep.subr.bf16.mxu0 0
      %823 = vmatpush1.bf16.msra.mxu0 0
      %824 = vmatprep.subr.bf16.mxu0 0
      %825 = vmatpush1.bf16.msra.mxu0 0
      %826 = vmatprep.subr.bf16.mxu0 0
      %827 = vmatpush1.bf16.msra.mxu0 0
      %828 = vmatprep.mubr.bf16.mxu0 0
      %829 = vmatmul.mubr.bf16.gmra.mrb[0].mxu0 %v545
      %v830 = vpop.f32.mrb[0].mxu0
      %v831 = vadd.f32 0.0, %v830
      %v832 = vpop.f32.mrb[0].mxu0
      %v833 = vpop.f32.mrb[0].mxu0
      %v834 = vadd.f32 0.0, %v833
      %v835 = vpop.f32.mrb[0].mxu0
      %836 = vdwg.mxu0
      %v837 = vadd.f32 %v773, %v831
      %v838 = vadd.f32 %v776, %v834
      %s839 = scalar_lea.vmem %s4, 48
      %v840 = vld [vmem:[%s839] sm:$0xf]
      %v841 = vld [vmem:[%s839 + $0x4] sm:$0xf]
      %v842 = vld [vmem:[%s839 + $0x8] sm:$0xf]
      %v843 = vld [vmem:[%s839 + $0xc] sm:$0xf]
      %v848 = vunpack.c.l.b16 %v840
      %v849 = vunpack.c.l.b16 %v841
      %v850 = vunpack.c.l.b16 %v842
      %v851 = vunpack.c.l.b16 %v843
      %v852 = vpack.c.b16 %v849, %v848
      %v853 = vpack.c.b16 %v851, %v850
      %856 = vmatprep.subr.bf16.mxu0 0
      %857 = vmatpush1.bf16.msra.mxu0 %v852
      %858 = vmatprep.subr.bf16.mxu0 0
      %859 = vmatpush1.bf16.msra.mxu0 %v853
      %860 = vmatprep.subr.bf16.mxu0 0
      %861 = vmatpush1.bf16.msra.mxu0 0
      %862 = vmatprep.subr.bf16.mxu0 0
      %863 = vmatpush1.bf16.msra.mxu0 0
      %864 = vmatprep.subr.bf16.mxu0 0
      %865 = vmatpush1.bf16.msra.mxu0 0
      %866 = vmatprep.subr.bf16.mxu0 0
      %867 = vmatpush1.bf16.msra.mxu0 0
      %868 = vmatprep.subr.bf16.mxu0 0
      %869 = vmatpush1.bf16.msra.mxu0 0
      %870 = vmatprep.subr.bf16.mxu0 0
      %871 = vmatpush1.bf16.msra.mxu0 0
      %872 = vmatprep.subr.bf16.mxu0 0
      %873 = vmatpush1.bf16.msra.mxu0 0
      %874 = vmatprep.subr.bf16.mxu0 0
      %875 = vmatpush1.bf16.msra.mxu0 0
      %876 = vmatprep.subr.bf16.mxu0 0
      %877 = vmatpush1.bf16.msra.mxu0 0
      %878 = vmatprep.subr.bf16.mxu0 0
      %879 = vmatpush1.bf16.msra.mxu0 0
      %880 = vmatprep.subr.bf16.mxu0 0
      %881 = vmatpush1.bf16.msra.mxu0 0
      %882 = vmatprep.subr.bf16.mxu0 0
      %883 = vmatpush1.bf16.msra.mxu0 0
      %884 = vmatprep.subr.bf16.mxu0 0
      %885 = vmatpush1.bf16.msra.mxu0 0
      %886 = vmatprep.subr.bf16.mxu0 0
      %887 = vmatpush1.bf16.msra.mxu0 0
      %888 = vmatprep.mubr.bf16.mxu0 0
      %889 = vmatmul.mubr.bf16.gmra.mrb[0].mxu0 %v608
      %v890 = vpop.f32.mrb[0].mxu0
      %v891 = vadd.f32 0.0, %v890
      %v892 = vpop.f32.mrb[0].mxu0
      %v893 = vpop.f32.mrb[0].mxu0
      %v894 = vadd.f32 0.0, %v893
      %v895 = vpop.f32.mrb[0].mxu0
      %896 = vdwg.mxu0
      %v897 = vadd.f32 %v837, %v891
      %v898 = vadd.f32 %v838, %v894
      %v899 = vld [vmem:[%s5] sm:$0x1]
      %v901 = vlaneseq
      %v902 = vshrl.u32 %v901, 7
      %v903 = vsub.s32 0, %v902
      %v904 = vrot.slane %v899, %v903
      %v906 = vadd.f32 %v897, %v904
      %v907 = vadd.f32 %v898, %v904
      %v908 = vxor.u32 %v906, 2147483648
      %v909 = vxor.u32 %v907, 2147483648
      %v910 = vmul.f32 %v908, 1.442695
      %v911 = vpow.pop %v910
      %v912 = vmul.f32 %v909, 1.442695
      %v913 = vpow.pop %v912
      %v914 = vadd.f32 %v911, 1.0
      %v915 = vadd.f32 %v913, 1.0
      %v916 = vrcp.pop %v914
      %v917 = vmul.f32 1.0, %v916
      %v918 = vrcp.pop %v915
      %v919 = vmul.f32 1.0, %v918
      %v920 = vmul.f32 %v917, %v662
      %v921 = vmul.f32 %v919, %v663
      %v922 = vsub.f32 1.0, %v917
      %v923 = vsub.f32 1.0, %v919
      %v924 = vmul.f32 %v922, %v267
      %v925 = vmul.f32 %v923, %v268
      %v926 = vadd.f32 %v920, %v924
      %v927 = vadd.f32 %v921, %v925
      %928 = vst.msk [vmem:[%s265] sm:$0xff] %vm270, %v926
      %929 = vst.msk [vmem:[%s265 + $0x8] sm:$0xff] %vm270, %v927
      %p930 = scmp.lt.s32.totalorder %s17, 1
      %s931 = scalar_select %p930, %s17, 1
      %s932 = smul.addr %s931, 2
      %s933 = smul.addr %s932, 8
      %s934 = scalar_lea.vmem %s6, %s933
      // Predicated region
      $region45: #{mnemonic_reader_forward.6} parent=43 // pred_check
        %p935 = pneg %p171
      $region46: #{mnemonic_reader_forward.6} parent=43 // pred_check_branch
        %937 = sbr.rel (%p935) target = $region48
      $region47: #{mnemonic_reader_forward.6} parent=43 // pred_region
        _
      $region48: #{mnemonic_reader_forward.6} parent=43 // pred_fallthru
        _
    $region44: #{mnemonic_reader_forward.6} parent=5 // pred_fallthru
      _
    %p938 = scmp.le.s32.totalorder 2, %s12
    // Predicated region
    $region49: #{mnemonic_reader_forward.6} parent=5 // pred_check
      %p939 = pneg %p938
    $region50: #{mnemonic_reader_forward.6} parent=5 // pred_check_branch
      %941 = sbr.rel (%p939) target = $region52
    $region51: #{mnemonic_reader_forward.6} parent=5 // pred_region
      %s942 = ssub.s32 %s12, 2
      // Predicated region
      $region53: #{mnemonic_reader_forward.6} parent=51 // pred_check
        %p943 = pneg %p177
      $region54: #{mnemonic_reader_forward.6} parent=51 // pred_check_branch
        %945 = sbr.rel (%p943) target = $region56
      $region55: #{mnemonic_reader_forward.6} parent=51 // pred_region
        %p946 = scmp.lt.s32.totalorder %s18, 1
        %s947 = scalar_select %p946, %s18, 1
        %s948 = smul.addr %s947, 2
        %s949 = smul.addr %s948, 8
        %s950 = scalar_lea.vmem %s6, %s949
      $region56: #{mnemonic_reader_forward.6} parent=51 // pred_fallthru
        _
    $region52: #{mnemonic_reader_forward.6} parent=5 // pred_fallthru
      _
  $region6: #{mnemonic_reader_forward.6} parent=0 // loop_footer
    %s16 = sadd.s32 1, %s12
  $region7: #{mnemonic_reader_forward.6} parent=0 // loop_footer_branch
    %11 = sbr.rel target = $region3
  $region8: #{mnemonic_reader_forward.6} parent=0 // loop_exit
    _

// kernel: mnemonic_reader_forward.9
$region0: #{mnemonic_reader_forward.9}
  #allocation0 [shape = 'u32[]', space=smem, size = 0x4, offset = 0x4, fixed_abs, tag = 'smem constant byte address 0x4 - core index']
  #allocation1 [shape = 'u32[144,128]{1,0:T(1,128)}', space=vmem, size = 0x12000, scoped, tag = 'internal scratch']
  %s0 = inlined_call_operand.vmem [shape: f32[2,16,32], index: 0, kind: input, shape index: {}]
  %s1 = inlined_call_operand.vmem [shape: bf16[2,8,32], index: 1, kind: input, shape index: {}]
  %s2 = inlined_call_operand.vmem [shape: f32[2,1,16], index: 2, kind: input, shape index: {}]
  %s3 = inlined_call_operand.vmem [shape: f32[2,1,8], index: 3, kind: input, shape index: {}]
  %s4 = inlined_call_operand.vmem [shape: bf16[1,32], index: 4, kind: input, shape index: {}]
  %s5 = inlined_call_operand.vmem [shape: bf16[32,32], index: 5, kind: input, shape index: {}]
  %s6 = inlined_call_operand.vmem [shape: bf16[2,32,32], index: 6, kind: input, shape index: {}]
  %s7 = inlined_call_operand.vmem [shape: f32[1,32], index: 7, kind: input, shape index: {}]
  %s8 = inlined_call_operand.vmem [shape: bf16[32,32], index: 8, kind: input, shape index: {}]
  %s9 = inlined_call_operand.vmem [shape: f32[2,2,16], index: 9, kind: output, shape index: {}]
  %s10 = sld [smem:[#allocation0]]
  $region46: #{mnemonic_reader_forward.9} parent=0
    _
  %s12 = ssub.s32 1, %s10
  %s13 = scalar_select 0, %s12, %s10
  // Predicated region
  $region2: #{mnemonic_reader_forward.9} parent=0 // pred_check
    _
  $region3: #{mnemonic_reader_forward.9} parent=0 // pred_check_branch
    %15 = sbr.rel (0) target = $region5
  $region4: #{mnemonic_reader_forward.9} parent=0 // pred_region
    _
  $region5: #{mnemonic_reader_forward.9} parent=0 // pred_fallthru
    _
  // Predicated region
  $region6: #{mnemonic_reader_forward.9} parent=0 // pred_check
    _
  $region7: #{mnemonic_reader_forward.9} parent=0 // pred_check_branch
    %17 = sbr.rel (0) target = $region9
  $region8: #{mnemonic_reader_forward.9} parent=0 // pred_region
    _
  $region9: #{mnemonic_reader_forward.9} parent=0 // pred_fallthru
    _
  // Predicated region
  $region10: #{mnemonic_reader_forward.9} parent=0 // pred_check
    _
  $region11: #{mnemonic_reader_forward.9} parent=0 // pred_check_branch
    %19 = sbr.rel (0) target = $region13
  $region12: #{mnemonic_reader_forward.9} parent=0 // pred_region
    _
  $region13: #{mnemonic_reader_forward.9} parent=0 // pred_fallthru
    _
  // Predicated region
  $region14: #{mnemonic_reader_forward.9} parent=0 // pred_check
    _
  $region15: #{mnemonic_reader_forward.9} parent=0 // pred_check_branch
    %21 = sbr.rel (0) target = $region17
  $region16: #{mnemonic_reader_forward.9} parent=0 // pred_region
    _
  $region17: #{mnemonic_reader_forward.9} parent=0 // pred_fallthru
    _
  // Predicated region
  $region18: #{mnemonic_reader_forward.9} parent=0 // pred_check
    _
  $region19: #{mnemonic_reader_forward.9} parent=0 // pred_check_branch
    %23 = sbr.rel (0) target = $region21
  $region20: #{mnemonic_reader_forward.9} parent=0 // pred_region
    _
  $region21: #{mnemonic_reader_forward.9} parent=0 // pred_fallthru
    _
  // Predicated region
  $region22: #{mnemonic_reader_forward.9} parent=0 // pred_check
    _
  $region23: #{mnemonic_reader_forward.9} parent=0 // pred_check_branch
    %25 = sbr.rel (0) target = $region25
  $region24: #{mnemonic_reader_forward.9} parent=0 // pred_region
    _
  $region25: #{mnemonic_reader_forward.9} parent=0 // pred_fallthru
    _
  // Predicated region
  $region26: #{mnemonic_reader_forward.9} parent=0 // pred_check
    _
  $region27: #{mnemonic_reader_forward.9} parent=0 // pred_check_branch
    %27 = sbr.rel (0) target = $region29
  $region28: #{mnemonic_reader_forward.9} parent=0 // pred_region
    _
  $region29: #{mnemonic_reader_forward.9} parent=0 // pred_fallthru
    _
  // Predicated region
  $region30: #{mnemonic_reader_forward.9} parent=0 // pred_check
    _
  $region31: #{mnemonic_reader_forward.9} parent=0 // pred_check_branch
    %29 = sbr.rel (0) target = $region33
  $region32: #{mnemonic_reader_forward.9} parent=0 // pred_region
    _
  $region33: #{mnemonic_reader_forward.9} parent=0 // pred_fallthru
    _
  // Predicated region
  $region34: #{mnemonic_reader_forward.9} parent=0 // pred_check
    _
  $region35: #{mnemonic_reader_forward.9} parent=0 // pred_check_branch
    %31 = sbr.rel (0) target = $region37
  $region36: #{mnemonic_reader_forward.9} parent=0 // pred_region
    _
  $region37: #{mnemonic_reader_forward.9} parent=0 // pred_fallthru
    _
  %v33 = vld [vmem:[%s0] sm:$0xff]
  %v34 = vld [vmem:[%s0 + $0x8] sm:$0xff]
  %v35 = vld [vmem:[%s0 + $0x10] sm:$0xff]
  %v36 = vld [vmem:[%s0 + $0x18] sm:$0xff]
  %v37 = vld [vmem:[%s1] sm:$0xf]
  %v38 = vld [vmem:[%s1 + $0x4] sm:$0xf]
  %v39 = vld [vmem:[%s2] sm:$0x1]
  %v40 = vld [vmem:[%s2 + $0x1] sm:$0x1]
  %v41 = vld [vmem:[%s3] sm:$0x1]
  %v42 = vld [vmem:[%s3 + $0x1] sm:$0x1]
  %v43 = vpack.c.bf16 %v34, %v33
  %v44 = vpack.c.bf16 %v36, %v35
  %v45 = vld [vmem:[%s4] sm:$0x1]
  %vm46 = vcmask 261120
  %v48 = vsel %vm46, %v45, 0
  %v51 = vsel %vm46, %v37, 0
  %53 = vmatprep.subr.bf16.mxu0 0
  %54 = vmatpush1.bf16.xpose.msra.mxu0 %v51
  %55 = vmatprep.subr.bf16.mxu0 0
  %56 = vmatpush1.bf16.xpose.msra.mxu0 0
  %57 = vmatprep.subr.bf16.mxu0 0
  %58 = vmatpush1.bf16.xpose.msra.mxu0 0
  %59 = vmatprep.subr.bf16.mxu0 0
  %60 = vmatpush1.bf16.xpose.msra.mxu0 0
  %61 = vmatprep.subr.bf16.mxu0 0
  %62 = vmatpush1.bf16.xpose.msra.mxu0 0
  %63 = vmatprep.subr.bf16.mxu0 0
  %64 = vmatpush1.bf16.xpose.msra.mxu0 0
  %65 = vmatprep.subr.bf16.mxu0 0
  %66 = vmatpush1.bf16.xpose.msra.mxu0 0
  %67 = vmatprep.subr.bf16.mxu0 0
  %68 = vmatpush1.bf16.xpose.msra.mxu0 0
  %69 = vmatprep.subr.bf16.mxu0 0
  %70 = vmatpush1.bf16.xpose.msra.mxu0 0
  %71 = vmatprep.subr.bf16.mxu0 0
  %72 = vmatpush1.bf16.xpose.msra.mxu0 0
  %73 = vmatprep.subr.bf16.mxu0 0
  %74 = vmatpush1.bf16.xpose.msra.mxu0 0
  %75 = vmatprep.subr.bf16.mxu0 0
  %76 = vmatpush1.bf16.xpose.msra.mxu0 0
  %77 = vmatprep.subr.bf16.mxu0 0
  %78 = vmatpush1.bf16.xpose.msra.mxu0 0
  %79 = vmatprep.subr.bf16.mxu0 0
  %80 = vmatpush1.bf16.xpose.msra.mxu0 0
  %81 = vmatprep.subr.bf16.mxu0 0
  %82 = vmatpush1.bf16.xpose.msra.mxu0 0
  %83 = vmatprep.subr.bf16.mxu0 0
  %84 = vmatpush1.bf16.xpose.msra.mxu0 0
  %85 = vmatprep.mubr.bf16.mxu0 0
  %86 = vmatmul.mubr.bf16.gmra.mrb[0].mxu0 %v48
  %v87 = vpop.f32.mrb[0].mxu0
  %v88 = vadd.f32 %v41, %v87
  %v89 = vpop.f32.mrb[0].mxu0
  %v90 = vpop.f32.mrb[0].mxu0
  %v91 = vpop.f32.mrb[0].mxu0
  %92 = vdwg.mxu0
  %v94 = vsel %vm46, %v38, 0
  %96 = vmatprep.subr.bf16.mxu0 0
  %97 = vmatpush1.bf16.xpose.msra.mxu0 %v94
  %98 = vmatprep.subr.bf16.mxu0 0
  %99 = vmatpush1.bf16.xpose.msra.mxu0 0
  %100 = vmatprep.subr.bf16.mxu0 0
  %101 = vmatpush1.bf16.xpose.msra.mxu0 0
  %102 = vmatprep.subr.bf16.mxu0 0
  %103 = vmatpush1.bf16.xpose.msra.mxu0 0
  %104 = vmatprep.subr.bf16.mxu0 0
  %105 = vmatpush1.bf16.xpose.msra.mxu0 0
  %106 = vmatprep.subr.bf16.mxu0 0
  %107 = vmatpush1.bf16.xpose.msra.mxu0 0
  %108 = vmatprep.subr.bf16.mxu0 0
  %109 = vmatpush1.bf16.xpose.msra.mxu0 0
  %110 = vmatprep.subr.bf16.mxu0 0
  %111 = vmatpush1.bf16.xpose.msra.mxu0 0
  %112 = vmatprep.subr.bf16.mxu0 0
  %113 = vmatpush1.bf16.xpose.msra.mxu0 0
  %114 = vmatprep.subr.bf16.mxu0 0
  %115 = vmatpush1.bf16.xpose.msra.mxu0 0
  %116 = vmatprep.subr.bf16.mxu0 0
  %117 = vmatpush1.bf16.xpose.msra.mxu0 0
  %118 = vmatprep.subr.bf16.mxu0 0
  %119 = vmatpush1.bf16.xpose.msra.mxu0 0
  %120 = vmatprep.subr.bf16.mxu0 0
  %121 = vmatpush1.bf16.xpose.msra.mxu0 0
  %122 = vmatprep.subr.bf16.mxu0 0
  %123 = vmatpush1.bf16.xpose.msra.mxu0 0
  %124 = vmatprep.subr.bf16.mxu0 0
  %125 = vmatpush1.bf16.xpose.msra.mxu0 0
  %126 = vmatprep.subr.bf16.mxu0 0
  %127 = vmatpush1.bf16.xpose.msra.mxu0 0
  %128 = vmatprep.mubr.bf16.mxu0 0
  %129 = vmatmul.mubr.bf16.gmra.mrb[0].mxu0 %v48
  %v130 = vpop.f32.mrb[0].mxu0
  %v131 = vadd.f32 %v42, %v130
  %v132 = vpop.f32.mrb[0].mxu0
  %v133 = vpop.f32.mrb[0].mxu0
  %v134 = vpop.f32.mrb[0].mxu0
  %135 = vdwg.mxu0
  %vm136 = vcmask 57344
  %v137 = vsel %vm136, %v88, -inf
  %138 = vmax.xlane.f32.xlu0 %v137
  %v139 = vpop.xlane.xlu0 %138
  %v140 = vsel %vm136, %v131, -inf
  %141 = vmax.xlane.f32.xlu0 %v140
  %v142 = vpop.xlane.xlu0 %141
  %v143 = vsub.f32 %v88, %v139
  %v144 = vsub.f32 %v131, %v142
  %v145 = vmul.f32 %v143, 1.442695
  %v146 = vpow.pop %v145
  %v147 = vmul.f32 %v144, 1.442695
  %v148 = vpow.pop %v147
  %v149 = vsel %vm136, %v146, 0.0
  %150 = vadd.xlane.f32.xlu0 %v149
  %v151 = vpop.xlane.xlu0 %150
  %v152 = vsel %vm136, %v148, 0.0
  %153 = vadd.xlane.f32.xlu0 %v152
  %v154 = vpop.xlane.xlu0 %153
  %v155 = vrcp.pop %v151
  %v156 = vrcp.pop %v154
  %v157 = vmul.f32 %v146, %v155
  %v158 = vmul.f32 %v148, %v156
  %v159 = vpack.c.bf16 %v157, %v157
  %v160 = vpack.c.bf16 %v158, %v158
  %vm161 = vcmask 64512
  %v163 = vsel %vm161, %v159, 0
  %vm165 = vcmask 1043456
  %v166 = vsel %vm165, %v37, 0
  %168 = vmatprep.subr.bf16.mxu0 0
  %169 = vmatpush1.bf16.msra.mxu0 %v166
  %170 = vmatprep.subr.bf16.mxu0 0
  %171 = vmatpush1.bf16.msra.mxu0 0
  %172 = vmatprep.subr.bf16.mxu0 0
  %173 = vmatpush1.bf16.msra.mxu0 0
  %174 = vmatprep.subr.bf16.mxu0 0
  %175 = vmatpush1.bf16.msra.mxu0 0
  %176 = vmatprep.subr.bf16.mxu0 0
  %177 = vmatpush1.bf16.msra.mxu0 0
  %178 = vmatprep.subr.bf16.mxu0 0
  %179 = vmatpush1.bf16.msra.mxu0 0
  %180 = vmatprep.subr.bf16.mxu0 0
  %181 = vmatpush1.bf16.msra.mxu0 0
  %182 = vmatprep.subr.bf16.mxu0 0
  %183 = vmatpush1.bf16.msra.mxu0 0
  %184 = vmatprep.subr.bf16.mxu0 0
  %185 = vmatpush1.bf16.msra.mxu0 0
  %186 = vmatprep.subr.bf16.mxu0 0
  %187 = vmatpush1.bf16.msra.mxu0 0
  %188 = vmatprep.subr.bf16.mxu0 0
  %189 = vmatpush1.bf16.msra.mxu0 0
  %190 = vmatprep.subr.bf16.mxu0 0
  %191 = vmatpush1.bf16.msra.mxu0 0
  %192 = vmatprep.subr.bf16.mxu0 0
  %193 = vmatpush1.bf16.msra.mxu0 0
  %194 = vmatprep.subr.bf16.mxu0 0
  %195 = vmatpush1.bf16.msra.mxu0 0
  %196 = vmatprep.subr.bf16.mxu0 0
  %197 = vmatpush1.bf16.msra.mxu0 0
  %198 = vmatprep.subr.bf16.mxu0 0
  %199 = vmatpush1.bf16.msra.mxu0 0
  %200 = vmatprep.mubr.bf16.mxu0 0
  %201 = vmatmul.mubr.bf16.gmra.mrb[0].mxu0 %v163
  %v202 = vpop.f32.mrb[0].mxu0
  %v203 = vadd.f32 0.0, %v202
  %v204 = vpop.f32.mrb[0].mxu0
  %v205 = vpop.f32.mrb[0].mxu0
  %v206 = vpop.f32.mrb[0].mxu0
  %207 = vdwg.mxu0
  %v209 = vsel %vm161, %v160, 0
  %v211 = vsel %vm165, %v38, 0
  %213 = vmatprep.subr.bf16.mxu0 0
  %214 = vmatpush1.bf16.msra.mxu0 %v211
  %215 = vmatprep.subr.bf16.mxu0 0
  %216 = vmatpush1.bf16.msra.mxu0 0
  %217 = vmatprep.subr.bf16.mxu0 0
  %218 = vmatpush1.bf16.msra.mxu0 0
  %219 = vmatprep.subr.bf16.mxu0 0
  %220 = vmatpush1.bf16.msra.mxu0 0
  %221 = vmatprep.subr.bf16.mxu0 0
  %222 = vmatpush1.bf16.msra.mxu0 0
  %223 = vmatprep.subr.bf16.mxu0 0
  %224 = vmatpush1.bf16.msra.mxu0 0
  %225 = vmatprep.subr.bf16.mxu0 0
  %226 = vmatpush1.bf16.msra.mxu0 0
  %227 = vmatprep.subr.bf16.mxu0 0
  %228 = vmatpush1.bf16.msra.mxu0 0
  %229 = vmatprep.subr.bf16.mxu0 0
  %230 = vmatpush1.bf16.msra.mxu0 0
  %231 = vmatprep.subr.bf16.mxu0 0
  %232 = vmatpush1.bf16.msra.mxu0 0
  %233 = vmatprep.subr.bf16.mxu0 0
  %234 = vmatpush1.bf16.msra.mxu0 0
  %235 = vmatprep.subr.bf16.mxu0 0
  %236 = vmatpush1.bf16.msra.mxu0 0
  %237 = vmatprep.subr.bf16.mxu0 0
  %238 = vmatpush1.bf16.msra.mxu0 0
  %239 = vmatprep.subr.bf16.mxu0 0
  %240 = vmatpush1.bf16.msra.mxu0 0
  %241 = vmatprep.subr.bf16.mxu0 0
  %242 = vmatpush1.bf16.msra.mxu0 0
  %243 = vmatprep.subr.bf16.mxu0 0
  %244 = vmatpush1.bf16.msra.mxu0 0
  %245 = vmatprep.mubr.bf16.mxu0 0
  %246 = vmatmul.mubr.bf16.gmra.mrb[0].mxu0 %v209
  %v247 = vpop.f32.mrb[0].mxu0
  %v248 = vadd.f32 0.0, %v247
  %v249 = vpop.f32.mrb[0].mxu0
  %v250 = vpop.f32.mrb[0].mxu0
  %v251 = vpop.f32.mrb[0].mxu0
  %252 = vdwg.mxu0
  %v253 = vpack.c.bf16 %v203, %v203
  %v254 = vpack.c.bf16 %v248, %v248
  %v255 = vld [vmem:[%s5] sm:$0xf]
  %v256 = vld [vmem:[%s5 + $0x4] sm:$0xf]
  %v257 = vld [vmem:[%s5 + $0x8] sm:$0xf]
  %v258 = vld [vmem:[%s5 + $0xc] sm:$0xf]
  %v261 = vunpack.c.l.b16 %v253
  %v262 = vunpack.c.l.b16 %v254
  %v263 = vrot.slane %v262, 7
  %vm264 = vcmask 1041409
  %v265 = vsel %vm264, %v263, %v261
  %v266 = vpack.c.b16 %v265, %v265
  %v271 = vunpack.c.l.b16 %v255
  %v272 = vunpack.c.l.b16 %v256
  %v273 = vunpack.c.l.b16 %v257
  %v274 = vunpack.c.l.b16 %v258
  %v275 = vpack.c.b16 %v272, %v271
  %v276 = vpack.c.b16 %v274, %v273
  %v280 = vsel %vm46, %v266, 0
  %282 = vmatprep.subr.bf16.mxu0 0
  %283 = vmatpush1.bf16.msra.mxu0 %v275
  %284 = vmatprep.subr.bf16.mxu0 0
  %285 = vmatpush1.bf16.msra.mxu0 %v276
  %286 = vmatprep.subr.bf16.mxu0 0
  %287 = vmatpush1.bf16.msra.mxu0 0
  %288 = vmatprep.subr.bf16.mxu0 0
  %289 = vmatpush1.bf16.msra.mxu0 0
  %290 = vmatprep.subr.bf16.mxu0 0
  %291 = vmatpush1.bf16.msra.mxu0 0
  %292 = vmatprep.subr.bf16.mxu0 0
  %293 = vmatpush1.bf16.msra.mxu0 0
  %294 = vmatprep.subr.bf16.mxu0 0
  %295 = vmatpush1.bf16.msra.mxu0 0
  %296 = vmatprep.subr.bf16.mxu0 0
  %297 = vmatpush1.bf16.msra.mxu0 0
  %298 = vmatprep.subr.bf16.mxu0 0
  %299 = vmatpush1.bf16.msra.mxu0 0
  %300 = vmatprep.subr.bf16.mxu0 0
  %301 = vmatpush1.bf16.msra.mxu0 0
  %302 = vmatprep.subr.bf16.mxu0 0
  %303 = vmatpush1.bf16.msra.mxu0 0
  %304 = vmatprep.subr.bf16.mxu0 0
  %305 = vmatpush1.bf16.msra.mxu0 0
  %306 = vmatprep.subr.bf16.mxu0 0
  %307 = vmatpush1.bf16.msra.mxu0 0
  %308 = vmatprep.subr.bf16.mxu0 0
  %309 = vmatpush1.bf16.msra.mxu0 0
  %310 = vmatprep.subr.bf16.mxu0 0
  %311 = vmatpush1.bf16.msra.mxu0 0
  %312 = vmatprep.subr.bf16.mxu0 0
  %313 = vmatpush1.bf16.msra.mxu0 0
  %314 = vmatprep.mubr.bf16.mxu0 0
  %315 = vmatmul.mubr.bf16.gmra.mrb[0].mxu0 %v280
  %v316 = vpop.f32.mrb[0].mxu0
  %v317 = vadd.f32 0.0, %v316
  %v318 = vpop.f32.mrb[0].mxu0
  %v319 = vpop.f32.mrb[0].mxu0
  %v320 = vpop.f32.mrb[0].mxu0
  %321 = vdwg.mxu0
  %v324 = vunpack.c.l.s4 1966171168
  %v325 = vunpack.c.0.s8 %v324
  %v326 = vlaneseq
  %v327 = vshrl.u32 %v326, 7
  %v328 = vsub.s32 %v325, %v327
  %v329 = vrot.slane %v317, %v328
  %v330 = vcombine.high %v329, %v329
  %v332 = vunpack.c.l.s4 1966171168
  %v333 = vunpack.c.0.s8 %v332
  %v334 = vlaneseq
  %v335 = vshrl.u32 %v334, 7
  %v336 = vsub.s32 %v333, %v335
  %v337 = vrot.slane %v329, %v336
  %v339 = vunpack.c.l.s4 1966171168
  %v340 = vunpack.c.0.s8 %v339
  %v341 = vlaneseq
  %v342 = vshrl.u32 %v341, 7
  %v343 = vsub.s32 %v340, %v342
  %v344 = vrot.slane %v330, %v343
  %v347 = vpack.c.bf16 %v337, %v337
  %v348 = vpack.c.bf16 %v344, %v344
  %v350 = vsel %vm46, %v347, 0
  %v353 = vsel %vm46, %v43, 0
  %355 = vmatprep.subr.bf16.mxu0 0
  %356 = vmatpush1.bf16.xpose.msra.mxu0 %v353
  %357 = vmatprep.subr.bf16.mxu0 0
  %358 = vmatpush1.bf16.xpose.msra.mxu0 0
  %359 = vmatprep.subr.bf16.mxu0 0
  %360 = vmatpush1.bf16.xpose.msra.mxu0 0
  %361 = vmatprep.subr.bf16.mxu0 0
  %362 = vmatpush1.bf16.xpose.msra.mxu0 0
  %363 = vmatprep.subr.bf16.mxu0 0
  %364 = vmatpush1.bf16.xpose.msra.mxu0 0
  %365 = vmatprep.subr.bf16.mxu0 0
  %366 = vmatpush1.bf16.xpose.msra.mxu0 0
  %367 = vmatprep.subr.bf16.mxu0 0
  %368 = vmatpush1.bf16.xpose.msra.mxu0 0
  %369 = vmatprep.subr.bf16.mxu0 0
  %370 = vmatpush1.bf16.xpose.msra.mxu0 0
  %371 = vmatprep.subr.bf16.mxu0 0
  %372 = vmatpush1.bf16.xpose.msra.mxu0 0
  %373 = vmatprep.subr.bf16.mxu0 0
  %374 = vmatpush1.bf16.xpose.msra.mxu0 0
  %375 = vmatprep.subr.bf16.mxu0 0
  %376 = vmatpush1.bf16.xpose.msra.mxu0 0
  %377 = vmatprep.subr.bf16.mxu0 0
  %378 = vmatpush1.bf16.xpose.msra.mxu0 0
  %379 = vmatprep.subr.bf16.mxu0 0
  %380 = vmatpush1.bf16.xpose.msra.mxu0 0
  %381 = vmatprep.subr.bf16.mxu0 0
  %382 = vmatpush1.bf16.xpose.msra.mxu0 0
  %383 = vmatprep.subr.bf16.mxu0 0
  %384 = vmatpush1.bf16.xpose.msra.mxu0 0
  %385 = vmatprep.subr.bf16.mxu0 0
  %386 = vmatpush1.bf16.xpose.msra.mxu0 0
  %387 = vmatprep.mubr.bf16.mxu0 0
  %388 = vmatmul.mubr.bf16.gmra.mrb[0].mxu0 %v350
  %v389 = vpop.f32.mrb[0].mxu0
  %v390 = vadd.f32 %v39, %v389
  %v391 = vpop.f32.mrb[0].mxu0
  %v392 = vpop.f32.mrb[0].mxu0
  %v393 = vpop.f32.mrb[0].mxu0
  %394 = vdwg.mxu0
  %v396 = vsel %vm46, %v348, 0
  %v399 = vsel %vm46, %v44, 0
  %401 = vmatprep.subr.bf16.mxu0 0
  %402 = vmatpush1.bf16.xpose.msra.mxu0 %v399
  %403 = vmatprep.subr.bf16.mxu0 0
  %404 = vmatpush1.bf16.xpose.msra.mxu0 0
  %405 = vmatprep.subr.bf16.mxu0 0
  %406 = vmatpush1.bf16.xpose.msra.mxu0 0
  %407 = vmatprep.subr.bf16.mxu0 0
  %408 = vmatpush1.bf16.xpose.msra.mxu0 0
  %409 = vmatprep.subr.bf16.mxu0 0
  %410 = vmatpush1.bf16.xpose.msra.mxu0 0
  %411 = vmatprep.subr.bf16.mxu0 0
  %412 = vmatpush1.bf16.xpose.msra.mxu0 0
  %413 = vmatprep.subr.bf16.mxu0 0
  %414 = vmatpush1.bf16.xpose.msra.mxu0 0
  %415 = vmatprep.subr.bf16.mxu0 0
  %416 = vmatpush1.bf16.xpose.msra.mxu0 0
  %417 = vmatprep.subr.bf16.mxu0 0
  %418 = vmatpush1.bf16.xpose.msra.mxu0 0
  %419 = vmatprep.subr.bf16.mxu0 0
  %420 = vmatpush1.bf16.xpose.msra.mxu0 0
  %421 = vmatprep.subr.bf16.mxu0 0
  %422 = vmatpush1.bf16.xpose.msra.mxu0 0
  %423 = vmatprep.subr.bf16.mxu0 0
  %424 = vmatpush1.bf16.xpose.msra.mxu0 0
  %425 = vmatprep.subr.bf16.mxu0 0
  %426 = vmatpush1.bf16.xpose.msra.mxu0 0
  %427 = vmatprep.subr.bf16.mxu0 0
  %428 = vmatpush1.bf16.xpose.msra.mxu0 0
  %429 = vmatprep.subr.bf16.mxu0 0
  %430 = vmatpush1.bf16.xpose.msra.mxu0 0
  %431 = vmatprep.subr.bf16.mxu0 0
  %432 = vmatpush1.bf16.xpose.msra.mxu0 0
  %433 = vmatprep.mubr.bf16.mxu0 0
  %434 = vmatmul.mubr.bf16.gmra.mrb[0].mxu0 %v396
  %v435 = vpop.f32.mrb[0].mxu0
  %v436 = vadd.f32 %v40, %v435
  %v437 = vpop.f32.mrb[0].mxu0
  %v438 = vpop.f32.mrb[0].mxu0
  %v439 = vpop.f32.mrb[0].mxu0
  %440 = vdwg.mxu0
  %vm441 = vcmask 122880
  %v442 = vsel %vm441, %v390, -inf
  %443 = vmax.xlane.f32.xlu0 %v442
  %v444 = vpop.xlane.xlu0 %443
  %v445 = vsel %vm441, %v436, -inf
  %446 = vmax.xlane.f32.xlu0 %v445
  %v447 = vpop.xlane.xlu0 %446
  %v448 = vsub.f32 %v390, %v444
  %v449 = vsub.f32 %v436, %v447
  %v450 = vmul.f32 %v448, 1.442695
  %v451 = vpow.pop %v450
  %v452 = vmul.f32 %v449, 1.442695
  %v453 = vpow.pop %v452
  %v454 = vsel %vm441, %v451, 0.0
  %455 = vadd.xlane.f32.xlu0 %v454
  %v456 = vpop.xlane.xlu0 %455
  %v457 = vsel %vm441, %v453, 0.0
  %458 = vadd.xlane.f32.xlu0 %v457
  %v459 = vpop.xlane.xlu0 %458
  %v460 = vrcp.pop %v456
  %v461 = vrcp.pop %v459
  %v462 = vmul.f32 %v451, %v460
  %v463 = vmul.f32 %v453, %v461
  %v464 = vpack.c.bf16 %v462, %v462
  %v465 = vpack.c.bf16 %v463, %v463
  %vm466 = vcmask 130048
  %v468 = vsel %vm466, %v464, 0
  %470 = vmatprep.subr.bf16.mxu0 0
  %471 = vmatpush1.bf16.msra.mxu0 %v43
  %472 = vmatprep.subr.bf16.mxu0 0
  %473 = vmatpush1.bf16.msra.mxu0 0
  %474 = vmatprep.subr.bf16.mxu0 0
  %475 = vmatpush1.bf16.msra.mxu0 0
  %476 = vmatprep.subr.bf16.mxu0 0
  %477 = vmatpush1.bf16.msra.mxu0 0
  %478 = vmatprep.subr.bf16.mxu0 0
  %479 = vmatpush1.bf16.msra.mxu0 0
  %480 = vmatprep.subr.bf16.mxu0 0
  %481 = vmatpush1.bf16.msra.mxu0 0
  %482 = vmatprep.subr.bf16.mxu0 0
  %483 = vmatpush1.bf16.msra.mxu0 0
  %484 = vmatprep.subr.bf16.mxu0 0
  %485 = vmatpush1.bf16.msra.mxu0 0
  %486 = vmatprep.subr.bf16.mxu0 0
  %487 = vmatpush1.bf16.msra.mxu0 0
  %488 = vmatprep.subr.bf16.mxu0 0
  %489 = vmatpush1.bf16.msra.mxu0 0
  %490 = vmatprep.subr.bf16.mxu0 0
  %491 = vmatpush1.bf16.msra.mxu0 0
  %492 = vmatprep.subr.bf16.mxu0 0
  %493 = vmatpush1.bf16.msra.mxu0 0
  %494 = vmatprep.subr.bf16.mxu0 0
  %495 = vmatpush1.bf16.msra.mxu0 0
  %496 = vmatprep.subr.bf16.mxu0 0
  %497 = vmatpush1.bf16.msra.mxu0 0
  %498 = vmatprep.subr.bf16.mxu0 0
  %499 = vmatpush1.bf16.msra.mxu0 0
  %500 = vmatprep.subr.bf16.mxu0 0
  %501 = vmatpush1.bf16.msra.mxu0 0
  %502 = vmatprep.mubr.bf16.mxu0 0
  %503 = vmatmul.mubr.bf16.gmra.mrb[0].mxu0 %v468
  %v504 = vpop.f32.mrb[0].mxu0
  %v505 = vadd.f32 0.0, %v504
  %v506 = vpop.f32.mrb[0].mxu0
  %v507 = vpop.f32.mrb[0].mxu0
  %v508 = vpop.f32.mrb[0].mxu0
  %509 = vdwg.mxu0
  %v511 = vsel %vm466, %v465, 0
  %513 = vmatprep.subr.bf16.mxu0 0
  %514 = vmatpush1.bf16.msra.mxu0 %v44
  %515 = vmatprep.subr.bf16.mxu0 0
  %516 = vmatpush1.bf16.msra.mxu0 0
  %517 = vmatprep.subr.bf16.mxu0 0
  %518 = vmatpush1.bf16.msra.mxu0 0
  %519 = vmatprep.subr.bf16.mxu0 0
  %520 = vmatpush1.bf16.msra.mxu0 0
  %521 = vmatprep.subr.bf16.mxu0 0
  %522 = vmatpush1.bf16.msra.mxu0 0
  %523 = vmatprep.subr.bf16.mxu0 0
  %524 = vmatpush1.bf16.msra.mxu0 0
  %525 = vmatprep.subr.bf16.mxu0 0
  %526 = vmatpush1.bf16.msra.mxu0 0
  %527 = vmatprep.subr.bf16.mxu0 0
  %528 = vmatpush1.bf16.msra.mxu0 0
  %529 = vmatprep.subr.bf16.mxu0 0
  %530 = vmatpush1.bf16.msra.mxu0 0
  %531 = vmatprep.subr.bf16.mxu0 0
  %532 = vmatpush1.bf16.msra.mxu0 0
  %533 = vmatprep.subr.bf16.mxu0 0
  %534 = vmatpush1.bf16.msra.mxu0 0
  %535 = vmatprep.subr.bf16.mxu0 0
  %536 = vmatpush1.bf16.msra.mxu0 0
  %537 = vmatprep.subr.bf16.mxu0 0
  %538 = vmatpush1.bf16.msra.mxu0 0
  %539 = vmatprep.subr.bf16.mxu0 0
  %540 = vmatpush1.bf16.msra.mxu0 0
  %541 = vmatprep.subr.bf16.mxu0 0
  %542 = vmatpush1.bf16.msra.mxu0 0
  %543 = vmatprep.subr.bf16.mxu0 0
  %544 = vmatpush1.bf16.msra.mxu0 0
  %545 = vmatprep.mubr.bf16.mxu0 0
  %546 = vmatmul.mubr.bf16.gmra.mrb[0].mxu0 %v511
  %v547 = vpop.f32.mrb[0].mxu0
  %v548 = vadd.f32 0.0, %v547
  %v549 = vpop.f32.mrb[0].mxu0
  %v550 = vpop.f32.mrb[0].mxu0
  %v551 = vpop.f32.mrb[0].mxu0
  %552 = vdwg.mxu0
  %v553 = vld [vmem:[%s6] sm:$0xf]
  %v554 = vld [vmem:[%s6 + $0x4] sm:$0xf]
  %v555 = vld [vmem:[%s6 + $0x8] sm:$0xf]
  %v556 = vld [vmem:[%s6 + $0xc] sm:$0xf]
  %v557 = vpack.c.bf16 %v505, %v505
  %v558 = vpack.c.bf16 %v548, %v548
  %s559 = scalar_lea.vmem %s6, 16
  %v560 = vld [vmem:[%s559] sm:$0xf]
  %v561 = vld [vmem:[%s559 + $0x4] sm:$0xf]
  %v562 = vld [vmem:[%s559 + $0x8] sm:$0xf]
  %v563 = vld [vmem:[%s559 + $0xc] sm:$0xf]
  %v566 = vunpack.c.l.b16 %v557
  %v567 = vunpack.c.l.b16 %v558
  %v568 = vrot.slane %v567, 7
  %v569 = vsel %vm264, %v568, %v566
  %v570 = vpack.c.b16 %v569, %v569
  %v575 = vunpack.c.l.b16 %v560
  %v576 = vunpack.c.l.b16 %v561
  %v577 = vunpack.c.l.b16 %v562
  %v578 = vunpack.c.l.b16 %v563
  %v579 = vpack.c.b16 %v576, %v575
  %v580 = vpack.c.b16 %v578, %v577
  %v584 = vsel %vm46, %v570, 0
  %586 = vmatprep.subr.bf16.mxu0 0
  %587 = vmatpush1.bf16.msra.mxu0 %v579
  %588 = vmatprep.subr.bf16.mxu0 0
  %589 = vmatpush1.bf16.msra.mxu0 %v580
  %590 = vmatprep.subr.bf16.mxu0 0
  %591 = vmatpush1.bf16.msra.mxu0 0
  %592 = vmatprep.subr.bf16.mxu0 0
  %593 = vmatpush1.bf16.msra.mxu0 0
  %594 = vmatprep.subr.bf16.mxu0 0
  %595 = vmatpush1.bf16.msra.mxu0 0
  %596 = vmatprep.subr.bf16.mxu0 0
  %597 = vmatpush1.bf16.msra.mxu0 0
  %598 = vmatprep.subr.bf16.mxu0 0
  %599 = vmatpush1.bf16.msra.mxu0 0
  %600 = vmatprep.subr.bf16.mxu0 0
  %601 = vmatpush1.bf16.msra.mxu0 0
  %602 = vmatprep.subr.bf16.mxu0 0
  %603 = vmatpush1.bf16.msra.mxu0 0
  %604 = vmatprep.subr.bf16.mxu0 0
  %605 = vmatpush1.bf16.msra.mxu0 0
  %606 = vmatprep.subr.bf16.mxu0 0
  %607 = vmatpush1.bf16.msra.mxu0 0
  %608 = vmatprep.subr.bf16.mxu0 0
  %609 = vmatpush1.bf16.msra.mxu0 0
  %610 = vmatprep.subr.bf16.mxu0 0
  %611 = vmatpush1.bf16.msra.mxu0 0
  %612 = vmatprep.subr.bf16.mxu0 0
  %613 = vmatpush1.bf16.msra.mxu0 0
  %614 = vmatprep.subr.bf16.mxu0 0
  %615 = vmatpush1.bf16.msra.mxu0 0
  %616 = vmatprep.subr.bf16.mxu0 0
  %617 = vmatpush1.bf16.msra.mxu0 0
  %618 = vmatprep.mubr.bf16.mxu0 0
  %619 = vmatmul.mubr.bf16.gmra.mrb[0].mxu0 %v584
  %v620 = vpop.f32.mrb[0].mxu0
  %v621 = vadd.f32 0.0, %v620
  %v622 = vpop.f32.mrb[0].mxu0
  %v623 = vpop.f32.mrb[0].mxu0
  %v624 = vpop.f32.mrb[0].mxu0
  %625 = vdwg.mxu0
  %v630 = vunpack.c.l.b16 %v553
  %v631 = vunpack.c.l.b16 %v554
  %v632 = vunpack.c.l.b16 %v555
  %v633 = vunpack.c.l.b16 %v556
  %v634 = vpack.c.b16 %v631, %v630
  %v635 = vpack.c.b16 %v633, %v632
  %638 = vmatprep.subr.bf16.mxu0 0
  %639 = vmatpush1.bf16.msra.mxu0 %v634
  %640 = vmatprep.subr.bf16.mxu0 0
  %641 = vmatpush1.bf16.msra.mxu0 %v635
  %642 = vmatprep.subr.bf16.mxu0 0
  %643 = vmatpush1.bf16.msra.mxu0 0
  %644 = vmatprep.subr.bf16.mxu0 0
  %645 = vmatpush1.bf16.msra.mxu0 0
  %646 = vmatprep.subr.bf16.mxu0 0
  %647 = vmatpush1.bf16.msra.mxu0 0
  %648 = vmatprep.subr.bf16.mxu0 0
  %649 = vmatpush1.bf16.msra.mxu0 0
  %650 = vmatprep.subr.bf16.mxu0 0
  %651 = vmatpush1.bf16.msra.mxu0 0
  %652 = vmatprep.subr.bf16.mxu0 0
  %653 = vmatpush1.bf16.msra.mxu0 0
  %654 = vmatprep.subr.bf16.mxu0 0
  %655 = vmatpush1.bf16.msra.mxu0 0
  %656 = vmatprep.subr.bf16.mxu0 0
  %657 = vmatpush1.bf16.msra.mxu0 0
  %658 = vmatprep.subr.bf16.mxu0 0
  %659 = vmatpush1.bf16.msra.mxu0 0
  %660 = vmatprep.subr.bf16.mxu0 0
  %661 = vmatpush1.bf16.msra.mxu0 0
  %662 = vmatprep.subr.bf16.mxu0 0
  %663 = vmatpush1.bf16.msra.mxu0 0
  %664 = vmatprep.subr.bf16.mxu0 0
  %665 = vmatpush1.bf16.msra.mxu0 0
  %666 = vmatprep.subr.bf16.mxu0 0
  %667 = vmatpush1.bf16.msra.mxu0 0
  %668 = vmatprep.subr.bf16.mxu0 0
  %669 = vmatpush1.bf16.msra.mxu0 0
  %670 = vmatprep.mubr.bf16.mxu0 0
  %671 = vmatmul.mubr.bf16.gmra.mrb[0].mxu0 %v280
  %v672 = vpop.f32.mrb[0].mxu0
  %v673 = vadd.f32 %v621, %v672
  %v674 = vpop.f32.mrb[0].mxu0
  %v675 = vpop.f32.mrb[0].mxu0
  %v676 = vpop.f32.mrb[0].mxu0
  %677 = vdwg.mxu0
  %v678 = vld [vmem:[%s7] sm:$0x1]
  %v680 = vlaneseq
  %v681 = vshrl.u32 %v680, 7
  %v682 = vsub.s32 0, %v681
  %v683 = vrot.slane %v678, %v682
  %v685 = vadd.f32 %v673, %v683
  %v686 = vtanh.pop %v685
  %v687 = vpack.c.bf16 %v686, %v686
  %v688 = vld [vmem:[%s8] sm:$0xf]
  %v689 = vld [vmem:[%s8 + $0x4] sm:$0xf]
  %v690 = vld [vmem:[%s8 + $0x8] sm:$0xf]
  %v691 = vld [vmem:[%s8 + $0xc] sm:$0xf]
  %v696 = vunpack.c.l.b16 %v688
  %v697 = vunpack.c.l.b16 %v689
  %v698 = vunpack.c.l.b16 %v690
  %v699 = vunpack.c.l.b16 %v691
  %v700 = vpack.c.b16 %v697, %v696
  %v701 = vpack.c.b16 %v699, %v698
  %v705 = vsel %vm46, %v687, 0
  %707 = vmatprep.subr.bf16.mxu0 0
  %708 = vmatpush1.bf16.msra.mxu0 %v700
  %709 = vmatprep.subr.bf16.mxu0 0
  %710 = vmatpush1.bf16.msra.mxu0 %v701
  %711 = vmatprep.subr.bf16.mxu0 0
  %712 = vmatpush1.bf16.msra.mxu0 0
  %713 = vmatprep.subr.bf16.mxu0 0
  %714 = vmatpush1.bf16.msra.mxu0 0
  %715 = vmatprep.subr.bf16.mxu0 0
  %716 = vmatpush1.bf16.msra.mxu0 0
  %717 = vmatprep.subr.bf16.mxu0 0
  %718 = vmatpush1.bf16.msra.mxu0 0
  %719 = vmatprep.subr.bf16.mxu0 0
  %720 = vmatpush1.bf16.msra.mxu0 0
  %721 = vmatprep.subr.bf16.mxu0 0
  %722 = vmatpush1.bf16.msra.mxu0 0
  %723 = vmatprep.subr.bf16.mxu0 0
  %724 = vmatpush1.bf16.msra.mxu0 0
  %725 = vmatprep.subr.bf16.mxu0 0
  %726 = vmatpush1.bf16.msra.mxu0 0
  %727 = vmatprep.subr.bf16.mxu0 0
  %728 = vmatpush1.bf16.msra.mxu0 0
  %729 = vmatprep.subr.bf16.mxu0 0
  %730 = vmatpush1.bf16.msra.mxu0 0
  %731 = vmatprep.subr.bf16.mxu0 0
  %732 = vmatpush1.bf16.msra.mxu0 0
  %733 = vmatprep.subr.bf16.mxu0 0
  %734 = vmatpush1.bf16.msra.mxu0 0
  %735 = vmatprep.subr.bf16.mxu0 0
  %736 = vmatpush1.bf16.msra.mxu0 0
  %737 = vmatprep.subr.bf16.mxu0 0
  %738 = vmatpush1.bf16.msra.mxu0 0
  %739 = vmatprep.mubr.bf16.mxu0 0
  %740 = vmatmul.mubr.bf16.gmra.mrb[0].mxu0 %v705
  %v741 = vpop.f32.mrb[0].mxu0
  %v742 = vadd.f32 0.0, %v741
  %v743 = vpop.f32.mrb[0].mxu0
  %v744 = vpop.f32.mrb[0].mxu0
  %v745 = vpop.f32.mrb[0].mxu0
  %746 = vdwg.mxu0
  %v749 = vunpack.c.l.s4 1966171168
  %v750 = vunpack.c.0.s8 %v749
  %v751 = vlaneseq
  %v752 = vshrl.u32 %v751, 7
  %v753 = vsub.s32 %v750, %v752
  %v754 = vrot.slane %v742, %v753
  %v755 = vcombine.high %v754, %v754
  %v757 = vunpack.c.l.s4 1966171168
  %v758 = vunpack.c.0.s8 %v757
  %v759 = vlaneseq
  %v760 = vshrl.u32 %v759, 7
  %v761 = vsub.s32 %v758, %v760
  %v762 = vrot.slane %v754, %v761
  %v764 = vunpack.c.l.s4 1966171168
  %v765 = vunpack.c.0.s8 %v764
  %v766 = vlaneseq
  %v767 = vshrl.u32 %v766, 7
  %v768 = vsub.s32 %v765, %v767
  %v769 = vrot.slane %v755, %v768
  %v772 = vpack.c.bf16 %v762, %v762
  %v773 = vpack.c.bf16 %v769, %v769
  %v775 = vsel %vm46, %v772, 0
  %777 = vmatprep.subr.bf16.mxu0 0
  %778 = vmatpush1.bf16.xpose.msra.mxu0 %v353
  %779 = vmatprep.subr.bf16.mxu0 0
  %780 = vmatpush1.bf16.xpose.msra.mxu0 0
  %781 = vmatprep.subr.bf16.mxu0 0
  %782 = vmatpush1.bf16.xpose.msra.mxu0 0
  %783 = vmatprep.subr.bf16.mxu0 0
  %784 = vmatpush1.bf16.xpose.msra.mxu0 0
  %785 = vmatprep.subr.bf16.mxu0 0
  %786 = vmatpush1.bf16.xpose.msra.mxu0 0
  %787 = vmatprep.subr.bf16.mxu0 0
  %788 = vmatpush1.bf16.xpose.msra.mxu0 0
  %789 = vmatprep.subr.bf16.mxu0 0
  %790 = vmatpush1.bf16.xpose.msra.mxu0 0
  %791 = vmatprep.subr.bf16.mxu0 0
  %792 = vmatpush1.bf16.xpose.msra.mxu0 0
  %793 = vmatprep.subr.bf16.mxu0 0
  %794 = vmatpush1.bf16.xpose.msra.mxu0 0
  %795 = vmatprep.subr.bf16.mxu0 0
  %796 = vmatpush1.bf16.xpose.msra.mxu0 0
  %797 = vmatprep.subr.bf16.mxu0 0
  %798 = vmatpush1.bf16.xpose.msra.mxu0 0
  %799 = vmatprep.subr.bf16.mxu0 0
  %800 = vmatpush1.bf16.xpose.msra.mxu0 0
  %801 = vmatprep.subr.bf16.mxu0 0
  %802 = vmatpush1.bf16.xpose.msra.mxu0 0
  %803 = vmatprep.subr.bf16.mxu0 0
  %804 = vmatpush1.bf16.xpose.msra.mxu0 0
  %805 = vmatprep.subr.bf16.mxu0 0
  %806 = vmatpush1.bf16.xpose.msra.mxu0 0
  %807 = vmatprep.subr.bf16.mxu0 0
  %808 = vmatpush1.bf16.xpose.msra.mxu0 0
  %809 = vmatprep.mubr.bf16.mxu0 0
  %810 = vmatmul.mubr.bf16.gmra.mrb[0].mxu0 %v775
  %v811 = vpop.f32.mrb[0].mxu0
  %v812 = vadd.f32 %v39, %v811
  %v813 = vpop.f32.mrb[0].mxu0
  %v814 = vpop.f32.mrb[0].mxu0
  %v815 = vpop.f32.mrb[0].mxu0
  %816 = vdwg.mxu0
  %v818 = vsel %vm46, %v773, 0
  %820 = vmatprep.subr.bf16.mxu0 0
  %821 = vmatpush1.bf16.xpose.msra.mxu0 %v399
  %822 = vmatprep.subr.bf16.mxu0 0
  %823 = vmatpush1.bf16.xpose.msra.mxu0 0
  %824 = vmatprep.subr.bf16.mxu0 0
  %825 = vmatpush1.bf16.xpose.msra.mxu0 0
  %826 = vmatprep.subr.bf16.mxu0 0
  %827 = vmatpush1.bf16.xpose.msra.mxu0 0
  %828 = vmatprep.subr.bf16.mxu0 0
  %829 = vmatpush1.bf16.xpose.msra.mxu0 0
  %830 = vmatprep.subr.bf16.mxu0 0
  %831 = vmatpush1.bf16.xpose.msra.mxu0 0
  %832 = vmatprep.subr.bf16.mxu0 0
  %833 = vmatpush1.bf16.xpose.msra.mxu0 0
  %834 = vmatprep.subr.bf16.mxu0 0
  %835 = vmatpush1.bf16.xpose.msra.mxu0 0
  %836 = vmatprep.subr.bf16.mxu0 0
  %837 = vmatpush1.bf16.xpose.msra.mxu0 0
  %838 = vmatprep.subr.bf16.mxu0 0
  %839 = vmatpush1.bf16.xpose.msra.mxu0 0
  %840 = vmatprep.subr.bf16.mxu0 0
  %841 = vmatpush1.bf16.xpose.msra.mxu0 0
  %842 = vmatprep.subr.bf16.mxu0 0
  %843 = vmatpush1.bf16.xpose.msra.mxu0 0
  %844 = vmatprep.subr.bf16.mxu0 0
  %845 = vmatpush1.bf16.xpose.msra.mxu0 0
  %846 = vmatprep.subr.bf16.mxu0 0
  %847 = vmatpush1.bf16.xpose.msra.mxu0 0
  %848 = vmatprep.subr.bf16.mxu0 0
  %849 = vmatpush1.bf16.xpose.msra.mxu0 0
  %850 = vmatprep.subr.bf16.mxu0 0
  %851 = vmatpush1.bf16.xpose.msra.mxu0 0
  %852 = vmatprep.mubr.bf16.mxu0 0
  %853 = vmatmul.mubr.bf16.gmra.mrb[0].mxu0 %v818
  %v854 = vpop.f32.mrb[0].mxu0
  %v855 = vadd.f32 %v40, %v854
  %v856 = vpop.f32.mrb[0].mxu0
  %v857 = vpop.f32.mrb[0].mxu0
  %v858 = vpop.f32.mrb[0].mxu0
  %859 = vdwg.mxu0
  %v860 = vsel %vm441, %v812, -inf
  %861 = vmax.xlane.f32.xlu0 %v860
  %v862 = vpop.xlane.xlu0 %861
  %v863 = vsel %vm441, %v855, -inf
  %864 = vmax.xlane.f32.xlu0 %v863
  %v865 = vpop.xlane.xlu0 %864
  %v866 = vsub.f32 %v812, %v862
  %v867 = vsub.f32 %v855, %v865
  %v868 = vmul.f32 %v866, 1.442695
  %v869 = vpow.pop %v868
  %v870 = vmul.f32 %v867, 1.442695
  %v871 = vpow.pop %v870
  %v872 = vsel %vm441, %v869, 0.0
  %873 = vadd.xlane.f32.xlu0 %v872
  %v874 = vpop.xlane.xlu0 %873
  %v875 = vsel %vm441, %v871, 0.0
  %876 = vadd.xlane.f32.xlu0 %v875
  %v877 = vpop.xlane.xlu0 %876
  %v878 = vrcp.pop %v874
  %v879 = vrcp.pop %v877
  %v880 = vmul.f32 %v869, %v878
  %v881 = vmul.f32 %v871, %v879
  %882 = vst.msk [vmem:[%s9] sm:$0x1] %vm441, %v462
  %883 = vst.msk [vmem:[%s9 + $0x2] sm:$0x1] %vm441, %v463
  %884 = vst.msk [vmem:[%s9 + $0x1] sm:$0x1] %vm441, %v880
  %885 = vst.msk [vmem:[%s9 + $0x3] sm:$0x1] %vm441, %v881
  // Predicated region
  $region38: #{mnemonic_reader_forward.9} parent=0 // pred_check
    _
  $region39: #{mnemonic_reader_forward.9} parent=0 // pred_check_branch
    %887 = sbr.rel (0) target = $region41
  $region40: #{mnemonic_reader_forward.9} parent=0 // pred_region
    _
  $region41: #{mnemonic_reader_forward.9} parent=0 // pred_fallthru
    _
  // Predicated region
  $region42: #{mnemonic_reader_forward.9} parent=0 // pred_check
    _
  $region43: #{mnemonic_reader_forward.9} parent=0 // pred_check_branch
    %889 = sbr.rel (0) target = $region45
  $region44: #{mnemonic_reader_forward.9} parent=0 // pred_region
    _
  $region45: #{mnemonic_reader_forward.9} parent=0 // pred_fallthru
    _

</llo_original>
